<compile_context>
chip_gen: v7x
topology: tpu7x:2x2x1
jax: 0.10.0
libtpu: 0.0.40
codegen_flags: <defaults>
</compile_context>

<pallas_src>
import functools

import jax
import jax.numpy as jnp
from jax import lax
from jax.experimental import pallas as pl
from jax.experimental.pallas import tpu as pltpu

_MXU_DTYPE = jnp.bfloat16


def _attention_kernel(x_ref, wqkv_ref, wout_ref, bout_ref, o_ref,
                      *, heads, dim_head, scale):
    """One grid step == TB batch elements, fully fused.

    x_ref    : (TB, N, dim)     VMEM (input dtype)
    wqkv_ref : (dim, 3*inner)   VMEM bf16   (y = x @ wqkv)
    wout_ref : (inner, dim)     VMEM bf16   (y = o @ wout + b)
    bout_ref : (1, dim)         VMEM f32
    o_ref    : (TB, N, dim)     VMEM (input dtype)
    """
    inner = heads * dim_head
    TB, N, dim = x_ref.shape

    # (TB, N, dim) -> (TB*N, dim): one tall bf16 MXU matmul for the QKV proj.
    x2 = x_ref[...].reshape(TB * N, dim).astype(_MXU_DTYPE)
    qkv = jnp.dot(x2, wqkv_ref[...],
                  preferred_element_type=jnp.float32)        # (TB*N, 3*inner) f32

    # Fold the softmax scale into Q once (N*inner muls instead of H*N*N).
    q = qkv[:, 0 * inner:1 * inner] * scale
    k = qkv[:, 1 * inner:2 * inner]
    v = qkv[:, 2 * inner:3 * inner]

    # 'b n (h d) -> (b h) n d': batch and heads merge into a single leading
    # batch dim — the known-good 3-D batched dot_general pattern on Mosaic.
    def to_heads(t):
        return (t.reshape(TB, N, heads, dim_head)
                 .transpose(0, 2, 1, 3)
                 .reshape(TB * heads, N, dim_head)
                 .astype(_MXU_DTYPE))

    q3, k3, v3 = to_heads(q), to_heads(k), to_heads(v)       # (TB*H, N, d) bf16

    # Q @ K^T as a contraction over d (no explicit .T / XLU transpose).
    dots = lax.dot_general(
        q3, k3,
        dimension_numbers=(((2,), (2,)), ((0,), (0,))),
        preferred_element_type=jnp.float32)                  # (TB*H, N, N) f32

    # Numerically-stable softmax with DEFERRED normalization: stats in f32,
    # probabilities cast to bf16 once for the MXU, normalization applied to the
    # (TB*H, N, d) result via the EUP approx reciprocal.
    m = jnp.max(dots, axis=-1, keepdims=True)
    p = jnp.exp(dots - m)                                    # (TB*H, N, N) f32
    denom = jnp.sum(p, axis=-1, keepdims=True)               # (TB*H, N, 1)  f32

    out3 = lax.dot_general(
        p.astype(_MXU_DTYPE), v3,
        dimension_numbers=(((2,), (1,)), ((0,), (0,))),
        preferred_element_type=jnp.float32)                  # (TB*H, N, d) f32
    out3 = out3 * pl.reciprocal(denom, approx=True)

    # '(b h) n d -> (b n) (h d)': lane-dense slab feeding the output projection.
    out = (out3.reshape(TB, heads, N, dim_head)
               .transpose(0, 2, 1, 3)
               .reshape(TB * N, inner)
               .astype(_MXU_DTYPE))

    # Output projection (+ Dropout(0.0) == identity), bias added in f32.
    y = jnp.dot(out, wout_ref[...],
                preferred_element_type=jnp.float32) + bout_ref[...]
    o_ref[...] = y.reshape(TB, N, dim).astype(o_ref.dtype)


def _step_vmem_bytes(tb, N, dim, heads, dim_head):
    """Rough per-grid-step VMEM footprint (bytes) of the fused kernel."""
    inner = heads * dim_head
    io = 2 * 2 * tb * N * dim * 4                              # x/out blocks, dbl-buffered
    w = (dim * 3 * inner + inner * dim) * 2 + dim * 4          # bf16 weights + f32 bias
    qkv = tb * N * 3 * inner * 4                               # f32 QKV projection
    qkv_b = 3 * tb * N * inner * 2                             # bf16 head-split copies
    scores = 2 * tb * heads * N * N * 4 + tb * heads * N * N * 2
    tails = tb * heads * N * dim_head * 4 + tb * N * inner * 2 + tb * N * dim * 4
    return io + w + qkv + qkv_b + scores + tails


def _pick_batch_block(B, N, dim, heads, dim_head, budget_bytes):
    tb = 1
    for cand in range(1, B + 1):
        if B % cand == 0 and _step_vmem_bytes(cand, N, dim, heads, dim_head) <= budget_bytes:
            tb = cand
    return tb


def attention_forward(x, w_qkv, w_out, b_out, *, heads, dim_head):
    """x: (B, N, dim) -> (B, N, dim).  Implements the project_out branch."""
    B, N, dim = x.shape
    inner = heads * dim_head
    scale = dim_head ** (-0.5)
    assert w_qkv.shape == (dim, 3 * inner)
    assert w_out.shape == (inner, dim)

    # bf16 MXU operands; accumulation stays f32 inside the kernel.  In a real
    # model the weights would simply be stored in bf16.
    w_qkv_b = w_qkv.astype(_MXU_DTYPE)
    w_out_b = w_out.astype(_MXU_DTYPE)
    b_out_2d = b_out.reshape(1, dim).astype(jnp.float32)

    # Per-generation VMEM budget: never request all of v7x's 64 MiB.
    try:
        physical_vmem = int(pltpu.get_tpu_info().vmem_capacity_bytes)
    except Exception:
        physical_vmem = 64 * 1024 * 1024                       # conservative (v7x)
    budget = (physical_vmem * 3) // 4

    tb = _pick_batch_block(B, N, dim, heads, dim_head, budget // 2)
    step_bytes = _step_vmem_bytes(tb, N, dim, heads, dim_head)
    vmem_limit = int(min(budget, max(32 * 1024 * 1024, 2 * step_bytes)))

    kernel = functools.partial(_attention_kernel,
                               heads=heads, dim_head=dim_head, scale=scale)

    itemsize = x.dtype.itemsize
    cost = pl.CostEstimate(
        flops=(2 * B * N * dim * 3 * inner            # QKV projection
               + 4 * B * heads * N * N * dim_head     # QK^T and P@V
               + 2 * B * N * inner * dim),            # output projection
        transcendentals=B * heads * N * N,            # exp
        bytes_accessed=(2 * B * N * dim * itemsize    # x in + out
                        + w_qkv_b.size * 2 + w_out_b.size * 2 + dim * 4))

    def build(single_buffer_weights):
        # Constant-index weights/bias: single buffer (no re-fetch across steps).
        wkw = ({"pipeline_mode": pl.Buffered(1)}
               if single_buffer_weights and hasattr(pl, "Buffered") else {})
        grid_spec = pltpu.PrefetchScalarGridSpec(
            num_scalar_prefetch=0,
            grid=(B // tb,),
            in_specs=[
                pl.BlockSpec((tb, N, dim), lambda b: (b, 0, 0)),
                pl.BlockSpec((dim, 3 * inner), lambda b: (0, 0), **wkw),
                pl.BlockSpec((inner, dim), lambda b: (0, 0), **wkw),
                pl.BlockSpec((1, dim), lambda b: (0, 0), **wkw),
            ],
            out_specs=pl.BlockSpec((tb, N, dim), lambda b: (b, 0, 0)),
        )
        return pl.pallas_call(
            kernel,
            out_shape=jax.ShapeDtypeStruct((B, N, dim), x.dtype),
            grid_spec=grid_spec,
            compiler_params=pltpu.CompilerParams(
                dimension_semantics=("parallel",),
                vmem_limit_bytes=vmem_limit),
            cost_estimate=cost,
        )

    try:
        return jax.block_until_ready(build(True)(x, w_qkv_b, w_out_b, b_out_2d))
    except Exception:
        # jax versions without pipeline_mode support on the TPU pallas_call
        # pipeline: fall back to default double-buffered weights (same math).
        return jax.block_until_ready(build(False)(x, w_qkv_b, w_out_b, b_out_2d))


def _reference(x, w_qkv, w_out, b_out, *, heads, dim_head):
    """Pure-JAX f32 reference matching the PyTorch forward."""
    B, N, dim = x.shape
    inner = heads * dim_head
    scale = dim_head ** (-0.5)
    qkv = x @ w_qkv                                            # (B, N, 3*inner)
    q, k, v = jnp.split(qkv, 3, axis=-1)

    def split_heads(t):
        return t.reshape(B, N, heads, dim_head).transpose(0, 2, 1, 3)

    q, k, v = map(split_heads, (q, k, v))                      # (B, H, N, d)
    dots = jnp.einsum("bhnd,bhmd->bhnm", q, k) * scale
    attn = jax.nn.softmax(dots, axis=-1)
    out = jnp.einsum("bhnm,bhmd->bhnd", attn, v)
    out = out.transpose(0, 2, 1, 3).reshape(B, N, inner)
    return out @ w_out + b_out


if __name__ == "__main__":
    # Small shapes consistent with the module's forward.
    B, N, dim = 2, 8, 32
    heads, dim_head = 4, 16
    inner = heads * dim_head

    key = jax.random.PRNGKey(0)
    kx, kqkv, kwo, kbo = jax.random.split(key, 4)

    x = jax.random.normal(kx, (B, N, dim), dtype=jnp.float32)
    # nn.Linear(dim, 3*inner, bias=False): weight (3*inner, dim); stored transposed.
    w_qkv = jax.random.normal(kqkv, (dim, 3 * inner), dtype=jnp.float32) * 0.05
    # nn.Linear(inner, dim): weight (dim, inner) + bias (dim,); stored transposed.
    w_out = jax.random.normal(kwo, (inner, dim), dtype=jnp.float32) * 0.05
    b_out = jax.random.normal(kbo, (dim,), dtype=jnp.float32) * 0.05

    y = attention_forward(x, w_qkv, w_out, b_out, heads=heads, dim_head=dim_head)
    y = jax.block_until_ready(y)

    y_ref = _reference(x, w_qkv, w_out, b_out, heads=heads, dim_head=dim_head)
    assert y.shape == (B, N, dim)
    # Tolerance covers bf16 MXU operands + the EUP approx softmax reciprocal.
    assert jnp.allclose(y, y_ref, atol=2e-2, rtol=2e-2), "mismatch vs reference"

    print("KERNEL_OK")
</pallas_src>

<mosaic_0001>
module attributes {stable_mosaic.version = 11 : i64} {
  func.func @_attention_kernel(%arg0: i32, %arg1: memref<2x8x32xf32, #tpu.memory_space<vmem>>, %arg2: memref<32x192xbf16, #tpu.memory_space<vmem>>, %arg3: memref<64x32xbf16, #tpu.memory_space<vmem>>, %arg4: memref<1x32xf32, #tpu.memory_space<vmem>>, %arg5: memref<2x8x32xf32, #tpu.memory_space<vmem>>) attributes {dimension_semantics = [#tpu.dimension_semantics<parallel>], iteration_bounds = array<i64: 1>, scalar_prefetch = 0 : i64, scratch_operands = 0 : i64, tpu.core_type = #tpu.core_type<tc>, window_params = [{transform_indices = @transform_0, window_bounds = array<i64: 2, 8, 32>}, {pipeline_mode = #tpu.pipeline_mode<synchronous>, transform_indices = @transform_1, window_bounds = array<i64: 32, 192>}, {pipeline_mode = #tpu.pipeline_mode<synchronous>, transform_indices = @transform_2, window_bounds = array<i64: 64, 32>}, {pipeline_mode = #tpu.pipeline_mode<synchronous>, transform_indices = @transform_3, window_bounds = array<i64: 1, 32>}, {transform_indices = @transform_4, window_bounds = array<i64: 2, 8, 32>}]} {
    %c0 = arith.constant 0 : index
    %c0_0 = arith.constant 0 : index
    %c0_1 = arith.constant 0 : index
    %0 = vector.load %arg1[%c0, %c0_0, %c0_1] : memref<2x8x32xf32, #tpu.memory_space<vmem>>, vector<2x8x32xf32>
    %1 = vector.shape_cast %0 : vector<2x8x32xf32> to vector<16x32xf32>
    %2 = arith.truncf %1 : vector<16x32xf32> to vector<16x32xbf16>
    %c0_2 = arith.constant 0 : index
    %c0_3 = arith.constant 0 : index
    %3 = vector.load %arg2[%c0_2, %c0_3] : memref<32x192xbf16, #tpu.memory_space<vmem>>, vector<32x192xbf16>
    %cst = arith.constant dense<0.000000e+00> : vector<16x192xf32>
    %4 = tpu.matmul %2, %3, %cst {dimension_numbers = #tpu.dot_dimension_numbers<[1], [0], [0], [1], [0, 0, 1, 1], [], []>} : vector<16x32xbf16>, vector<32x192xbf16>, vector<16x192xf32> -> vector<16x192xf32>
    %5 = vector.extract_strided_slice %4 {offsets = [0, 0], sizes = [16, 64], strides = [1, 1]} : vector<16x192xf32> to vector<16x64xf32>
    %cst_4 = arith.constant 2.500000e-01 : f32
    %6 = vector.broadcast %cst_4 : f32 to vector<16x64xf32>
    %7 = arith.mulf %5, %6 : vector<16x64xf32>
    %8 = vector.extract_strided_slice %4 {offsets = [0, 64], sizes = [16, 64], strides = [1, 1]} : vector<16x192xf32> to vector<16x64xf32>
    %9 = vector.extract_strided_slice %4 {offsets = [0, 128], sizes = [16, 64], strides = [1, 1]} : vector<16x192xf32> to vector<16x64xf32>
    %10 = vector.shape_cast %7 : vector<16x64xf32> to vector<2x8x4x16xf32>
    %11 = tpu.transpose %10, [0, 2, 1, 3] : vector<2x8x4x16xf32> -> vector<2x4x8x16xf32>
    %12 = vector.shape_cast %11 : vector<2x4x8x16xf32> to vector<8x8x16xf32>
    %13 = arith.truncf %12 : vector<8x8x16xf32> to vector<8x8x16xbf16>
    %14 = vector.shape_cast %8 : vector<16x64xf32> to vector<2x8x4x16xf32>
    %15 = tpu.transpose %14, [0, 2, 1, 3] : vector<2x8x4x16xf32> -> vector<2x4x8x16xf32>
    %16 = vector.shape_cast %15 : vector<2x4x8x16xf32> to vector<8x8x16xf32>
    %17 = arith.truncf %16 : vector<8x8x16xf32> to vector<8x8x16xbf16>
    %18 = vector.shape_cast %9 : vector<16x64xf32> to vector<2x8x4x16xf32>
    %19 = tpu.transpose %18, [0, 2, 1, 3] : vector<2x8x4x16xf32> -> vector<2x4x8x16xf32>
    %20 = vector.shape_cast %19 : vector<2x4x8x16xf32> to vector<8x8x16xf32>
    %21 = arith.truncf %20 : vector<8x8x16xf32> to vector<8x8x16xbf16>
    %cst_5 = arith.constant dense<0.000000e+00> : vector<8x8x8xf32>
    %22 = tpu.matmul %13, %17, %cst_5 {dimension_numbers = #tpu.dot_dimension_numbers<[2], [2], [1], [1], [0, 0, 0, 1, 1, 1], [0], [0]>} : vector<8x8x16xbf16>, vector<8x8x16xbf16>, vector<8x8x8xf32> -> vector<8x8x8xf32>
    %cst_6 = arith.constant dense<0xFF800000> : vector<8x8xf32>
    %23 = vector.multi_reduction <maximumf>, %22, %cst_6 [2] : vector<8x8x8xf32> to vector<8x8xf32>
    %24 = vector.shape_cast %23 : vector<8x8xf32> to vector<8x8x1xf32>
    %25 = vector.broadcast %24 : vector<8x8x1xf32> to vector<8x8x8xf32>
    %26 = arith.subf %22, %25 : vector<8x8x8xf32>
    %27 = math.exp %26 : vector<8x8x8xf32>
    %cst_7 = arith.constant dense<0.000000e+00> : vector<8x8xf32>
    %28 = vector.multi_reduction <add>, %27, %cst_7 [2] : vector<8x8x8xf32> to vector<8x8xf32>
    %29 = vector.shape_cast %28 : vector<8x8xf32> to vector<8x8x1xf32>
    %30 = arith.truncf %27 : vector<8x8x8xf32> to vector<8x8x8xbf16>
    %cst_8 = arith.constant dense<0.000000e+00> : vector<8x8x16xf32>
    %31 = tpu.matmul %30, %21, %cst_8 {dimension_numbers = #tpu.dot_dimension_numbers<[2], [1], [1], [2], [0, 0, 0, 1, 1, 2], [0], [0]>} : vector<8x8x8xbf16>, vector<8x8x16xbf16>, vector<8x8x16xf32> -> vector<8x8x16xf32>
    %32 = tpu.reciprocal %29 {approx = true} : vector<8x8x1xf32> -> vector<8x8x1xf32>
    %33 = vector.broadcast %32 : vector<8x8x1xf32> to vector<8x8x16xf32>
    %34 = arith.mulf %31, %33 : vector<8x8x16xf32>
    %35 = vector.shape_cast %34 : vector<8x8x16xf32> to vector<2x4x8x16xf32>
    %36 = tpu.transpose %35, [0, 2, 1, 3] : vector<2x4x8x16xf32> -> vector<2x8x4x16xf32>
    %37 = vector.shape_cast %36 : vector<2x8x4x16xf32> to vector<16x64xf32>
    %38 = arith.truncf %37 : vector<16x64xf32> to vector<16x64xbf16>
    %c0_9 = arith.constant 0 : index
    %c0_10 = arith.constant 0 : index
    %39 = vector.load %arg3[%c0_9, %c0_10] : memref<64x32xbf16, #tpu.memory_space<vmem>>, vector<64x32xbf16>
    %cst_11 = arith.constant dense<0.000000e+00> : vector<16x32xf32>
    %40 = tpu.matmul %38, %39, %cst_11 {dimension_numbers = #tpu.dot_dimension_numbers<[1], [0], [0], [1], [0, 0, 1, 1], [], []>} : vector<16x64xbf16>, vector<64x32xbf16>, vector<16x32xf32> -> vector<16x32xf32>
    %c0_12 = arith.constant 0 : index
    %c0_13 = arith.constant 0 : index
    %41 = vector.load %arg4[%c0_12, %c0_13] : memref<1x32xf32, #tpu.memory_space<vmem>>, vector<1x32xf32>
    %42 = vector.broadcast %41 : vector<1x32xf32> to vector<16x32xf32>
    %43 = arith.addf %40, %42 : vector<16x32xf32>
    %44 = vector.shape_cast %43 : vector<16x32xf32> to vector<2x8x32xf32>
    %c0_14 = arith.constant 0 : index
    %c0_15 = arith.constant 0 : index
    %c0_16 = arith.constant 0 : index
    %45 = vector.load %arg5[%c0_14, %c0_15, %c0_16] : memref<2x8x32xf32, #tpu.memory_space<vmem>>, vector<2x8x32xf32>
    tpu.vector_store %arg5[%c0_14, %c0_15, %c0_16], %44 {strides = array<i32>} : memref<2x8x32xf32, #tpu.memory_space<vmem>>, vector<2x8x32xf32>,
    return
  }
  func.func @transform_0(%arg0: i32) -> (i32, i32, i32) {
    %c0_i32 = arith.constant 0 : i32
    %c0_i32_0 = arith.constant 0 : i32
    %c0_i32_1 = arith.constant 0 : i32
    return %arg0, %c0_i32, %c0_i32_0 : i32, i32, i32
  }
  func.func @transform_1(%arg0: i32) -> (i32, i32) {
    %c0_i32 = arith.constant 0 : i32
    %c0_i32_0 = arith.constant 0 : i32
    %c0_i32_1 = arith.constant 0 : i32
    return %c0_i32, %c0_i32_0 : i32, i32
  }
  func.func @transform_2(%arg0: i32) -> (i32, i32) {
    %c0_i32 = arith.constant 0 : i32
    %c0_i32_0 = arith.constant 0 : i32
    %c0_i32_1 = arith.constant 0 : i32
    return %c0_i32, %c0_i32_0 : i32, i32
  }
  func.func @transform_3(%arg0: i32) -> (i32, i32) {
    %c0_i32 = arith.constant 0 : i32
    %c0_i32_0 = arith.constant 0 : i32
    %c0_i32_1 = arith.constant 0 : i32
    return %c0_i32, %c0_i32_0 : i32, i32
  }
  func.func @transform_4(%arg0: i32) -> (i32, i32, i32) {
    %c0_i32 = arith.constant 0 : i32
    %c0_i32_0 = arith.constant 0 : i32
    %c0_i32_1 = arith.constant 0 : i32
    return %arg0, %c0_i32, %c0_i32_0 : i32, i32, i32
  }
}

module attributes {stable_mosaic.version = 11 : i64} {
  func.func @_attention_kernel(%arg0: i32, %arg1: memref<2x8x32xf32, #tpu.memory_space<vmem>>, %arg2: memref<32x192xbf16, #tpu.memory_space<vmem>>, %arg3: memref<64x32xbf16, #tpu.memory_space<vmem>>, %arg4: memref<1x32xf32, #tpu.memory_space<vmem>>, %arg5: memref<2x8x32xf32, #tpu.memory_space<vmem>>) attributes {dimension_semantics = [#tpu.dimension_semantics<parallel>], iteration_bounds = array<i64: 1>, scalar_prefetch = 0 : i64, scratch_operands = 0 : i64, tpu.core_type = #tpu.core_type<tc>, window_params = [{transform_indices = @transform_0, window_bounds = array<i64: 2, 8, 32>}, {pipeline_mode = #tpu.pipeline_mode<synchronous>, transform_indices = @transform_1, window_bounds = array<i64: 32, 192>}, {pipeline_mode = #tpu.pipeline_mode<synchronous>, transform_indices = @transform_2, window_bounds = array<i64: 64, 32>}, {pipeline_mode = #tpu.pipeline_mode<synchronous>, transform_indices = @transform_3, window_bounds = array<i64: 1, 32>}, {transform_indices = @transform_4, window_bounds = array<i64: 2, 8, 32>}]} {
    %c0 = arith.constant 0 : index
    %c0_0 = arith.constant 0 : index
    %c0_1 = arith.constant 0 : index
    %0 = vector.load %arg1[%c0, %c0_0, %c0_1] : memref<2x8x32xf32, #tpu.memory_space<vmem>>, vector<2x8x32xf32>
    %1 = vector.shape_cast %0 : vector<2x8x32xf32> to vector<16x32xf32>
    %2 = arith.truncf %1 : vector<16x32xf32> to vector<16x32xbf16>
    %c0_2 = arith.constant 0 : index
    %c0_3 = arith.constant 0 : index
    %3 = vector.load %arg2[%c0_2, %c0_3] : memref<32x192xbf16, #tpu.memory_space<vmem>>, vector<32x192xbf16>
    %cst = arith.constant dense<0.000000e+00> : vector<16x192xf32>
    %4 = tpu.matmul %2, %3, %cst {dimension_numbers = #tpu.dot_dimension_numbers<[1], [0], [0], [1], [0, 0, 1, 1], [], []>} : vector<16x32xbf16>, vector<32x192xbf16>, vector<16x192xf32> -> vector<16x192xf32>
    %5 = vector.extract_strided_slice %4 {offsets = [0, 0], sizes = [16, 64], strides = [1, 1]} : vector<16x192xf32> to vector<16x64xf32>
    %cst_4 = arith.constant 2.500000e-01 : f32
    %6 = vector.broadcast %cst_4 : f32 to vector<16x64xf32>
    %7 = arith.mulf %5, %6 : vector<16x64xf32>
    %8 = vector.extract_strided_slice %4 {offsets = [0, 64], sizes = [16, 64], strides = [1, 1]} : vector<16x192xf32> to vector<16x64xf32>
    %9 = vector.extract_strided_slice %4 {offsets = [0, 128], sizes = [16, 64], strides = [1, 1]} : vector<16x192xf32> to vector<16x64xf32>
    %10 = vector.shape_cast %7 : vector<16x64xf32> to vector<2x8x4x16xf32>
    %11 = tpu.transpose %10, [0, 2, 1, 3] : vector<2x8x4x16xf32> -> vector<2x4x8x16xf32>
    %12 = vector.shape_cast %11 : vector<2x4x8x16xf32> to vector<8x8x16xf32>
    %13 = arith.truncf %12 : vector<8x8x16xf32> to vector<8x8x16xbf16>
    %14 = vector.shape_cast %8 : vector<16x64xf32> to vector<2x8x4x16xf32>
    %15 = tpu.transpose %14, [0, 2, 1, 3] : vector<2x8x4x16xf32> -> vector<2x4x8x16xf32>
    %16 = vector.shape_cast %15 : vector<2x4x8x16xf32> to vector<8x8x16xf32>
    %17 = arith.truncf %16 : vector<8x8x16xf32> to vector<8x8x16xbf16>
    %18 = vector.shape_cast %9 : vector<16x64xf32> to vector<2x8x4x16xf32>
    %19 = tpu.transpose %18, [0, 2, 1, 3] : vector<2x8x4x16xf32> -> vector<2x4x8x16xf32>
    %20 = vector.shape_cast %19 : vector<2x4x8x16xf32> to vector<8x8x16xf32>
    %21 = arith.truncf %20 : vector<8x8x16xf32> to vector<8x8x16xbf16>
    %cst_5 = arith.constant dense<0.000000e+00> : vector<8x8x8xf32>
    %22 = tpu.matmul %13, %17, %cst_5 {dimension_numbers = #tpu.dot_dimension_numbers<[2], [2], [1], [1], [0, 0, 0, 1, 1, 1], [0], [0]>} : vector<8x8x16xbf16>, vector<8x8x16xbf16>, vector<8x8x8xf32> -> vector<8x8x8xf32>
    %cst_6 = arith.constant dense<0xFF800000> : vector<8x8xf32>
    %23 = vector.multi_reduction <maximumf>, %22, %cst_6 [2] : vector<8x8x8xf32> to vector<8x8xf32>
    %24 = vector.shape_cast %23 : vector<8x8xf32> to vector<8x8x1xf32>
    %25 = vector.broadcast %24 : vector<8x8x1xf32> to vector<8x8x8xf32>
    %26 = arith.subf %22, %25 : vector<8x8x8xf32>
    %27 = math.exp %26 : vector<8x8x8xf32>
    %cst_7 = arith.constant dense<0.000000e+00> : vector<8x8xf32>
    %28 = vector.multi_reduction <add>, %27, %cst_7 [2] : vector<8x8x8xf32> to vector<8x8xf32>
    %29 = vector.shape_cast %28 : vector<8x8xf32> to vector<8x8x1xf32>
    %30 = arith.truncf %27 : vector<8x8x8xf32> to vector<8x8x8xbf16>
    %cst_8 = arith.constant dense<0.000000e+00> : vector<8x8x16xf32>
    %31 = tpu.matmul %30, %21, %cst_8 {dimension_numbers = #tpu.dot_dimension_numbers<[2], [1], [1], [2], [0, 0, 0, 1, 1, 2], [0], [0]>} : vector<8x8x8xbf16>, vector<8x8x16xbf16>, vector<8x8x16xf32> -> vector<8x8x16xf32>
    %32 = tpu.reciprocal %29 {approx = true} : vector<8x8x1xf32> -> vector<8x8x1xf32>
    %33 = vector.broadcast %32 : vector<8x8x1xf32> to vector<8x8x16xf32>
    %34 = arith.mulf %31, %33 : vector<8x8x16xf32>
    %35 = vector.shape_cast %34 : vector<8x8x16xf32> to vector<2x4x8x16xf32>
    %36 = tpu.transpose %35, [0, 2, 1, 3] : vector<2x4x8x16xf32> -> vector<2x8x4x16xf32>
    %37 = vector.shape_cast %36 : vector<2x8x4x16xf32> to vector<16x64xf32>
    %38 = arith.truncf %37 : vector<16x64xf32> to vector<16x64xbf16>
    %c0_9 = arith.constant 0 : index
    %c0_10 = arith.constant 0 : index
    %39 = vector.load %arg3[%c0_9, %c0_10] : memref<64x32xbf16, #tpu.memory_space<vmem>>, vector<64x32xbf16>
    %cst_11 = arith.constant dense<0.000000e+00> : vector<16x32xf32>
    %40 = tpu.matmul %38, %39, %cst_11 {dimension_numbers = #tpu.dot_dimension_numbers<[1], [0], [0], [1], [0, 0, 1, 1], [], []>} : vector<16x64xbf16>, vector<64x32xbf16>, vector<16x32xf32> -> vector<16x32xf32>
    %c0_12 = arith.constant 0 : index
    %c0_13 = arith.constant 0 : index
    %41 = vector.load %arg4[%c0_12, %c0_13] : memref<1x32xf32, #tpu.memory_space<vmem>>, vector<1x32xf32>
    %42 = vector.broadcast %41 : vector<1x32xf32> to vector<16x32xf32>
    %43 = arith.addf %40, %42 : vector<16x32xf32>
    %44 = vector.shape_cast %43 : vector<16x32xf32> to vector<2x8x32xf32>
    %c0_14 = arith.constant 0 : index
    %c0_15 = arith.constant 0 : index
    %c0_16 = arith.constant 0 : index
    %45 = vector.load %arg5[%c0_14, %c0_15, %c0_16] : memref<2x8x32xf32, #tpu.memory_space<vmem>>, vector<2x8x32xf32>
    tpu.vector_store %arg5[%c0_14, %c0_15, %c0_16], %44 {strides = array<i32>} : memref<2x8x32xf32, #tpu.memory_space<vmem>>, vector<2x8x32xf32>,
    return
  }
  func.func @transform_0(%arg0: i32) -> (i32, i32, i32) {
    %c0_i32 = arith.constant 0 : i32
    %c0_i32_0 = arith.constant 0 : i32
    %c0_i32_1 = arith.constant 0 : i32
    return %arg0, %c0_i32, %c0_i32_0 : i32, i32, i32
  }
  func.func @transform_1(%arg0: i32) -> (i32, i32) {
    %c0_i32 = arith.constant 0 : i32
    %c0_i32_0 = arith.constant 0 : i32
    %c0_i32_1 = arith.constant 0 : i32
    return %c0_i32, %c0_i32_0 : i32, i32
  }
  func.func @transform_2(%arg0: i32) -> (i32, i32) {
    %c0_i32 = arith.constant 0 : i32
    %c0_i32_0 = arith.constant 0 : i32
    %c0_i32_1 = arith.constant 0 : i32
    return %c0_i32, %c0_i32_0 : i32, i32
  }
  func.func @transform_3(%arg0: i32) -> (i32, i32) {
    %c0_i32 = arith.constant 0 : i32
    %c0_i32_0 = arith.constant 0 : i32
    %c0_i32_1 = arith.constant 0 : i32
    return %c0_i32, %c0_i32_0 : i32, i32
  }
  func.func @transform_4(%arg0: i32) -> (i32, i32, i32) {
    %c0_i32 = arith.constant 0 : i32
    %c0_i32_0 = arith.constant 0 : i32
    %c0_i32_1 = arith.constant 0 : i32
    return %arg0, %c0_i32, %c0_i32_0 : i32, i32, i32
  }
}

</mosaic_0001>

<llo_original>
// kernel: tpu_custom_call.1
$region0: #{tpu_custom_call.1}
  #allocation0 [shape = 'u32[]', space=smem, size = 0x4, offset = 0x4, fixed_abs, tag = 'smem constant byte address 0x4 - core index']
  #allocation1 [shape = 'u32[144,128]{1,0:T(1,128)}', space=vmem, size = 0x12000, scoped, tag = 'internal scratch']
  %s0 = inlined_call_operand.vmem [shape: f32[2,8,32], index: 0, kind: input, shape index: {}]
  %s1 = inlined_call_operand.vmem [shape: bf16[32,192], index: 1, kind: input, shape index: {}]
  %s2 = inlined_call_operand.vmem [shape: bf16[64,32], index: 2, kind: input, shape index: {}]
  %s3 = inlined_call_operand.vmem [shape: f32[1,32], index: 3, kind: input, shape index: {}]
  %s4 = inlined_call_operand.hbm [shape: f32[2,8,32], index: 4, kind: output, shape index: {}]
  %s5 = sld [smem:[#allocation0]]
  $region26: #{tpu_custom_call.1} parent=0
    _
  %s7 = ssub.s32 1, %s5
  %s8 = scalar_select 0, %s7, %s5
  $region1: #{tpu_custom_call.1} parent=0
    #allocation2 [shape = 'u8[8192]{0}', space=vmem, size = 0x2000, scoped, tag = 'output window, operand 0, single buffered']
    #allocation3 [shape = 's32[1]{0}', space=sflag, size = 0x4, scoped, tag = 'scoped memory for tpu_custom_call.1']
    %9 = vsyncpa [#allocation3], 0
    // Predicated region
    $region2: #{tpu_custom_call.1} parent=1 // pred_check
      _
    $region3: #{tpu_custom_call.1} parent=1 // pred_check_branch
      %11 = sbr.rel (0) target = $region5
    $region4: #{tpu_custom_call.1} parent=1 // pred_region
      _
    $region5: #{tpu_custom_call.1} parent=1 // pred_fallthru
      _
    // Predicated region
    $region6: #{tpu_custom_call.1} parent=1 // pred_check
      _
    $region7: #{tpu_custom_call.1} parent=1 // pred_check_branch
      %13 = sbr.rel (0) target = $region9
    $region8: #{tpu_custom_call.1} parent=1 // pred_region
      _
    $region9: #{tpu_custom_call.1} parent=1 // pred_fallthru
      _
    // Predicated region
    $region10: #{tpu_custom_call.1} parent=1 // pred_check
      _
    $region11: #{tpu_custom_call.1} parent=1 // pred_check_branch
      %15 = sbr.rel (0) target = $region13
    $region12: #{tpu_custom_call.1} parent=1 // pred_region
      _
    $region13: #{tpu_custom_call.1} parent=1 // pred_fallthru
      _
    // Predicated region
    $region14: #{tpu_custom_call.1} parent=1 // pred_check
      _
    $region15: #{tpu_custom_call.1} parent=1 // pred_check_branch
      %17 = sbr.rel (0) target = $region17
    $region16: #{tpu_custom_call.1} parent=1 // pred_region
      _
    $region17: #{tpu_custom_call.1} parent=1 // pred_fallthru
      _
    %v19 = vld [vmem:[%s0] sm:$0xff]
    %v20 = vld [vmem:[%s0 + $0x8] sm:$0xff]
    %v21 = vpack.c.bf16 %v20, %v19
    %v22 = vld [vmem:[%s1] sm:$0xff]
    %v23 = vld [vmem:[%s1 + $0x8] sm:$0xff]
    %v24 = vld [vmem:[%s1 + $0x10] sm:$0xff]
    %v25 = vld [vmem:[%s1 + $0x18] sm:$0xff]
    %v30 = vunpack.c.l.b16 %v22
    %v31 = vunpack.c.h.b16 %v22
    %v32 = vunpack.c.l.b16 %v23
    %v33 = vunpack.c.h.b16 %v23
    %v34 = vunpack.c.l.b16 %v24
    %v35 = vunpack.c.h.b16 %v24
    %v36 = vunpack.c.l.b16 %v25
    %v37 = vunpack.c.h.b16 %v25
    %v38 = vpack.c.b16 %v32, %v30
    %v39 = vpack.c.b16 %v33, %v31
    %v40 = vpack.c.b16 %v36, %v34
    %v41 = vpack.c.b16 %v37, %v35
    %vm46 = vcmask 261120
    %v48 = vsel %vm46, %v21, 0
    %50 = vmatprep.subr.bf16.mxu0 %v39
    %51 = vmatpush1.bf16.msra.mxu0 %v38
    %52 = vmatprep.subr.bf16.mxu0 %v41
    %53 = vmatpush1.bf16.msra.mxu0 %v40
    %54 = vmatprep.subr.bf16.mxu0 0
    %55 = vmatpush1.bf16.msra.mxu0 0
    %56 = vmatprep.subr.bf16.mxu0 0
    %57 = vmatpush1.bf16.msra.mxu0 0
    %58 = vmatprep.subr.bf16.mxu0 0
    %59 = vmatpush1.bf16.msra.mxu0 0
    %60 = vmatprep.subr.bf16.mxu0 0
    %61 = vmatpush1.bf16.msra.mxu0 0
    %62 = vmatprep.subr.bf16.mxu0 0
    %63 = vmatpush1.bf16.msra.mxu0 0
    %64 = vmatprep.subr.bf16.mxu0 0
    %65 = vmatpush1.bf16.msra.mxu0 0
    %66 = vmatprep.subr.bf16.mxu0 0
    %67 = vmatpush1.bf16.msra.mxu0 0
    %68 = vmatprep.subr.bf16.mxu0 0
    %69 = vmatpush1.bf16.msra.mxu0 0
    %70 = vmatprep.subr.bf16.mxu0 0
    %71 = vmatpush1.bf16.msra.mxu0 0
    %72 = vmatprep.subr.bf16.mxu0 0
    %73 = vmatpush1.bf16.msra.mxu0 0
    %74 = vmatprep.subr.bf16.mxu0 0
    %75 = vmatpush1.bf16.msra.mxu0 0
    %76 = vmatprep.subr.bf16.mxu0 0
    %77 = vmatpush1.bf16.msra.mxu0 0
    %78 = vmatprep.subr.bf16.mxu0 0
    %79 = vmatpush1.bf16.msra.mxu0 0
    %80 = vmatprep.subr.bf16.mxu0 0
    %81 = vmatpush1.bf16.msra.mxu0 0
    %82 = vmatprep.mubr.bf16.mxu0 0
    %83 = vmatmul.mubr.bf16.gmra.mrb[0].mxu0 %v48
    %v84 = vpop.f32.mrb[0].mxu0
    %v85 = vadd.f32 0.0, %v84
    %v86 = vpop.f32.mrb[0].mxu0
    %v87 = vadd.f32 0.0, %v86
    %v88 = vpop.f32.mrb[0].mxu0
    %v89 = vadd.f32 0.0, %v88
    %v90 = vpop.f32.mrb[0].mxu0
    %v91 = vadd.f32 0.0, %v90
    %92 = vdwg.mxu0
    %v93 = vmul.f32 %v85, 0.25
    %v94 = vmul.f32 %v89, 0.25
    %97 = vrot.lane.b32.xlu0 %v93, 112
    %v98 = vpop.permute.xlu0 %97
    %99 = vrot.lane.b32.xlu0 %v94, 112
    %v100 = vpop.permute.xlu0 %99
    %103 = vrot.lane.b32.xlu0 %v93, 96
    %v104 = vpop.permute.xlu0 %103
    %105 = vrot.lane.b32.xlu0 %v94, 96
    %v106 = vpop.permute.xlu0 %105
    %109 = vrot.lane.b32.xlu0 %v93, 80
    %v110 = vpop.permute.xlu0 %109
    %111 = vrot.lane.b32.xlu0 %v94, 80
    %v112 = vpop.permute.xlu0 %111
    %v115 = vcombine.low %v93, %v104
    %v116 = vcombine.high %v93, %v104
    %v118 = vunpack.c.l.s4 1983009808
    %v119 = vunpack.c.0.s8 %v118
    %v120 = vlaneseq
    %v121 = vshrl.u32 %v120, 7
    %v122 = vsub.s32 %v119, %v121
    %v123 = vrot.slane %v115, %v122
    %v125 = vunpack.c.l.s4 1983009808
    %v126 = vunpack.c.0.s8 %v125
    %v127 = vlaneseq
    %v128 = vshrl.u32 %v127, 7
    %v129 = vsub.s32 %v126, %v128
    %v130 = vrot.slane %v116, %v129
    %v131 = vcombine.low %v98, %v110
    %v132 = vcombine.high %v98, %v110
    %v134 = vunpack.c.l.s4 1983009808
    %v135 = vunpack.c.0.s8 %v134
    %v136 = vlaneseq
    %v137 = vshrl.u32 %v136, 7
    %v138 = vsub.s32 %v135, %v137
    %v139 = vrot.slane %v131, %v138
    %v141 = vunpack.c.l.s4 1983009808
    %v142 = vunpack.c.0.s8 %v141
    %v143 = vlaneseq
    %v144 = vshrl.u32 %v143, 7
    %v145 = vsub.s32 %v142, %v144
    %v146 = vrot.slane %v132, %v145
    %v147 = vcombine.low %v123, %v139
    %v148 = vcombine.high %v123, %v139
    %v150 = vunpack.c.l.s4 1934713408
    %v151 = vunpack.c.0.s8 %v150
    %v152 = vlaneseq
    %v153 = vshrl.u32 %v152, 7
    %v154 = vsub.s32 %v151, %v153
    %v155 = vrot.slane %v147, %v154
    %v157 = vunpack.c.l.s4 1934713408
    %v158 = vunpack.c.0.s8 %v157
    %v159 = vlaneseq
    %v160 = vshrl.u32 %v159, 7
    %v161 = vsub.s32 %v158, %v160
    %v162 = vrot.slane %v148, %v161
    %v163 = vcombine.low %v130, %v146
    %v164 = vcombine.high %v130, %v146
    %v166 = vunpack.c.l.s4 1934713408
    %v167 = vunpack.c.0.s8 %v166
    %v168 = vlaneseq
    %v169 = vshrl.u32 %v168, 7
    %v170 = vsub.s32 %v167, %v169
    %v171 = vrot.slane %v163, %v170
    %v173 = vunpack.c.l.s4 1934713408
    %v174 = vunpack.c.0.s8 %v173
    %v175 = vlaneseq
    %v176 = vshrl.u32 %v175, 7
    %v177 = vsub.s32 %v174, %v176
    %v178 = vrot.slane %v164, %v177
    %v179 = vcombine.high %v155, 0.0
    %v180 = vcombine.high %v162, 0.0
    %v181 = vcombine.high %v171, 0.0
    %v182 = vcombine.high %v178, 0.0
    %v183 = vcombine.low %v94, %v106
    %v184 = vcombine.high %v94, %v106
    %v186 = vunpack.c.l.s4 1983009808
    %v187 = vunpack.c.0.s8 %v186
    %v188 = vlaneseq
    %v189 = vshrl.u32 %v188, 7
    %v190 = vsub.s32 %v187, %v189
    %v191 = vrot.slane %v183, %v190
    %v193 = vunpack.c.l.s4 1983009808
    %v194 = vunpack.c.0.s8 %v193
    %v195 = vlaneseq
    %v196 = vshrl.u32 %v195, 7
    %v197 = vsub.s32 %v194, %v196
    %v198 = vrot.slane %v184, %v197
    %v199 = vcombine.low %v100, %v112
    %v200 = vcombine.high %v100, %v112
    %v202 = vunpack.c.l.s4 1983009808
    %v203 = vunpack.c.0.s8 %v202
    %v204 = vlaneseq
    %v205 = vshrl.u32 %v204, 7
    %v206 = vsub.s32 %v203, %v205
    %v207 = vrot.slane %v199, %v206
    %v209 = vunpack.c.l.s4 1983009808
    %v210 = vunpack.c.0.s8 %v209
    %v211 = vlaneseq
    %v212 = vshrl.u32 %v211, 7
    %v213 = vsub.s32 %v210, %v212
    %v214 = vrot.slane %v200, %v213
    %v215 = vcombine.low %v191, %v207
    %v216 = vcombine.high %v191, %v207
    %v218 = vunpack.c.l.s4 1934713408
    %v219 = vunpack.c.0.s8 %v218
    %v220 = vlaneseq
    %v221 = vshrl.u32 %v220, 7
    %v222 = vsub.s32 %v219, %v221
    %v223 = vrot.slane %v215, %v222
    %v225 = vunpack.c.l.s4 1934713408
    %v226 = vunpack.c.0.s8 %v225
    %v227 = vlaneseq
    %v228 = vshrl.u32 %v227, 7
    %v229 = vsub.s32 %v226, %v228
    %v230 = vrot.slane %v216, %v229
    %v231 = vcombine.low %v198, %v214
    %v232 = vcombine.high %v198, %v214
    %v234 = vunpack.c.l.s4 1934713408
    %v235 = vunpack.c.0.s8 %v234
    %v236 = vlaneseq
    %v237 = vshrl.u32 %v236, 7
    %v238 = vsub.s32 %v235, %v237
    %v239 = vrot.slane %v231, %v238
    %v241 = vunpack.c.l.s4 1934713408
    %v242 = vunpack.c.0.s8 %v241
    %v243 = vlaneseq
    %v244 = vshrl.u32 %v243, 7
    %v245 = vsub.s32 %v242, %v244
    %v246 = vrot.slane %v232, %v245
    %v247 = vcombine.high %v223, 0.0
    %v248 = vcombine.high %v230, 0.0
    %v249 = vcombine.high %v239, 0.0
    %v250 = vcombine.high %v246, 0.0
    %v251 = vcombine.low %v155, %v162
    %v253 = vunpack.c.l.s4 1983009808
    %v254 = vunpack.c.0.s8 %v253
    %v255 = vlaneseq
    %v256 = vshrl.u32 %v255, 7
    %v257 = vsub.s32 %v254, %v256
    %v258 = vrot.slane %v251, %v257
    %v259 = vcombine.low %v179, %v180
    %v261 = vunpack.c.l.s4 1983009808
    %v262 = vunpack.c.0.s8 %v261
    %v263 = vlaneseq
    %v264 = vshrl.u32 %v263, 7
    %v265 = vsub.s32 %v262, %v264
    %v266 = vrot.slane %v259, %v265
    %v267 = vcombine.low %v171, %v178
    %v269 = vunpack.c.l.s4 1983009808
    %v270 = vunpack.c.0.s8 %v269
    %v271 = vlaneseq
    %v272 = vshrl.u32 %v271, 7
    %v273 = vsub.s32 %v270, %v272
    %v274 = vrot.slane %v267, %v273
    %v275 = vcombine.low %v181, %v182
    %v277 = vunpack.c.l.s4 1983009808
    %v278 = vunpack.c.0.s8 %v277
    %v279 = vlaneseq
    %v280 = vshrl.u32 %v279, 7
    %v281 = vsub.s32 %v278, %v280
    %v282 = vrot.slane %v275, %v281
    %v283 = vcombine.low %v258, %v266
    %v284 = vcombine.high %v258, %v266
    %v286 = vunpack.c.l.s4 1934713408
    %v287 = vunpack.c.0.s8 %v286
    %v288 = vlaneseq
    %v289 = vshrl.u32 %v288, 7
    %v290 = vsub.s32 %v287, %v289
    %v291 = vrot.slane %v283, %v290
    %v293 = vunpack.c.l.s4 1934713408
    %v294 = vunpack.c.0.s8 %v293
    %v295 = vlaneseq
    %v296 = vshrl.u32 %v295, 7
    %v297 = vsub.s32 %v294, %v296
    %v298 = vrot.slane %v284, %v297
    %v299 = vcombine.low %v274, %v282
    %v300 = vcombine.high %v274, %v282
    %v302 = vunpack.c.l.s4 1934713408
    %v303 = vunpack.c.0.s8 %v302
    %v304 = vlaneseq
    %v305 = vshrl.u32 %v304, 7
    %v306 = vsub.s32 %v303, %v305
    %v307 = vrot.slane %v299, %v306
    %v309 = vunpack.c.l.s4 1934713408
    %v310 = vunpack.c.0.s8 %v309
    %v311 = vlaneseq
    %v312 = vshrl.u32 %v311, 7
    %v313 = vsub.s32 %v310, %v312
    %v314 = vrot.slane %v300, %v313
    %v315 = vcombine.low %v291, %v307
    %v316 = vcombine.high %v291, %v307
    %v317 = vcombine.low %v298, %v314
    %v318 = vcombine.high %v298, %v314
    %v319 = vcombine.low %v223, %v230
    %v321 = vunpack.c.l.s4 1983009808
    %v322 = vunpack.c.0.s8 %v321
    %v323 = vlaneseq
    %v324 = vshrl.u32 %v323, 7
    %v325 = vsub.s32 %v322, %v324
    %v326 = vrot.slane %v319, %v325
    %v327 = vcombine.low %v247, %v248
    %v329 = vunpack.c.l.s4 1983009808
    %v330 = vunpack.c.0.s8 %v329
    %v331 = vlaneseq
    %v332 = vshrl.u32 %v331, 7
    %v333 = vsub.s32 %v330, %v332
    %v334 = vrot.slane %v327, %v333
    %v335 = vcombine.low %v239, %v246
    %v337 = vunpack.c.l.s4 1983009808
    %v338 = vunpack.c.0.s8 %v337
    %v339 = vlaneseq
    %v340 = vshrl.u32 %v339, 7
    %v341 = vsub.s32 %v338, %v340
    %v342 = vrot.slane %v335, %v341
    %v343 = vcombine.low %v249, %v250
    %v345 = vunpack.c.l.s4 1983009808
    %v346 = vunpack.c.0.s8 %v345
    %v347 = vlaneseq
    %v348 = vshrl.u32 %v347, 7
    %v349 = vsub.s32 %v346, %v348
    %v350 = vrot.slane %v343, %v349
    %v351 = vcombine.low %v326, %v334
    %v352 = vcombine.high %v326, %v334
    %v354 = vunpack.c.l.s4 1934713408
    %v355 = vunpack.c.0.s8 %v354
    %v356 = vlaneseq
    %v357 = vshrl.u32 %v356, 7
    %v358 = vsub.s32 %v355, %v357
    %v359 = vrot.slane %v351, %v358
    %v361 = vunpack.c.l.s4 1934713408
    %v362 = vunpack.c.0.s8 %v361
    %v363 = vlaneseq
    %v364 = vshrl.u32 %v363, 7
    %v365 = vsub.s32 %v362, %v364
    %v366 = vrot.slane %v352, %v365
    %v367 = vcombine.low %v342, %v350
    %v368 = vcombine.high %v342, %v350
    %v370 = vunpack.c.l.s4 1934713408
    %v371 = vunpack.c.0.s8 %v370
    %v372 = vlaneseq
    %v373 = vshrl.u32 %v372, 7
    %v374 = vsub.s32 %v371, %v373
    %v375 = vrot.slane %v367, %v374
    %v377 = vunpack.c.l.s4 1934713408
    %v378 = vunpack.c.0.s8 %v377
    %v379 = vlaneseq
    %v380 = vshrl.u32 %v379, 7
    %v381 = vsub.s32 %v378, %v380
    %v382 = vrot.slane %v368, %v381
    %v383 = vcombine.low %v359, %v375
    %v384 = vcombine.high %v359, %v375
    %v385 = vcombine.low %v366, %v382
    %v386 = vcombine.high %v366, %v382
    %v387 = vpack.c.bf16 %v315, %v315
    %v388 = vpack.c.bf16 %v316, %v316
    %v389 = vpack.c.bf16 %v317, %v317
    %v390 = vpack.c.bf16 %v318, %v318
    %v391 = vpack.c.bf16 %v383, %v383
    %v392 = vpack.c.bf16 %v384, %v384
    %v393 = vpack.c.bf16 %v385, %v385
    %v394 = vpack.c.bf16 %v386, %v386
    %397 = vrot.lane.b32.xlu0 %v85, 112
    %v398 = vpop.permute.xlu0 %397
    %399 = vrot.lane.b32.xlu0 %v89, 112
    %v400 = vpop.permute.xlu0 %399
    %401 = vrot.lane.b32.xlu0 %v85, 96
    %v402 = vpop.permute.xlu0 %401
    %403 = vrot.lane.b32.xlu0 %v89, 96
    %v404 = vpop.permute.xlu0 %403
    %405 = vrot.lane.b32.xlu0 %v85, 80
    %v406 = vpop.permute.xlu0 %405
    %407 = vrot.lane.b32.xlu0 %v89, 80
    %v408 = vpop.permute.xlu0 %407
    %409 = vrot.lane.b32.xlu0 %v85, 64
    %v410 = vpop.permute.xlu0 %409
    %411 = vrot.lane.b32.xlu0 %v89, 64
    %v412 = vpop.permute.xlu0 %411
    %413 = vrot.lane.b32.xlu0 %v398, 64
    %v414 = vpop.permute.xlu0 %413
    %415 = vrot.lane.b32.xlu0 %v400, 64
    %v416 = vpop.permute.xlu0 %415
    %417 = vrot.lane.b32.xlu0 %v402, 64
    %v418 = vpop.permute.xlu0 %417
    %419 = vrot.lane.b32.xlu0 %v404, 64
    %v420 = vpop.permute.xlu0 %419
    %421 = vrot.lane.b32.xlu0 %v406, 64
    %v422 = vpop.permute.xlu0 %421
    %423 = vrot.lane.b32.xlu0 %v408, 64
    %v424 = vpop.permute.xlu0 %423
    %v433 = vcombine.low %v410, %v418
    %v434 = vcombine.high %v410, %v418
    %v436 = vunpack.c.l.s4 1983009808
    %v437 = vunpack.c.0.s8 %v436
    %v438 = vlaneseq
    %v439 = vshrl.u32 %v438, 7
    %v440 = vsub.s32 %v437, %v439
    %v441 = vrot.slane %v433, %v440
    %v443 = vunpack.c.l.s4 1983009808
    %v444 = vunpack.c.0.s8 %v443
    %v445 = vlaneseq
    %v446 = vshrl.u32 %v445, 7
    %v447 = vsub.s32 %v444, %v446
    %v448 = vrot.slane %v434, %v447
    %v449 = vcombine.low %v414, %v422
    %v450 = vcombine.high %v414, %v422
    %v452 = vunpack.c.l.s4 1983009808
    %v453 = vunpack.c.0.s8 %v452
    %v454 = vlaneseq
    %v455 = vshrl.u32 %v454, 7
    %v456 = vsub.s32 %v453, %v455
    %v457 = vrot.slane %v449, %v456
    %v459 = vunpack.c.l.s4 1983009808
    %v460 = vunpack.c.0.s8 %v459
    %v461 = vlaneseq
    %v462 = vshrl.u32 %v461, 7
    %v463 = vsub.s32 %v460, %v462
    %v464 = vrot.slane %v450, %v463
    %v465 = vcombine.low %v441, %v457
    %v466 = vcombine.high %v441, %v457
    %v468 = vunpack.c.l.s4 1934713408
    %v469 = vunpack.c.0.s8 %v468
    %v470 = vlaneseq
    %v471 = vshrl.u32 %v470, 7
    %v472 = vsub.s32 %v469, %v471
    %v473 = vrot.slane %v465, %v472
    %v475 = vunpack.c.l.s4 1934713408
    %v476 = vunpack.c.0.s8 %v475
    %v477 = vlaneseq
    %v478 = vshrl.u32 %v477, 7
    %v479 = vsub.s32 %v476, %v478
    %v480 = vrot.slane %v466, %v479
    %v481 = vcombine.low %v448, %v464
    %v482 = vcombine.high %v448, %v464
    %v484 = vunpack.c.l.s4 1934713408
    %v485 = vunpack.c.0.s8 %v484
    %v486 = vlaneseq
    %v487 = vshrl.u32 %v486, 7
    %v488 = vsub.s32 %v485, %v487
    %v489 = vrot.slane %v481, %v488
    %v491 = vunpack.c.l.s4 1934713408
    %v492 = vunpack.c.0.s8 %v491
    %v493 = vlaneseq
    %v494 = vshrl.u32 %v493, 7
    %v495 = vsub.s32 %v492, %v494
    %v496 = vrot.slane %v482, %v495
    %v497 = vcombine.high %v473, 0.0
    %v498 = vcombine.high %v480, 0.0
    %v499 = vcombine.high %v489, 0.0
    %v500 = vcombine.high %v496, 0.0
    %v501 = vcombine.low %v412, %v420
    %v502 = vcombine.high %v412, %v420
    %v504 = vunpack.c.l.s4 1983009808
    %v505 = vunpack.c.0.s8 %v504
    %v506 = vlaneseq
    %v507 = vshrl.u32 %v506, 7
    %v508 = vsub.s32 %v505, %v507
    %v509 = vrot.slane %v501, %v508
    %v511 = vunpack.c.l.s4 1983009808
    %v512 = vunpack.c.0.s8 %v511
    %v513 = vlaneseq
    %v514 = vshrl.u32 %v513, 7
    %v515 = vsub.s32 %v512, %v514
    %v516 = vrot.slane %v502, %v515
    %v517 = vcombine.low %v416, %v424
    %v518 = vcombine.high %v416, %v424
    %v520 = vunpack.c.l.s4 1983009808
    %v521 = vunpack.c.0.s8 %v520
    %v522 = vlaneseq
    %v523 = vshrl.u32 %v522, 7
    %v524 = vsub.s32 %v521, %v523
    %v525 = vrot.slane %v517, %v524
    %v527 = vunpack.c.l.s4 1983009808
    %v528 = vunpack.c.0.s8 %v527
    %v529 = vlaneseq
    %v530 = vshrl.u32 %v529, 7
    %v531 = vsub.s32 %v528, %v530
    %v532 = vrot.slane %v518, %v531
    %v533 = vcombine.low %v509, %v525
    %v534 = vcombine.high %v509, %v525
    %v536 = vunpack.c.l.s4 1934713408
    %v537 = vunpack.c.0.s8 %v536
    %v538 = vlaneseq
    %v539 = vshrl.u32 %v538, 7
    %v540 = vsub.s32 %v537, %v539
    %v541 = vrot.slane %v533, %v540
    %v543 = vunpack.c.l.s4 1934713408
    %v544 = vunpack.c.0.s8 %v543
    %v545 = vlaneseq
    %v546 = vshrl.u32 %v545, 7
    %v547 = vsub.s32 %v544, %v546
    %v548 = vrot.slane %v534, %v547
    %v549 = vcombine.low %v516, %v532
    %v550 = vcombine.high %v516, %v532
    %v552 = vunpack.c.l.s4 1934713408
    %v553 = vunpack.c.0.s8 %v552
    %v554 = vlaneseq
    %v555 = vshrl.u32 %v554, 7
    %v556 = vsub.s32 %v553, %v555
    %v557 = vrot.slane %v549, %v556
    %v559 = vunpack.c.l.s4 1934713408
    %v560 = vunpack.c.0.s8 %v559
    %v561 = vlaneseq
    %v562 = vshrl.u32 %v561, 7
    %v563 = vsub.s32 %v560, %v562
    %v564 = vrot.slane %v550, %v563
    %v565 = vcombine.high %v541, 0.0
    %v566 = vcombine.high %v548, 0.0
    %v567 = vcombine.high %v557, 0.0
    %v568 = vcombine.high %v564, 0.0
    %v569 = vcombine.low %v473, %v480
    %v571 = vunpack.c.l.s4 1983009808
    %v572 = vunpack.c.0.s8 %v571
    %v573 = vlaneseq
    %v574 = vshrl.u32 %v573, 7
    %v575 = vsub.s32 %v572, %v574
    %v576 = vrot.slane %v569, %v575
    %v577 = vcombine.low %v497, %v498
    %v579 = vunpack.c.l.s4 1983009808
    %v580 = vunpack.c.0.s8 %v579
    %v581 = vlaneseq
    %v582 = vshrl.u32 %v581, 7
    %v583 = vsub.s32 %v580, %v582
    %v584 = vrot.slane %v577, %v583
    %v585 = vcombine.low %v489, %v496
    %v587 = vunpack.c.l.s4 1983009808
    %v588 = vunpack.c.0.s8 %v587
    %v589 = vlaneseq
    %v590 = vshrl.u32 %v589, 7
    %v591 = vsub.s32 %v588, %v590
    %v592 = vrot.slane %v585, %v591
    %v593 = vcombine.low %v499, %v500
    %v595 = vunpack.c.l.s4 1983009808
    %v596 = vunpack.c.0.s8 %v595
    %v597 = vlaneseq
    %v598 = vshrl.u32 %v597, 7
    %v599 = vsub.s32 %v596, %v598
    %v600 = vrot.slane %v593, %v599
    %v601 = vcombine.low %v576, %v584
    %v602 = vcombine.high %v576, %v584
    %v604 = vunpack.c.l.s4 1934713408
    %v605 = vunpack.c.0.s8 %v604
    %v606 = vlaneseq
    %v607 = vshrl.u32 %v606, 7
    %v608 = vsub.s32 %v605, %v607
    %v609 = vrot.slane %v601, %v608
    %v611 = vunpack.c.l.s4 1934713408
    %v612 = vunpack.c.0.s8 %v611
    %v613 = vlaneseq
    %v614 = vshrl.u32 %v613, 7
    %v615 = vsub.s32 %v612, %v614
    %v616 = vrot.slane %v602, %v615
    %v617 = vcombine.low %v592, %v600
    %v618 = vcombine.high %v592, %v600
    %v620 = vunpack.c.l.s4 1934713408
    %v621 = vunpack.c.0.s8 %v620
    %v622 = vlaneseq
    %v623 = vshrl.u32 %v622, 7
    %v624 = vsub.s32 %v621, %v623
    %v625 = vrot.slane %v617, %v624
    %v627 = vunpack.c.l.s4 1934713408
    %v628 = vunpack.c.0.s8 %v627
    %v629 = vlaneseq
    %v630 = vshrl.u32 %v629, 7
    %v631 = vsub.s32 %v628, %v630
    %v632 = vrot.slane %v618, %v631
    %v633 = vcombine.low %v609, %v625
    %v634 = vcombine.high %v609, %v625
    %v635 = vcombine.low %v616, %v632
    %v636 = vcombine.high %v616, %v632
    %v637 = vcombine.low %v541, %v548
    %v639 = vunpack.c.l.s4 1983009808
    %v640 = vunpack.c.0.s8 %v639
    %v641 = vlaneseq
    %v642 = vshrl.u32 %v641, 7
    %v643 = vsub.s32 %v640, %v642
    %v644 = vrot.slane %v637, %v643
    %v645 = vcombine.low %v565, %v566
    %v647 = vunpack.c.l.s4 1983009808
    %v648 = vunpack.c.0.s8 %v647
    %v649 = vlaneseq
    %v650 = vshrl.u32 %v649, 7
    %v651 = vsub.s32 %v648, %v650
    %v652 = vrot.slane %v645, %v651
    %v653 = vcombine.low %v557, %v564
    %v655 = vunpack.c.l.s4 1983009808
    %v656 = vunpack.c.0.s8 %v655
    %v657 = vlaneseq
    %v658 = vshrl.u32 %v657, 7
    %v659 = vsub.s32 %v656, %v658
    %v660 = vrot.slane %v653, %v659
    %v661 = vcombine.low %v567, %v568
    %v663 = vunpack.c.l.s4 1983009808
    %v664 = vunpack.c.0.s8 %v663
    %v665 = vlaneseq
    %v666 = vshrl.u32 %v665, 7
    %v667 = vsub.s32 %v664, %v666
    %v668 = vrot.slane %v661, %v667
    %v669 = vcombine.low %v644, %v652
    %v670 = vcombine.high %v644, %v652
    %v672 = vunpack.c.l.s4 1934713408
    %v673 = vunpack.c.0.s8 %v672
    %v674 = vlaneseq
    %v675 = vshrl.u32 %v674, 7
    %v676 = vsub.s32 %v673, %v675
    %v677 = vrot.slane %v669, %v676
    %v679 = vunpack.c.l.s4 1934713408
    %v680 = vunpack.c.0.s8 %v679
    %v681 = vlaneseq
    %v682 = vshrl.u32 %v681, 7
    %v683 = vsub.s32 %v680, %v682
    %v684 = vrot.slane %v670, %v683
    %v685 = vcombine.low %v660, %v668
    %v686 = vcombine.high %v660, %v668
    %v688 = vunpack.c.l.s4 1934713408
    %v689 = vunpack.c.0.s8 %v688
    %v690 = vlaneseq
    %v691 = vshrl.u32 %v690, 7
    %v692 = vsub.s32 %v689, %v691
    %v693 = vrot.slane %v685, %v692
    %v695 = vunpack.c.l.s4 1934713408
    %v696 = vunpack.c.0.s8 %v695
    %v697 = vlaneseq
    %v698 = vshrl.u32 %v697, 7
    %v699 = vsub.s32 %v696, %v698
    %v700 = vrot.slane %v686, %v699
    %v701 = vcombine.low %v677, %v693
    %v702 = vcombine.high %v677, %v693
    %v703 = vcombine.low %v684, %v700
    %v704 = vcombine.high %v684, %v700
    %v705 = vpack.c.bf16 %v633, %v633
    %v706 = vpack.c.bf16 %v634, %v634
    %v707 = vpack.c.bf16 %v635, %v635
    %v708 = vpack.c.bf16 %v636, %v636
    %v709 = vpack.c.bf16 %v701, %v701
    %v710 = vpack.c.bf16 %v702, %v702
    %v711 = vpack.c.bf16 %v703, %v703
    %v712 = vpack.c.bf16 %v704, %v704
    %715 = vrot.lane.b32.xlu0 %v87, 112
    %v716 = vpop.permute.xlu0 %715
    %717 = vrot.lane.b32.xlu0 %v91, 112
    %v718 = vpop.permute.xlu0 %717
    %721 = vrot.lane.b32.xlu0 %v87, 96
    %v722 = vpop.permute.xlu0 %721
    %723 = vrot.lane.b32.xlu0 %v91, 96
    %v724 = vpop.permute.xlu0 %723
    %727 = vrot.lane.b32.xlu0 %v87, 80
    %v728 = vpop.permute.xlu0 %727
    %729 = vrot.lane.b32.xlu0 %v91, 80
    %v730 = vpop.permute.xlu0 %729
    %v733 = vcombine.low %v87, %v722
    %v734 = vcombine.high %v87, %v722
    %v736 = vunpack.c.l.s4 1983009808
    %v737 = vunpack.c.0.s8 %v736
    %v738 = vlaneseq
    %v739 = vshrl.u32 %v738, 7
    %v740 = vsub.s32 %v737, %v739
    %v741 = vrot.slane %v733, %v740
    %v743 = vunpack.c.l.s4 1983009808
    %v744 = vunpack.c.0.s8 %v743
    %v745 = vlaneseq
    %v746 = vshrl.u32 %v745, 7
    %v747 = vsub.s32 %v744, %v746
    %v748 = vrot.slane %v734, %v747
    %v749 = vcombine.low %v716, %v728
    %v750 = vcombine.high %v716, %v728
    %v752 = vunpack.c.l.s4 1983009808
    %v753 = vunpack.c.0.s8 %v752
    %v754 = vlaneseq
    %v755 = vshrl.u32 %v754, 7
    %v756 = vsub.s32 %v753, %v755
    %v757 = vrot.slane %v749, %v756
    %v759 = vunpack.c.l.s4 1983009808
    %v760 = vunpack.c.0.s8 %v759
    %v761 = vlaneseq
    %v762 = vshrl.u32 %v761, 7
    %v763 = vsub.s32 %v760, %v762
    %v764 = vrot.slane %v750, %v763
    %v765 = vcombine.low %v741, %v757
    %v766 = vcombine.high %v741, %v757
    %v768 = vunpack.c.l.s4 1934713408
    %v769 = vunpack.c.0.s8 %v768
    %v770 = vlaneseq
    %v771 = vshrl.u32 %v770, 7
    %v772 = vsub.s32 %v769, %v771
    %v773 = vrot.slane %v765, %v772
    %v775 = vunpack.c.l.s4 1934713408
    %v776 = vunpack.c.0.s8 %v775
    %v777 = vlaneseq
    %v778 = vshrl.u32 %v777, 7
    %v779 = vsub.s32 %v776, %v778
    %v780 = vrot.slane %v766, %v779
    %v781 = vcombine.low %v748, %v764
    %v782 = vcombine.high %v748, %v764
    %v784 = vunpack.c.l.s4 1934713408
    %v785 = vunpack.c.0.s8 %v784
    %v786 = vlaneseq
    %v787 = vshrl.u32 %v786, 7
    %v788 = vsub.s32 %v785, %v787
    %v789 = vrot.slane %v781, %v788
    %v791 = vunpack.c.l.s4 1934713408
    %v792 = vunpack.c.0.s8 %v791
    %v793 = vlaneseq
    %v794 = vshrl.u32 %v793, 7
    %v795 = vsub.s32 %v792, %v794
    %v796 = vrot.slane %v782, %v795
    %v797 = vcombine.high %v773, 0.0
    %v798 = vcombine.high %v780, 0.0
    %v799 = vcombine.high %v789, 0.0
    %v800 = vcombine.high %v796, 0.0
    %v801 = vcombine.low %v91, %v724
    %v802 = vcombine.high %v91, %v724
    %v804 = vunpack.c.l.s4 1983009808
    %v805 = vunpack.c.0.s8 %v804
    %v806 = vlaneseq
    %v807 = vshrl.u32 %v806, 7
    %v808 = vsub.s32 %v805, %v807
    %v809 = vrot.slane %v801, %v808
    %v811 = vunpack.c.l.s4 1983009808
    %v812 = vunpack.c.0.s8 %v811
    %v813 = vlaneseq
    %v814 = vshrl.u32 %v813, 7
    %v815 = vsub.s32 %v812, %v814
    %v816 = vrot.slane %v802, %v815
    %v817 = vcombine.low %v718, %v730
    %v818 = vcombine.high %v718, %v730
    %v820 = vunpack.c.l.s4 1983009808
    %v821 = vunpack.c.0.s8 %v820
    %v822 = vlaneseq
    %v823 = vshrl.u32 %v822, 7
    %v824 = vsub.s32 %v821, %v823
    %v825 = vrot.slane %v817, %v824
    %v827 = vunpack.c.l.s4 1983009808
    %v828 = vunpack.c.0.s8 %v827
    %v829 = vlaneseq
    %v830 = vshrl.u32 %v829, 7
    %v831 = vsub.s32 %v828, %v830
    %v832 = vrot.slane %v818, %v831
    %v833 = vcombine.low %v809, %v825
    %v834 = vcombine.high %v809, %v825
    %v836 = vunpack.c.l.s4 1934713408
    %v837 = vunpack.c.0.s8 %v836
    %v838 = vlaneseq
    %v839 = vshrl.u32 %v838, 7
    %v840 = vsub.s32 %v837, %v839
    %v841 = vrot.slane %v833, %v840
    %v843 = vunpack.c.l.s4 1934713408
    %v844 = vunpack.c.0.s8 %v843
    %v845 = vlaneseq
    %v846 = vshrl.u32 %v845, 7
    %v847 = vsub.s32 %v844, %v846
    %v848 = vrot.slane %v834, %v847
    %v849 = vcombine.low %v816, %v832
    %v850 = vcombine.high %v816, %v832
    %v852 = vunpack.c.l.s4 1934713408
    %v853 = vunpack.c.0.s8 %v852
    %v854 = vlaneseq
    %v855 = vshrl.u32 %v854, 7
    %v856 = vsub.s32 %v853, %v855
    %v857 = vrot.slane %v849, %v856
    %v859 = vunpack.c.l.s4 1934713408
    %v860 = vunpack.c.0.s8 %v859
    %v861 = vlaneseq
    %v862 = vshrl.u32 %v861, 7
    %v863 = vsub.s32 %v860, %v862
    %v864 = vrot.slane %v850, %v863
    %v865 = vcombine.high %v841, 0.0
    %v866 = vcombine.high %v848, 0.0
    %v867 = vcombine.high %v857, 0.0
    %v868 = vcombine.high %v864, 0.0
    %v869 = vcombine.low %v773, %v780
    %v871 = vunpack.c.l.s4 1983009808
    %v872 = vunpack.c.0.s8 %v871
    %v873 = vlaneseq
    %v874 = vshrl.u32 %v873, 7
    %v875 = vsub.s32 %v872, %v874
    %v876 = vrot.slane %v869, %v875
    %v877 = vcombine.low %v797, %v798
    %v879 = vunpack.c.l.s4 1983009808
    %v880 = vunpack.c.0.s8 %v879
    %v881 = vlaneseq
    %v882 = vshrl.u32 %v881, 7
    %v883 = vsub.s32 %v880, %v882
    %v884 = vrot.slane %v877, %v883
    %v885 = vcombine.low %v789, %v796
    %v887 = vunpack.c.l.s4 1983009808
    %v888 = vunpack.c.0.s8 %v887
    %v889 = vlaneseq
    %v890 = vshrl.u32 %v889, 7
    %v891 = vsub.s32 %v888, %v890
    %v892 = vrot.slane %v885, %v891
    %v893 = vcombine.low %v799, %v800
    %v895 = vunpack.c.l.s4 1983009808
    %v896 = vunpack.c.0.s8 %v895
    %v897 = vlaneseq
    %v898 = vshrl.u32 %v897, 7
    %v899 = vsub.s32 %v896, %v898
    %v900 = vrot.slane %v893, %v899
    %v901 = vcombine.low %v876, %v884
    %v902 = vcombine.high %v876, %v884
    %v904 = vunpack.c.l.s4 1934713408
    %v905 = vunpack.c.0.s8 %v904
    %v906 = vlaneseq
    %v907 = vshrl.u32 %v906, 7
    %v908 = vsub.s32 %v905, %v907
    %v909 = vrot.slane %v901, %v908
    %v911 = vunpack.c.l.s4 1934713408
    %v912 = vunpack.c.0.s8 %v911
    %v913 = vlaneseq
    %v914 = vshrl.u32 %v913, 7
    %v915 = vsub.s32 %v912, %v914
    %v916 = vrot.slane %v902, %v915
    %v917 = vcombine.low %v892, %v900
    %v918 = vcombine.high %v892, %v900
    %v920 = vunpack.c.l.s4 1934713408
    %v921 = vunpack.c.0.s8 %v920
    %v922 = vlaneseq
    %v923 = vshrl.u32 %v922, 7
    %v924 = vsub.s32 %v921, %v923
    %v925 = vrot.slane %v917, %v924
    %v927 = vunpack.c.l.s4 1934713408
    %v928 = vunpack.c.0.s8 %v927
    %v929 = vlaneseq
    %v930 = vshrl.u32 %v929, 7
    %v931 = vsub.s32 %v928, %v930
    %v932 = vrot.slane %v918, %v931
    %v933 = vcombine.low %v909, %v925
    %v934 = vcombine.high %v909, %v925
    %v935 = vcombine.low %v916, %v932
    %v936 = vcombine.high %v916, %v932
    %v937 = vcombine.low %v841, %v848
    %v939 = vunpack.c.l.s4 1983009808
    %v940 = vunpack.c.0.s8 %v939
    %v941 = vlaneseq
    %v942 = vshrl.u32 %v941, 7
    %v943 = vsub.s32 %v940, %v942
    %v944 = vrot.slane %v937, %v943
    %v945 = vcombine.low %v865, %v866
    %v947 = vunpack.c.l.s4 1983009808
    %v948 = vunpack.c.0.s8 %v947
    %v949 = vlaneseq
    %v950 = vshrl.u32 %v949, 7
    %v951 = vsub.s32 %v948, %v950
    %v952 = vrot.slane %v945, %v951
    %v953 = vcombine.low %v857, %v864
    %v955 = vunpack.c.l.s4 1983009808
    %v956 = vunpack.c.0.s8 %v955
    %v957 = vlaneseq
    %v958 = vshrl.u32 %v957, 7
    %v959 = vsub.s32 %v956, %v958
    %v960 = vrot.slane %v953, %v959
    %v961 = vcombine.low %v867, %v868
    %v963 = vunpack.c.l.s4 1983009808
    %v964 = vunpack.c.0.s8 %v963
    %v965 = vlaneseq
    %v966 = vshrl.u32 %v965, 7
    %v967 = vsub.s32 %v964, %v966
    %v968 = vrot.slane %v961, %v967
    %v969 = vcombine.low %v944, %v952
    %v970 = vcombine.high %v944, %v952
    %v972 = vunpack.c.l.s4 1934713408
    %v973 = vunpack.c.0.s8 %v972
    %v974 = vlaneseq
    %v975 = vshrl.u32 %v974, 7
    %v976 = vsub.s32 %v973, %v975
    %v977 = vrot.slane %v969, %v976
    %v979 = vunpack.c.l.s4 1934713408
    %v980 = vunpack.c.0.s8 %v979
    %v981 = vlaneseq
    %v982 = vshrl.u32 %v981, 7
    %v983 = vsub.s32 %v980, %v982
    %v984 = vrot.slane %v970, %v983
    %v985 = vcombine.low %v960, %v968
    %v986 = vcombine.high %v960, %v968
    %v988 = vunpack.c.l.s4 1934713408
    %v989 = vunpack.c.0.s8 %v988
    %v990 = vlaneseq
    %v991 = vshrl.u32 %v990, 7
    %v992 = vsub.s32 %v989, %v991
    %v993 = vrot.slane %v985, %v992
    %v995 = vunpack.c.l.s4 1934713408
    %v996 = vunpack.c.0.s8 %v995
    %v997 = vlaneseq
    %v998 = vshrl.u32 %v997, 7
    %v999 = vsub.s32 %v996, %v998
    %v1000 = vrot.slane %v986, %v999
    %v1001 = vcombine.low %v977, %v993
    %v1002 = vcombine.high %v977, %v993
    %v1003 = vcombine.low %v984, %v1000
    %v1004 = vcombine.high %v984, %v1000
    %v1005 = vpack.c.bf16 %v933, %v933
    %v1006 = vpack.c.bf16 %v934, %v934
    %v1007 = vpack.c.bf16 %v935, %v935
    %v1008 = vpack.c.bf16 %v936, %v936
    %v1009 = vpack.c.bf16 %v1001, %v1001
    %v1010 = vpack.c.bf16 %v1002, %v1002
    %v1011 = vpack.c.bf16 %v1003, %v1003
    %v1012 = vpack.c.bf16 %v1004, %v1004
    %vm1013 = vcmask 130048
    %v1015 = vsel %vm1013, %v387, 0
    %v1018 = vsel %vm1013, %v705, 0
    %1020 = vmatprep.subr.bf16.mxu0 0
    %1021 = vmatpush1.bf16.xpose.msra.mxu0 %v1018
    %1022 = vmatprep.subr.bf16.mxu0 0
    %1023 = vmatpush1.bf16.xpose.msra.mxu0 0
    %1024 = vmatprep.subr.bf16.mxu0 0
    %1025 = vmatpush1.bf16.xpose.msra.mxu0 0
    %1026 = vmatprep.subr.bf16.mxu0 0
    %1027 = vmatpush1.bf16.xpose.msra.mxu0 0
    %1028 = vmatprep.subr.bf16.mxu0 0
    %1029 = vmatpush1.bf16.xpose.msra.mxu0 0
    %1030 = vmatprep.subr.bf16.mxu0 0
    %1031 = vmatpush1.bf16.xpose.msra.mxu0 0
    %1032 = vmatprep.subr.bf16.mxu0 0
    %1033 = vmatpush1.bf16.xpose.msra.mxu0 0
    %1034 = vmatprep.subr.bf16.mxu0 0
    %1035 = vmatpush1.bf16.xpose.msra.mxu0 0
    %1036 = vmatprep.subr.bf16.mxu0 0
    %1037 = vmatpush1.bf16.xpose.msra.mxu0 0
    %1038 = vmatprep.subr.bf16.mxu0 0
    %1039 = vmatpush1.bf16.xpose.msra.mxu0 0
    %1040 = vmatprep.subr.bf16.mxu0 0
    %1041 = vmatpush1.bf16.xpose.msra.mxu0 0
    %1042 = vmatprep.subr.bf16.mxu0 0
    %1043 = vmatpush1.bf16.xpose.msra.mxu0 0
    %1044 = vmatprep.subr.bf16.mxu0 0
    %1045 = vmatpush1.bf16.xpose.msra.mxu0 0
    %1046 = vmatprep.subr.bf16.mxu0 0
    %1047 = vmatpush1.bf16.xpose.msra.mxu0 0
    %1048 = vmatprep.subr.bf16.mxu0 0
    %1049 = vmatpush1.bf16.xpose.msra.mxu0 0
    %1050 = vmatprep.subr.bf16.mxu0 0
    %1051 = vmatpush1.bf16.xpose.msra.mxu0 0
    %1052 = vmatprep.mubr.bf16.mxu0 0
    %1053 = vmatmul.mubr.bf16.gmra.mrb[0].mxu0 %v1015
    %v1054 = vpop.f32.mrb[0].mxu0
    %v1055 = vadd.f32 0.0, %v1054
    %v1056 = vpop.f32.mrb[0].mxu0
    %v1057 = vpop.f32.mrb[0].mxu0
    %v1058 = vpop.f32.mrb[0].mxu0
    %1059 = vdwg.mxu0
    %v1061 = vsel %vm1013, %v388, 0
    %v1064 = vsel %vm1013, %v706, 0
    %1066 = vmatprep.subr.bf16.mxu0 0
    %1067 = vmatpush1.bf16.xpose.msra.mxu0 %v1064
    %1068 = vmatprep.subr.bf16.mxu0 0
    %1069 = vmatpush1.bf16.xpose.msra.mxu0 0
    %1070 = vmatprep.subr.bf16.mxu0 0
    %1071 = vmatpush1.bf16.xpose.msra.mxu0 0
    %1072 = vmatprep.subr.bf16.mxu0 0
    %1073 = vmatpush1.bf16.xpose.msra.mxu0 0
    %1074 = vmatprep.subr.bf16.mxu0 0
    %1075 = vmatpush1.bf16.xpose.msra.mxu0 0
    %1076 = vmatprep.subr.bf16.mxu0 0
    %1077 = vmatpush1.bf16.xpose.msra.mxu0 0
    %1078 = vmatprep.subr.bf16.mxu0 0
    %1079 = vmatpush1.bf16.xpose.msra.mxu0 0
    %1080 = vmatprep.subr.bf16.mxu0 0
    %1081 = vmatpush1.bf16.xpose.msra.mxu0 0
    %1082 = vmatprep.subr.bf16.mxu0 0
    %1083 = vmatpush1.bf16.xpose.msra.mxu0 0
    %1084 = vmatprep.subr.bf16.mxu0 0
    %1085 = vmatpush1.bf16.xpose.msra.mxu0 0
    %1086 = vmatprep.subr.bf16.mxu0 0
    %1087 = vmatpush1.bf16.xpose.msra.mxu0 0
    %1088 = vmatprep.subr.bf16.mxu0 0
    %1089 = vmatpush1.bf16.xpose.msra.mxu0 0
    %1090 = vmatprep.subr.bf16.mxu0 0
    %1091 = vmatpush1.bf16.xpose.msra.mxu0 0
    %1092 = vmatprep.subr.bf16.mxu0 0
    %1093 = vmatpush1.bf16.xpose.msra.mxu0 0
    %1094 = vmatprep.subr.bf16.mxu0 0
    %1095 = vmatpush1.bf16.xpose.msra.mxu0 0
    %1096 = vmatprep.subr.bf16.mxu0 0
    %1097 = vmatpush1.bf16.xpose.msra.mxu0 0
    %1098 = vmatprep.mubr.bf16.mxu0 0
    %1099 = vmatmul.mubr.bf16.gmra.mrb[0].mxu0 %v1061
    %v1100 = vpop.f32.mrb[0].mxu0
    %v1101 = vadd.f32 0.0, %v1100
    %v1102 = vpop.f32.mrb[0].mxu0
    %v1103 = vpop.f32.mrb[0].mxu0
    %v1104 = vpop.f32.mrb[0].mxu0
    %1105 = vdwg.mxu0
    %v1107 = vsel %vm1013, %v389, 0
    %v1110 = vsel %vm1013, %v707, 0
    %1112 = vmatprep.subr.bf16.mxu0 0
    %1113 = vmatpush1.bf16.xpose.msra.mxu0 %v1110
    %1114 = vmatprep.subr.bf16.mxu0 0
    %1115 = vmatpush1.bf16.xpose.msra.mxu0 0
    %1116 = vmatprep.subr.bf16.mxu0 0
    %1117 = vmatpush1.bf16.xpose.msra.mxu0 0
    %1118 = vmatprep.subr.bf16.mxu0 0
    %1119 = vmatpush1.bf16.xpose.msra.mxu0 0
    %1120 = vmatprep.subr.bf16.mxu0 0
    %1121 = vmatpush1.bf16.xpose.msra.mxu0 0
    %1122 = vmatprep.subr.bf16.mxu0 0
    %1123 = vmatpush1.bf16.xpose.msra.mxu0 0
    %1124 = vmatprep.subr.bf16.mxu0 0
    %1125 = vmatpush1.bf16.xpose.msra.mxu0 0
    %1126 = vmatprep.subr.bf16.mxu0 0
    %1127 = vmatpush1.bf16.xpose.msra.mxu0 0
    %1128 = vmatprep.subr.bf16.mxu0 0
    %1129 = vmatpush1.bf16.xpose.msra.mxu0 0
    %1130 = vmatprep.subr.bf16.mxu0 0
    %1131 = vmatpush1.bf16.xpose.msra.mxu0 0
    %1132 = vmatprep.subr.bf16.mxu0 0
    %1133 = vmatpush1.bf16.xpose.msra.mxu0 0
    %1134 = vmatprep.subr.bf16.mxu0 0
    %1135 = vmatpush1.bf16.xpose.msra.mxu0 0
    %1136 = vmatprep.subr.bf16.mxu0 0
    %1137 = vmatpush1.bf16.xpose.msra.mxu0 0
    %1138 = vmatprep.subr.bf16.mxu0 0
    %1139 = vmatpush1.bf16.xpose.msra.mxu0 0
    %1140 = vmatprep.subr.bf16.mxu0 0
    %1141 = vmatpush1.bf16.xpose.msra.mxu0 0
    %1142 = vmatprep.subr.bf16.mxu0 0
    %1143 = vmatpush1.bf16.xpose.msra.mxu0 0
    %1144 = vmatprep.mubr.bf16.mxu0 0
    %1145 = vmatmul.mubr.bf16.gmra.mrb[0].mxu0 %v1107
    %v1146 = vpop.f32.mrb[0].mxu0
    %v1147 = vadd.f32 0.0, %v1146
    %v1148 = vpop.f32.mrb[0].mxu0
    %v1149 = vpop.f32.mrb[0].mxu0
    %v1150 = vpop.f32.mrb[0].mxu0
    %1151 = vdwg.mxu0
    %v1153 = vsel %vm1013, %v390, 0
    %v1156 = vsel %vm1013, %v708, 0
    %1158 = vmatprep.subr.bf16.mxu0 0
    %1159 = vmatpush1.bf16.xpose.msra.mxu0 %v1156
    %1160 = vmatprep.subr.bf16.mxu0 0
    %1161 = vmatpush1.bf16.xpose.msra.mxu0 0
    %1162 = vmatprep.subr.bf16.mxu0 0
    %1163 = vmatpush1.bf16.xpose.msra.mxu0 0
    %1164 = vmatprep.subr.bf16.mxu0 0
    %1165 = vmatpush1.bf16.xpose.msra.mxu0 0
    %1166 = vmatprep.subr.bf16.mxu0 0
    %1167 = vmatpush1.bf16.xpose.msra.mxu0 0
    %1168 = vmatprep.subr.bf16.mxu0 0
    %1169 = vmatpush1.bf16.xpose.msra.mxu0 0
    %1170 = vmatprep.subr.bf16.mxu0 0
    %1171 = vmatpush1.bf16.xpose.msra.mxu0 0
    %1172 = vmatprep.subr.bf16.mxu0 0
    %1173 = vmatpush1.bf16.xpose.msra.mxu0 0
    %1174 = vmatprep.subr.bf16.mxu0 0
    %1175 = vmatpush1.bf16.xpose.msra.mxu0 0
    %1176 = vmatprep.subr.bf16.mxu0 0
    %1177 = vmatpush1.bf16.xpose.msra.mxu0 0
    %1178 = vmatprep.subr.bf16.mxu0 0
    %1179 = vmatpush1.bf16.xpose.msra.mxu0 0
    %1180 = vmatprep.subr.bf16.mxu0 0
    %1181 = vmatpush1.bf16.xpose.msra.mxu0 0
    %1182 = vmatprep.subr.bf16.mxu0 0
    %1183 = vmatpush1.bf16.xpose.msra.mxu0 0
    %1184 = vmatprep.subr.bf16.mxu0 0
    %1185 = vmatpush1.bf16.xpose.msra.mxu0 0
    %1186 = vmatprep.subr.bf16.mxu0 0
    %1187 = vmatpush1.bf16.xpose.msra.mxu0 0
    %1188 = vmatprep.subr.bf16.mxu0 0
    %1189 = vmatpush1.bf16.xpose.msra.mxu0 0
    %1190 = vmatprep.mubr.bf16.mxu0 0
    %1191 = vmatmul.mubr.bf16.gmra.mrb[0].mxu0 %v1153
    %v1192 = vpop.f32.mrb[0].mxu0
    %v1193 = vadd.f32 0.0, %v1192
    %v1194 = vpop.f32.mrb[0].mxu0
    %v1195 = vpop.f32.mrb[0].mxu0
    %v1196 = vpop.f32.mrb[0].mxu0
    %1197 = vdwg.mxu0
    %v1199 = vsel %vm1013, %v391, 0
    %v1202 = vsel %vm1013, %v709, 0
    %1204 = vmatprep.subr.bf16.mxu0 0
    %1205 = vmatpush1.bf16.xpose.msra.mxu0 %v1202
    %1206 = vmatprep.subr.bf16.mxu0 0
    %1207 = vmatpush1.bf16.xpose.msra.mxu0 0
    %1208 = vmatprep.subr.bf16.mxu0 0
    %1209 = vmatpush1.bf16.xpose.msra.mxu0 0
    %1210 = vmatprep.subr.bf16.mxu0 0
    %1211 = vmatpush1.bf16.xpose.msra.mxu0 0
    %1212 = vmatprep.subr.bf16.mxu0 0
    %1213 = vmatpush1.bf16.xpose.msra.mxu0 0
    %1214 = vmatprep.subr.bf16.mxu0 0
    %1215 = vmatpush1.bf16.xpose.msra.mxu0 0
    %1216 = vmatprep.subr.bf16.mxu0 0
    %1217 = vmatpush1.bf16.xpose.msra.mxu0 0
    %1218 = vmatprep.subr.bf16.mxu0 0
    %1219 = vmatpush1.bf16.xpose.msra.mxu0 0
    %1220 = vmatprep.subr.bf16.mxu0 0
    %1221 = vmatpush1.bf16.xpose.msra.mxu0 0
    %1222 = vmatprep.subr.bf16.mxu0 0
    %1223 = vmatpush1.bf16.xpose.msra.mxu0 0
    %1224 = vmatprep.subr.bf16.mxu0 0
    %1225 = vmatpush1.bf16.xpose.msra.mxu0 0
    %1226 = vmatprep.subr.bf16.mxu0 0
    %1227 = vmatpush1.bf16.xpose.msra.mxu0 0
    %1228 = vmatprep.subr.bf16.mxu0 0
    %1229 = vmatpush1.bf16.xpose.msra.mxu0 0
    %1230 = vmatprep.subr.bf16.mxu0 0
    %1231 = vmatpush1.bf16.xpose.msra.mxu0 0
    %1232 = vmatprep.subr.bf16.mxu0 0
    %1233 = vmatpush1.bf16.xpose.msra.mxu0 0
    %1234 = vmatprep.subr.bf16.mxu0 0
    %1235 = vmatpush1.bf16.xpose.msra.mxu0 0
    %1236 = vmatprep.mubr.bf16.mxu0 0
    %1237 = vmatmul.mubr.bf16.gmra.mrb[0].mxu0 %v1199
    %v1238 = vpop.f32.mrb[0].mxu0
    %v1239 = vadd.f32 0.0, %v1238
    %v1240 = vpop.f32.mrb[0].mxu0
    %v1241 = vpop.f32.mrb[0].mxu0
    %v1242 = vpop.f32.mrb[0].mxu0
    %1243 = vdwg.mxu0
    %v1245 = vsel %vm1013, %v392, 0
    %v1248 = vsel %vm1013, %v710, 0
    %1250 = vmatprep.subr.bf16.mxu0 0
    %1251 = vmatpush1.bf16.xpose.msra.mxu0 %v1248
    %1252 = vmatprep.subr.bf16.mxu0 0
    %1253 = vmatpush1.bf16.xpose.msra.mxu0 0
    %1254 = vmatprep.subr.bf16.mxu0 0
    %1255 = vmatpush1.bf16.xpose.msra.mxu0 0
    %1256 = vmatprep.subr.bf16.mxu0 0
    %1257 = vmatpush1.bf16.xpose.msra.mxu0 0
    %1258 = vmatprep.subr.bf16.mxu0 0
    %1259 = vmatpush1.bf16.xpose.msra.mxu0 0
    %1260 = vmatprep.subr.bf16.mxu0 0
    %1261 = vmatpush1.bf16.xpose.msra.mxu0 0
    %1262 = vmatprep.subr.bf16.mxu0 0
    %1263 = vmatpush1.bf16.xpose.msra.mxu0 0
    %1264 = vmatprep.subr.bf16.mxu0 0
    %1265 = vmatpush1.bf16.xpose.msra.mxu0 0
    %1266 = vmatprep.subr.bf16.mxu0 0
    %1267 = vmatpush1.bf16.xpose.msra.mxu0 0
    %1268 = vmatprep.subr.bf16.mxu0 0
    %1269 = vmatpush1.bf16.xpose.msra.mxu0 0
    %1270 = vmatprep.subr.bf16.mxu0 0
    %1271 = vmatpush1.bf16.xpose.msra.mxu0 0
    %1272 = vmatprep.subr.bf16.mxu0 0
    %1273 = vmatpush1.bf16.xpose.msra.mxu0 0
    %1274 = vmatprep.subr.bf16.mxu0 0
    %1275 = vmatpush1.bf16.xpose.msra.mxu0 0
    %1276 = vmatprep.subr.bf16.mxu0 0
    %1277 = vmatpush1.bf16.xpose.msra.mxu0 0
    %1278 = vmatprep.subr.bf16.mxu0 0
    %1279 = vmatpush1.bf16.xpose.msra.mxu0 0
    %1280 = vmatprep.subr.bf16.mxu0 0
    %1281 = vmatpush1.bf16.xpose.msra.mxu0 0
    %1282 = vmatprep.mubr.bf16.mxu0 0
    %1283 = vmatmul.mubr.bf16.gmra.mrb[0].mxu0 %v1245
    %v1284 = vpop.f32.mrb[0].mxu0
    %v1285 = vadd.f32 0.0, %v1284
    %v1286 = vpop.f32.mrb[0].mxu0
    %v1287 = vpop.f32.mrb[0].mxu0
    %v1288 = vpop.f32.mrb[0].mxu0
    %1289 = vdwg.mxu0
    %v1291 = vsel %vm1013, %v393, 0
    %v1294 = vsel %vm1013, %v711, 0
    %1296 = vmatprep.subr.bf16.mxu0 0
    %1297 = vmatpush1.bf16.xpose.msra.mxu0 %v1294
    %1298 = vmatprep.subr.bf16.mxu0 0
    %1299 = vmatpush1.bf16.xpose.msra.mxu0 0
    %1300 = vmatprep.subr.bf16.mxu0 0
    %1301 = vmatpush1.bf16.xpose.msra.mxu0 0
    %1302 = vmatprep.subr.bf16.mxu0 0
    %1303 = vmatpush1.bf16.xpose.msra.mxu0 0
    %1304 = vmatprep.subr.bf16.mxu0 0
    %1305 = vmatpush1.bf16.xpose.msra.mxu0 0
    %1306 = vmatprep.subr.bf16.mxu0 0
    %1307 = vmatpush1.bf16.xpose.msra.mxu0 0
    %1308 = vmatprep.subr.bf16.mxu0 0
    %1309 = vmatpush1.bf16.xpose.msra.mxu0 0
    %1310 = vmatprep.subr.bf16.mxu0 0
    %1311 = vmatpush1.bf16.xpose.msra.mxu0 0
    %1312 = vmatprep.subr.bf16.mxu0 0
    %1313 = vmatpush1.bf16.xpose.msra.mxu0 0
    %1314 = vmatprep.subr.bf16.mxu0 0
    %1315 = vmatpush1.bf16.xpose.msra.mxu0 0
    %1316 = vmatprep.subr.bf16.mxu0 0
    %1317 = vmatpush1.bf16.xpose.msra.mxu0 0
    %1318 = vmatprep.subr.bf16.mxu0 0
    %1319 = vmatpush1.bf16.xpose.msra.mxu0 0
    %1320 = vmatprep.subr.bf16.mxu0 0
    %1321 = vmatpush1.bf16.xpose.msra.mxu0 0
    %1322 = vmatprep.subr.bf16.mxu0 0
    %1323 = vmatpush1.bf16.xpose.msra.mxu0 0
    %1324 = vmatprep.subr.bf16.mxu0 0
    %1325 = vmatpush1.bf16.xpose.msra.mxu0 0
    %1326 = vmatprep.subr.bf16.mxu0 0
    %1327 = vmatpush1.bf16.xpose.msra.mxu0 0
    %1328 = vmatprep.mubr.bf16.mxu0 0
    %1329 = vmatmul.mubr.bf16.gmra.mrb[0].mxu0 %v1291
    %v1330 = vpop.f32.mrb[0].mxu0
    %v1331 = vadd.f32 0.0, %v1330
    %v1332 = vpop.f32.mrb[0].mxu0
    %v1333 = vpop.f32.mrb[0].mxu0
    %v1334 = vpop.f32.mrb[0].mxu0
    %1335 = vdwg.mxu0
    %v1337 = vsel %vm1013, %v394, 0
    %v1340 = vsel %vm1013, %v712, 0
    %1342 = vmatprep.subr.bf16.mxu0 0
    %1343 = vmatpush1.bf16.xpose.msra.mxu0 %v1340
    %1344 = vmatprep.subr.bf16.mxu0 0
    %1345 = vmatpush1.bf16.xpose.msra.mxu0 0
    %1346 = vmatprep.subr.bf16.mxu0 0
    %1347 = vmatpush1.bf16.xpose.msra.mxu0 0
    %1348 = vmatprep.subr.bf16.mxu0 0
    %1349 = vmatpush1.bf16.xpose.msra.mxu0 0
    %1350 = vmatprep.subr.bf16.mxu0 0
    %1351 = vmatpush1.bf16.xpose.msra.mxu0 0
    %1352 = vmatprep.subr.bf16.mxu0 0
    %1353 = vmatpush1.bf16.xpose.msra.mxu0 0
    %1354 = vmatprep.subr.bf16.mxu0 0
    %1355 = vmatpush1.bf16.xpose.msra.mxu0 0
    %1356 = vmatprep.subr.bf16.mxu0 0
    %1357 = vmatpush1.bf16.xpose.msra.mxu0 0
    %1358 = vmatprep.subr.bf16.mxu0 0
    %1359 = vmatpush1.bf16.xpose.msra.mxu0 0
    %1360 = vmatprep.subr.bf16.mxu0 0
    %1361 = vmatpush1.bf16.xpose.msra.mxu0 0
    %1362 = vmatprep.subr.bf16.mxu0 0
    %1363 = vmatpush1.bf16.xpose.msra.mxu0 0
    %1364 = vmatprep.subr.bf16.mxu0 0
    %1365 = vmatpush1.bf16.xpose.msra.mxu0 0
    %1366 = vmatprep.subr.bf16.mxu0 0
    %1367 = vmatpush1.bf16.xpose.msra.mxu0 0
    %1368 = vmatprep.subr.bf16.mxu0 0
    %1369 = vmatpush1.bf16.xpose.msra.mxu0 0
    %1370 = vmatprep.subr.bf16.mxu0 0
    %1371 = vmatpush1.bf16.xpose.msra.mxu0 0
    %1372 = vmatprep.subr.bf16.mxu0 0
    %1373 = vmatpush1.bf16.xpose.msra.mxu0 0
    %1374 = vmatprep.mubr.bf16.mxu0 0
    %1375 = vmatmul.mubr.bf16.gmra.mrb[0].mxu0 %v1337
    %v1376 = vpop.f32.mrb[0].mxu0
    %v1377 = vadd.f32 0.0, %v1376
    %v1378 = vpop.f32.mrb[0].mxu0
    %v1379 = vpop.f32.mrb[0].mxu0
    %v1380 = vpop.f32.mrb[0].mxu0
    %1381 = vdwg.mxu0
    %vm1382 = vcmask 64512
    %v1383 = vsel %vm1382, %v1055, -inf
    %1384 = vmax.xlane.f32.xlu0 %v1383
    %v1385 = vpop.xlane.xlu0 %1384
    %v1386 = vsel %vm1382, %v1101, -inf
    %1387 = vmax.xlane.f32.xlu0 %v1386
    %v1388 = vpop.xlane.xlu0 %1387
    %v1389 = vsel %vm1382, %v1147, -inf
    %1390 = vmax.xlane.f32.xlu0 %v1389
    %v1391 = vpop.xlane.xlu0 %1390
    %v1392 = vsel %vm1382, %v1193, -inf
    %1393 = vmax.xlane.f32.xlu0 %v1392
    %v1394 = vpop.xlane.xlu0 %1393
    %v1395 = vsel %vm1382, %v1239, -inf
    %1396 = vmax.xlane.f32.xlu0 %v1395
    %v1397 = vpop.xlane.xlu0 %1396
    %v1398 = vsel %vm1382, %v1285, -inf
    %1399 = vmax.xlane.f32.xlu0 %v1398
    %v1400 = vpop.xlane.xlu0 %1399
    %v1401 = vsel %vm1382, %v1331, -inf
    %1402 = vmax.xlane.f32.xlu0 %v1401
    %v1403 = vpop.xlane.xlu0 %1402
    %v1404 = vsel %vm1382, %v1377, -inf
    %1405 = vmax.xlane.f32.xlu0 %v1404
    %v1406 = vpop.xlane.xlu0 %1405
    %v1407 = vsub.f32 %v1055, %v1385
    %v1408 = vsub.f32 %v1101, %v1388
    %v1409 = vsub.f32 %v1147, %v1391
    %v1410 = vsub.f32 %v1193, %v1394
    %v1411 = vsub.f32 %v1239, %v1397
    %v1412 = vsub.f32 %v1285, %v1400
    %v1413 = vsub.f32 %v1331, %v1403
    %v1414 = vsub.f32 %v1377, %v1406
    %v1415 = vmul.f32 %v1407, 1.442695
    %v1416 = vpow.pop %v1415
    %v1417 = vmul.f32 %v1408, 1.442695
    %v1418 = vpow.pop %v1417
    %v1419 = vmul.f32 %v1409, 1.442695
    %v1420 = vpow.pop %v1419
    %v1421 = vmul.f32 %v1410, 1.442695
    %v1422 = vpow.pop %v1421
    %v1423 = vmul.f32 %v1411, 1.442695
    %v1424 = vpow.pop %v1423
    %v1425 = vmul.f32 %v1412, 1.442695
    %v1426 = vpow.pop %v1425
    %v1427 = vmul.f32 %v1413, 1.442695
    %v1428 = vpow.pop %v1427
    %v1429 = vmul.f32 %v1414, 1.442695
    %v1430 = vpow.pop %v1429
    %v1431 = vsel %vm1382, %v1416, 0.0
    %1432 = vadd.xlane.f32.xlu0 %v1431
    %v1433 = vpop.xlane.xlu0 %1432
    %v1434 = vsel %vm1382, %v1418, 0.0
    %1435 = vadd.xlane.f32.xlu0 %v1434
    %v1436 = vpop.xlane.xlu0 %1435
    %v1437 = vsel %vm1382, %v1420, 0.0
    %1438 = vadd.xlane.f32.xlu0 %v1437
    %v1439 = vpop.xlane.xlu0 %1438
    %v1440 = vsel %vm1382, %v1422, 0.0
    %1441 = vadd.xlane.f32.xlu0 %v1440
    %v1442 = vpop.xlane.xlu0 %1441
    %v1443 = vsel %vm1382, %v1424, 0.0
    %1444 = vadd.xlane.f32.xlu0 %v1443
    %v1445 = vpop.xlane.xlu0 %1444
    %v1446 = vsel %vm1382, %v1426, 0.0
    %1447 = vadd.xlane.f32.xlu0 %v1446
    %v1448 = vpop.xlane.xlu0 %1447
    %v1449 = vsel %vm1382, %v1428, 0.0
    %1450 = vadd.xlane.f32.xlu0 %v1449
    %v1451 = vpop.xlane.xlu0 %1450
    %v1452 = vsel %vm1382, %v1430, 0.0
    %1453 = vadd.xlane.f32.xlu0 %v1452
    %v1454 = vpop.xlane.xlu0 %1453
    %v1455 = vpack.c.bf16 %v1416, %v1416
    %v1456 = vpack.c.bf16 %v1418, %v1418
    %v1457 = vpack.c.bf16 %v1420, %v1420
    %v1458 = vpack.c.bf16 %v1422, %v1422
    %v1459 = vpack.c.bf16 %v1424, %v1424
    %v1460 = vpack.c.bf16 %v1426, %v1426
    %v1461 = vpack.c.bf16 %v1428, %v1428
    %v1462 = vpack.c.bf16 %v1430, %v1430
    %v1464 = vsel %vm1382, %v1455, 0
    %vm1466 = vcmask 1043456
    %v1468 = vsel %vm1466, %v1005, 0
    %1470 = vmatprep.subr.bf16.mxu0 0
    %1471 = vmatpush1.bf16.msra.mxu0 %v1468
    %1472 = vmatprep.subr.bf16.mxu0 0
    %1473 = vmatpush1.bf16.msra.mxu0 0
    %1474 = vmatprep.subr.bf16.mxu0 0
    %1475 = vmatpush1.bf16.msra.mxu0 0
    %1476 = vmatprep.subr.bf16.mxu0 0
    %1477 = vmatpush1.bf16.msra.mxu0 0
    %1478 = vmatprep.subr.bf16.mxu0 0
    %1479 = vmatpush1.bf16.msra.mxu0 0
    %1480 = vmatprep.subr.bf16.mxu0 0
    %1481 = vmatpush1.bf16.msra.mxu0 0
    %1482 = vmatprep.subr.bf16.mxu0 0
    %1483 = vmatpush1.bf16.msra.mxu0 0
    %1484 = vmatprep.subr.bf16.mxu0 0
    %1485 = vmatpush1.bf16.msra.mxu0 0
    %1486 = vmatprep.subr.bf16.mxu0 0
    %1487 = vmatpush1.bf16.msra.mxu0 0
    %1488 = vmatprep.subr.bf16.mxu0 0
    %1489 = vmatpush1.bf16.msra.mxu0 0
    %1490 = vmatprep.subr.bf16.mxu0 0
    %1491 = vmatpush1.bf16.msra.mxu0 0
    %1492 = vmatprep.subr.bf16.mxu0 0
    %1493 = vmatpush1.bf16.msra.mxu0 0
    %1494 = vmatprep.subr.bf16.mxu0 0
    %1495 = vmatpush1.bf16.msra.mxu0 0
    %1496 = vmatprep.subr.bf16.mxu0 0
    %1497 = vmatpush1.bf16.msra.mxu0 0
    %1498 = vmatprep.subr.bf16.mxu0 0
    %1499 = vmatpush1.bf16.msra.mxu0 0
    %1500 = vmatprep.subr.bf16.mxu0 0
    %1501 = vmatpush1.bf16.msra.mxu0 0
    %1502 = vmatprep.mubr.bf16.mxu0 0
    %1503 = vmatmul.mubr.bf16.gmra.mrb[0].mxu0 %v1464
    %v1504 = vpop.f32.mrb[0].mxu0
    %v1505 = vadd.f32 0.0, %v1504
    %v1506 = vpop.f32.mrb[0].mxu0
    %v1507 = vpop.f32.mrb[0].mxu0
    %v1508 = vpop.f32.mrb[0].mxu0
    %1509 = vdwg.mxu0
    %v1511 = vsel %vm1382, %v1456, 0
    %v1514 = vsel %vm1466, %v1006, 0
    %1516 = vmatprep.subr.bf16.mxu0 0
    %1517 = vmatpush1.bf16.msra.mxu0 %v1514
    %1518 = vmatprep.subr.bf16.mxu0 0
    %1519 = vmatpush1.bf16.msra.mxu0 0
    %1520 = vmatprep.subr.bf16.mxu0 0
    %1521 = vmatpush1.bf16.msra.mxu0 0
    %1522 = vmatprep.subr.bf16.mxu0 0
    %1523 = vmatpush1.bf16.msra.mxu0 0
    %1524 = vmatprep.subr.bf16.mxu0 0
    %1525 = vmatpush1.bf16.msra.mxu0 0
    %1526 = vmatprep.subr.bf16.mxu0 0
    %1527 = vmatpush1.bf16.msra.mxu0 0
    %1528 = vmatprep.subr.bf16.mxu0 0
    %1529 = vmatpush1.bf16.msra.mxu0 0
    %1530 = vmatprep.subr.bf16.mxu0 0
    %1531 = vmatpush1.bf16.msra.mxu0 0
    %1532 = vmatprep.subr.bf16.mxu0 0
    %1533 = vmatpush1.bf16.msra.mxu0 0
    %1534 = vmatprep.subr.bf16.mxu0 0
    %1535 = vmatpush1.bf16.msra.mxu0 0
    %1536 = vmatprep.subr.bf16.mxu0 0
    %1537 = vmatpush1.bf16.msra.mxu0 0
    %1538 = vmatprep.subr.bf16.mxu0 0
    %1539 = vmatpush1.bf16.msra.mxu0 0
    %1540 = vmatprep.subr.bf16.mxu0 0
    %1541 = vmatpush1.bf16.msra.mxu0 0
    %1542 = vmatprep.subr.bf16.mxu0 0
    %1543 = vmatpush1.bf16.msra.mxu0 0
    %1544 = vmatprep.subr.bf16.mxu0 0
    %1545 = vmatpush1.bf16.msra.mxu0 0
    %1546 = vmatprep.subr.bf16.mxu0 0
    %1547 = vmatpush1.bf16.msra.mxu0 0
    %1548 = vmatprep.mubr.bf16.mxu0 0
    %1549 = vmatmul.mubr.bf16.gmra.mrb[0].mxu0 %v1511
    %v1550 = vpop.f32.mrb[0].mxu0
    %v1551 = vadd.f32 0.0, %v1550
    %v1552 = vpop.f32.mrb[0].mxu0
    %v1553 = vpop.f32.mrb[0].mxu0
    %v1554 = vpop.f32.mrb[0].mxu0
    %1555 = vdwg.mxu0
    %v1557 = vsel %vm1382, %v1457, 0
    %v1560 = vsel %vm1466, %v1007, 0
    %1562 = vmatprep.subr.bf16.mxu0 0
    %1563 = vmatpush1.bf16.msra.mxu0 %v1560
    %1564 = vmatprep.subr.bf16.mxu0 0
    %1565 = vmatpush1.bf16.msra.mxu0 0
    %1566 = vmatprep.subr.bf16.mxu0 0
    %1567 = vmatpush1.bf16.msra.mxu0 0
    %1568 = vmatprep.subr.bf16.mxu0 0
    %1569 = vmatpush1.bf16.msra.mxu0 0
    %1570 = vmatprep.subr.bf16.mxu0 0
    %1571 = vmatpush1.bf16.msra.mxu0 0
    %1572 = vmatprep.subr.bf16.mxu0 0
    %1573 = vmatpush1.bf16.msra.mxu0 0
    %1574 = vmatprep.subr.bf16.mxu0 0
    %1575 = vmatpush1.bf16.msra.mxu0 0
    %1576 = vmatprep.subr.bf16.mxu0 0
    %1577 = vmatpush1.bf16.msra.mxu0 0
    %1578 = vmatprep.subr.bf16.mxu0 0
    %1579 = vmatpush1.bf16.msra.mxu0 0
    %1580 = vmatprep.subr.bf16.mxu0 0
    %1581 = vmatpush1.bf16.msra.mxu0 0
    %1582 = vmatprep.subr.bf16.mxu0 0
    %1583 = vmatpush1.bf16.msra.mxu0 0
    %1584 = vmatprep.subr.bf16.mxu0 0
    %1585 = vmatpush1.bf16.msra.mxu0 0
    %1586 = vmatprep.subr.bf16.mxu0 0
    %1587 = vmatpush1.bf16.msra.mxu0 0
    %1588 = vmatprep.subr.bf16.mxu0 0
    %1589 = vmatpush1.bf16.msra.mxu0 0
    %1590 = vmatprep.subr.bf16.mxu0 0
    %1591 = vmatpush1.bf16.msra.mxu0 0
    %1592 = vmatprep.subr.bf16.mxu0 0
    %1593 = vmatpush1.bf16.msra.mxu0 0
    %1594 = vmatprep.mubr.bf16.mxu0 0
    %1595 = vmatmul.mubr.bf16.gmra.mrb[0].mxu0 %v1557
    %v1596 = vpop.f32.mrb[0].mxu0
    %v1597 = vadd.f32 0.0, %v1596
    %v1598 = vpop.f32.mrb[0].mxu0
    %v1599 = vpop.f32.mrb[0].mxu0
    %v1600 = vpop.f32.mrb[0].mxu0
    %1601 = vdwg.mxu0
    %v1603 = vsel %vm1382, %v1458, 0
    %v1606 = vsel %vm1466, %v1008, 0
    %1608 = vmatprep.subr.bf16.mxu0 0
    %1609 = vmatpush1.bf16.msra.mxu0 %v1606
    %1610 = vmatprep.subr.bf16.mxu0 0
    %1611 = vmatpush1.bf16.msra.mxu0 0
    %1612 = vmatprep.subr.bf16.mxu0 0
    %1613 = vmatpush1.bf16.msra.mxu0 0
    %1614 = vmatprep.subr.bf16.mxu0 0
    %1615 = vmatpush1.bf16.msra.mxu0 0
    %1616 = vmatprep.subr.bf16.mxu0 0
    %1617 = vmatpush1.bf16.msra.mxu0 0
    %1618 = vmatprep.subr.bf16.mxu0 0
    %1619 = vmatpush1.bf16.msra.mxu0 0
    %1620 = vmatprep.subr.bf16.mxu0 0
    %1621 = vmatpush1.bf16.msra.mxu0 0
    %1622 = vmatprep.subr.bf16.mxu0 0
    %1623 = vmatpush1.bf16.msra.mxu0 0
    %1624 = vmatprep.subr.bf16.mxu0 0
    %1625 = vmatpush1.bf16.msra.mxu0 0
    %1626 = vmatprep.subr.bf16.mxu0 0
    %1627 = vmatpush1.bf16.msra.mxu0 0
    %1628 = vmatprep.subr.bf16.mxu0 0
    %1629 = vmatpush1.bf16.msra.mxu0 0
    %1630 = vmatprep.subr.bf16.mxu0 0
    %1631 = vmatpush1.bf16.msra.mxu0 0
    %1632 = vmatprep.subr.bf16.mxu0 0
    %1633 = vmatpush1.bf16.msra.mxu0 0
    %1634 = vmatprep.subr.bf16.mxu0 0
    %1635 = vmatpush1.bf16.msra.mxu0 0
    %1636 = vmatprep.subr.bf16.mxu0 0
    %1637 = vmatpush1.bf16.msra.mxu0 0
    %1638 = vmatprep.subr.bf16.mxu0 0
    %1639 = vmatpush1.bf16.msra.mxu0 0
    %1640 = vmatprep.mubr.bf16.mxu0 0
    %1641 = vmatmul.mubr.bf16.gmra.mrb[0].mxu0 %v1603
    %v1642 = vpop.f32.mrb[0].mxu0
    %v1643 = vadd.f32 0.0, %v1642
    %v1644 = vpop.f32.mrb[0].mxu0
    %v1645 = vpop.f32.mrb[0].mxu0
    %v1646 = vpop.f32.mrb[0].mxu0
    %1647 = vdwg.mxu0
    %v1649 = vsel %vm1382, %v1459, 0
    %v1652 = vsel %vm1466, %v1009, 0
    %1654 = vmatprep.subr.bf16.mxu0 0
    %1655 = vmatpush1.bf16.msra.mxu0 %v1652
    %1656 = vmatprep.subr.bf16.mxu0 0
    %1657 = vmatpush1.bf16.msra.mxu0 0
    %1658 = vmatprep.subr.bf16.mxu0 0
    %1659 = vmatpush1.bf16.msra.mxu0 0
    %1660 = vmatprep.subr.bf16.mxu0 0
    %1661 = vmatpush1.bf16.msra.mxu0 0
    %1662 = vmatprep.subr.bf16.mxu0 0
    %1663 = vmatpush1.bf16.msra.mxu0 0
    %1664 = vmatprep.subr.bf16.mxu0 0
    %1665 = vmatpush1.bf16.msra.mxu0 0
    %1666 = vmatprep.subr.bf16.mxu0 0
    %1667 = vmatpush1.bf16.msra.mxu0 0
    %1668 = vmatprep.subr.bf16.mxu0 0
    %1669 = vmatpush1.bf16.msra.mxu0 0
    %1670 = vmatprep.subr.bf16.mxu0 0
    %1671 = vmatpush1.bf16.msra.mxu0 0
    %1672 = vmatprep.subr.bf16.mxu0 0
    %1673 = vmatpush1.bf16.msra.mxu0 0
    %1674 = vmatprep.subr.bf16.mxu0 0
    %1675 = vmatpush1.bf16.msra.mxu0 0
    %1676 = vmatprep.subr.bf16.mxu0 0
    %1677 = vmatpush1.bf16.msra.mxu0 0
    %1678 = vmatprep.subr.bf16.mxu0 0
    %1679 = vmatpush1.bf16.msra.mxu0 0
    %1680 = vmatprep.subr.bf16.mxu0 0
    %1681 = vmatpush1.bf16.msra.mxu0 0
    %1682 = vmatprep.subr.bf16.mxu0 0
    %1683 = vmatpush1.bf16.msra.mxu0 0
    %1684 = vmatprep.subr.bf16.mxu0 0
    %1685 = vmatpush1.bf16.msra.mxu0 0
    %1686 = vmatprep.mubr.bf16.mxu0 0
    %1687 = vmatmul.mubr.bf16.gmra.mrb[0].mxu0 %v1649
    %v1688 = vpop.f32.mrb[0].mxu0
    %v1689 = vadd.f32 0.0, %v1688
    %v1690 = vpop.f32.mrb[0].mxu0
    %v1691 = vpop.f32.mrb[0].mxu0
    %v1692 = vpop.f32.mrb[0].mxu0
    %1693 = vdwg.mxu0
    %v1695 = vsel %vm1382, %v1460, 0
    %v1698 = vsel %vm1466, %v1010, 0
    %1700 = vmatprep.subr.bf16.mxu0 0
    %1701 = vmatpush1.bf16.msra.mxu0 %v1698
    %1702 = vmatprep.subr.bf16.mxu0 0
    %1703 = vmatpush1.bf16.msra.mxu0 0
    %1704 = vmatprep.subr.bf16.mxu0 0
    %1705 = vmatpush1.bf16.msra.mxu0 0
    %1706 = vmatprep.subr.bf16.mxu0 0
    %1707 = vmatpush1.bf16.msra.mxu0 0
    %1708 = vmatprep.subr.bf16.mxu0 0
    %1709 = vmatpush1.bf16.msra.mxu0 0
    %1710 = vmatprep.subr.bf16.mxu0 0
    %1711 = vmatpush1.bf16.msra.mxu0 0
    %1712 = vmatprep.subr.bf16.mxu0 0
    %1713 = vmatpush1.bf16.msra.mxu0 0
    %1714 = vmatprep.subr.bf16.mxu0 0
    %1715 = vmatpush1.bf16.msra.mxu0 0
    %1716 = vmatprep.subr.bf16.mxu0 0
    %1717 = vmatpush1.bf16.msra.mxu0 0
    %1718 = vmatprep.subr.bf16.mxu0 0
    %1719 = vmatpush1.bf16.msra.mxu0 0
    %1720 = vmatprep.subr.bf16.mxu0 0
    %1721 = vmatpush1.bf16.msra.mxu0 0
    %1722 = vmatprep.subr.bf16.mxu0 0
    %1723 = vmatpush1.bf16.msra.mxu0 0
    %1724 = vmatprep.subr.bf16.mxu0 0
    %1725 = vmatpush1.bf16.msra.mxu0 0
    %1726 = vmatprep.subr.bf16.mxu0 0
    %1727 = vmatpush1.bf16.msra.mxu0 0
    %1728 = vmatprep.subr.bf16.mxu0 0
    %1729 = vmatpush1.bf16.msra.mxu0 0
    %1730 = vmatprep.subr.bf16.mxu0 0
    %1731 = vmatpush1.bf16.msra.mxu0 0
    %1732 = vmatprep.mubr.bf16.mxu0 0
    %1733 = vmatmul.mubr.bf16.gmra.mrb[0].mxu0 %v1695
    %v1734 = vpop.f32.mrb[0].mxu0
    %v1735 = vadd.f32 0.0, %v1734
    %v1736 = vpop.f32.mrb[0].mxu0
    %v1737 = vpop.f32.mrb[0].mxu0
    %v1738 = vpop.f32.mrb[0].mxu0
    %1739 = vdwg.mxu0
    %v1741 = vsel %vm1382, %v1461, 0
    %v1744 = vsel %vm1466, %v1011, 0
    %1746 = vmatprep.subr.bf16.mxu0 0
    %1747 = vmatpush1.bf16.msra.mxu0 %v1744
    %1748 = vmatprep.subr.bf16.mxu0 0
    %1749 = vmatpush1.bf16.msra.mxu0 0
    %1750 = vmatprep.subr.bf16.mxu0 0
    %1751 = vmatpush1.bf16.msra.mxu0 0
    %1752 = vmatprep.subr.bf16.mxu0 0
    %1753 = vmatpush1.bf16.msra.mxu0 0
    %1754 = vmatprep.subr.bf16.mxu0 0
    %1755 = vmatpush1.bf16.msra.mxu0 0
    %1756 = vmatprep.subr.bf16.mxu0 0
    %1757 = vmatpush1.bf16.msra.mxu0 0
    %1758 = vmatprep.subr.bf16.mxu0 0
    %1759 = vmatpush1.bf16.msra.mxu0 0
    %1760 = vmatprep.subr.bf16.mxu0 0
    %1761 = vmatpush1.bf16.msra.mxu0 0
    %1762 = vmatprep.subr.bf16.mxu0 0
    %1763 = vmatpush1.bf16.msra.mxu0 0
    %1764 = vmatprep.subr.bf16.mxu0 0
    %1765 = vmatpush1.bf16.msra.mxu0 0
    %1766 = vmatprep.subr.bf16.mxu0 0
    %1767 = vmatpush1.bf16.msra.mxu0 0
    %1768 = vmatprep.subr.bf16.mxu0 0
    %1769 = vmatpush1.bf16.msra.mxu0 0
    %1770 = vmatprep.subr.bf16.mxu0 0
    %1771 = vmatpush1.bf16.msra.mxu0 0
    %1772 = vmatprep.subr.bf16.mxu0 0
    %1773 = vmatpush1.bf16.msra.mxu0 0
    %1774 = vmatprep.subr.bf16.mxu0 0
    %1775 = vmatpush1.bf16.msra.mxu0 0
    %1776 = vmatprep.subr.bf16.mxu0 0
    %1777 = vmatpush1.bf16.msra.mxu0 0
    %1778 = vmatprep.mubr.bf16.mxu0 0
    %1779 = vmatmul.mubr.bf16.gmra.mrb[0].mxu0 %v1741
    %v1780 = vpop.f32.mrb[0].mxu0
    %v1781 = vadd.f32 0.0, %v1780
    %v1782 = vpop.f32.mrb[0].mxu0
    %v1783 = vpop.f32.mrb[0].mxu0
    %v1784 = vpop.f32.mrb[0].mxu0
    %1785 = vdwg.mxu0
    %v1787 = vsel %vm1382, %v1462, 0
    %v1790 = vsel %vm1466, %v1012, 0
    %1792 = vmatprep.subr.bf16.mxu0 0
    %1793 = vmatpush1.bf16.msra.mxu0 %v1790
    %1794 = vmatprep.subr.bf16.mxu0 0
    %1795 = vmatpush1.bf16.msra.mxu0 0
    %1796 = vmatprep.subr.bf16.mxu0 0
    %1797 = vmatpush1.bf16.msra.mxu0 0
    %1798 = vmatprep.subr.bf16.mxu0 0
    %1799 = vmatpush1.bf16.msra.mxu0 0
    %1800 = vmatprep.subr.bf16.mxu0 0
    %1801 = vmatpush1.bf16.msra.mxu0 0
    %1802 = vmatprep.subr.bf16.mxu0 0
    %1803 = vmatpush1.bf16.msra.mxu0 0
    %1804 = vmatprep.subr.bf16.mxu0 0
    %1805 = vmatpush1.bf16.msra.mxu0 0
    %1806 = vmatprep.subr.bf16.mxu0 0
    %1807 = vmatpush1.bf16.msra.mxu0 0
    %1808 = vmatprep.subr.bf16.mxu0 0
    %1809 = vmatpush1.bf16.msra.mxu0 0
    %1810 = vmatprep.subr.bf16.mxu0 0
    %1811 = vmatpush1.bf16.msra.mxu0 0
    %1812 = vmatprep.subr.bf16.mxu0 0
    %1813 = vmatpush1.bf16.msra.mxu0 0
    %1814 = vmatprep.subr.bf16.mxu0 0
    %1815 = vmatpush1.bf16.msra.mxu0 0
    %1816 = vmatprep.subr.bf16.mxu0 0
    %1817 = vmatpush1.bf16.msra.mxu0 0
    %1818 = vmatprep.subr.bf16.mxu0 0
    %1819 = vmatpush1.bf16.msra.mxu0 0
    %1820 = vmatprep.subr.bf16.mxu0 0
    %1821 = vmatpush1.bf16.msra.mxu0 0
    %1822 = vmatprep.subr.bf16.mxu0 0
    %1823 = vmatpush1.bf16.msra.mxu0 0
    %1824 = vmatprep.mubr.bf16.mxu0 0
    %1825 = vmatmul.mubr.bf16.gmra.mrb[0].mxu0 %v1787
    %v1826 = vpop.f32.mrb[0].mxu0
    %v1827 = vadd.f32 0.0, %v1826
    %v1828 = vpop.f32.mrb[0].mxu0
    %v1829 = vpop.f32.mrb[0].mxu0
    %v1830 = vpop.f32.mrb[0].mxu0
    %1831 = vdwg.mxu0
    %v1832 = vrcp.pop %v1433
    %v1833 = vrcp.pop %v1436
    %v1834 = vrcp.pop %v1439
    %v1835 = vrcp.pop %v1442
    %v1836 = vrcp.pop %v1445
    %v1837 = vrcp.pop %v1448
    %v1838 = vrcp.pop %v1451
    %v1839 = vrcp.pop %v1454
    %v1840 = vmul.f32 %v1505, %v1832
    %v1841 = vmul.f32 %v1551, %v1833
    %v1842 = vmul.f32 %v1597, %v1834
    %v1843 = vmul.f32 %v1643, %v1835
    %v1844 = vmul.f32 %v1689, %v1836
    %v1845 = vmul.f32 %v1735, %v1837
    %v1846 = vmul.f32 %v1781, %v1838
    %v1847 = vmul.f32 %v1827, %v1839
    %v1848 = vcombine.low %v1840, %v1842
    %v1849 = vcombine.high %v1840, %v1842
    %v1851 = vunpack.c.l.s4 1983009808
    %v1852 = vunpack.c.0.s8 %v1851
    %v1853 = vlaneseq
    %v1854 = vshrl.u32 %v1853, 7
    %v1855 = vsub.s32 %v1852, %v1854
    %v1856 = vrot.slane %v1848, %v1855
    %v1858 = vunpack.c.l.s4 1983009808
    %v1859 = vunpack.c.0.s8 %v1858
    %v1860 = vlaneseq
    %v1861 = vshrl.u32 %v1860, 7
    %v1862 = vsub.s32 %v1859, %v1861
    %v1863 = vrot.slane %v1849, %v1862
    %v1864 = vcombine.low %v1841, %v1843
    %v1865 = vcombine.high %v1841, %v1843
    %v1867 = vunpack.c.l.s4 1983009808
    %v1868 = vunpack.c.0.s8 %v1867
    %v1869 = vlaneseq
    %v1870 = vshrl.u32 %v1869, 7
    %v1871 = vsub.s32 %v1868, %v1870
    %v1872 = vrot.slane %v1864, %v1871
    %v1874 = vunpack.c.l.s4 1983009808
    %v1875 = vunpack.c.0.s8 %v1874
    %v1876 = vlaneseq
    %v1877 = vshrl.u32 %v1876, 7
    %v1878 = vsub.s32 %v1875, %v1877
    %v1879 = vrot.slane %v1865, %v1878
    %v1880 = vcombine.low %v1856, %v1872
    %v1881 = vcombine.high %v1856, %v1872
    %v1883 = vunpack.c.l.s4 1934713408
    %v1884 = vunpack.c.0.s8 %v1883
    %v1885 = vlaneseq
    %v1886 = vshrl.u32 %v1885, 7
    %v1887 = vsub.s32 %v1884, %v1886
    %v1888 = vrot.slane %v1880, %v1887
    %v1890 = vunpack.c.l.s4 1934713408
    %v1891 = vunpack.c.0.s8 %v1890
    %v1892 = vlaneseq
    %v1893 = vshrl.u32 %v1892, 7
    %v1894 = vsub.s32 %v1891, %v1893
    %v1895 = vrot.slane %v1881, %v1894
    %v1896 = vcombine.low %v1863, %v1879
    %v1897 = vcombine.high %v1863, %v1879
    %v1899 = vunpack.c.l.s4 1934713408
    %v1900 = vunpack.c.0.s8 %v1899
    %v1901 = vlaneseq
    %v1902 = vshrl.u32 %v1901, 7
    %v1903 = vsub.s32 %v1900, %v1902
    %v1904 = vrot.slane %v1896, %v1903
    %v1906 = vunpack.c.l.s4 1934713408
    %v1907 = vunpack.c.0.s8 %v1906
    %v1908 = vlaneseq
    %v1909 = vshrl.u32 %v1908, 7
    %v1910 = vsub.s32 %v1907, %v1909
    %v1911 = vrot.slane %v1897, %v1910
    %v1912 = vcombine.high %v1888, 0.0
    %v1913 = vcombine.high %v1895, 0.0
    %v1914 = vcombine.high %v1904, 0.0
    %v1915 = vcombine.high %v1911, 0.0
    %v1916 = vcombine.low %v1844, %v1846
    %v1917 = vcombine.high %v1844, %v1846
    %v1919 = vunpack.c.l.s4 1983009808
    %v1920 = vunpack.c.0.s8 %v1919
    %v1921 = vlaneseq
    %v1922 = vshrl.u32 %v1921, 7
    %v1923 = vsub.s32 %v1920, %v1922
    %v1924 = vrot.slane %v1916, %v1923
    %v1926 = vunpack.c.l.s4 1983009808
    %v1927 = vunpack.c.0.s8 %v1926
    %v1928 = vlaneseq
    %v1929 = vshrl.u32 %v1928, 7
    %v1930 = vsub.s32 %v1927, %v1929
    %v1931 = vrot.slane %v1917, %v1930
    %v1932 = vcombine.low %v1845, %v1847
    %v1933 = vcombine.high %v1845, %v1847
    %v1935 = vunpack.c.l.s4 1983009808
    %v1936 = vunpack.c.0.s8 %v1935
    %v1937 = vlaneseq
    %v1938 = vshrl.u32 %v1937, 7
    %v1939 = vsub.s32 %v1936, %v1938
    %v1940 = vrot.slane %v1932, %v1939
    %v1942 = vunpack.c.l.s4 1983009808
    %v1943 = vunpack.c.0.s8 %v1942
    %v1944 = vlaneseq
    %v1945 = vshrl.u32 %v1944, 7
    %v1946 = vsub.s32 %v1943, %v1945
    %v1947 = vrot.slane %v1933, %v1946
    %v1948 = vcombine.low %v1924, %v1940
    %v1949 = vcombine.high %v1924, %v1940
    %v1951 = vunpack.c.l.s4 1934713408
    %v1952 = vunpack.c.0.s8 %v1951
    %v1953 = vlaneseq
    %v1954 = vshrl.u32 %v1953, 7
    %v1955 = vsub.s32 %v1952, %v1954
    %v1956 = vrot.slane %v1948, %v1955
    %v1958 = vunpack.c.l.s4 1934713408
    %v1959 = vunpack.c.0.s8 %v1958
    %v1960 = vlaneseq
    %v1961 = vshrl.u32 %v1960, 7
    %v1962 = vsub.s32 %v1959, %v1961
    %v1963 = vrot.slane %v1949, %v1962
    %v1964 = vcombine.low %v1931, %v1947
    %v1965 = vcombine.high %v1931, %v1947
    %v1967 = vunpack.c.l.s4 1934713408
    %v1968 = vunpack.c.0.s8 %v1967
    %v1969 = vlaneseq
    %v1970 = vshrl.u32 %v1969, 7
    %v1971 = vsub.s32 %v1968, %v1970
    %v1972 = vrot.slane %v1964, %v1971
    %v1974 = vunpack.c.l.s4 1934713408
    %v1975 = vunpack.c.0.s8 %v1974
    %v1976 = vlaneseq
    %v1977 = vshrl.u32 %v1976, 7
    %v1978 = vsub.s32 %v1975, %v1977
    %v1979 = vrot.slane %v1965, %v1978
    %v1980 = vcombine.high %v1956, 0.0
    %v1981 = vcombine.high %v1963, 0.0
    %v1982 = vcombine.high %v1972, 0.0
    %v1983 = vcombine.high %v1979, 0.0
    %v1984 = vcombine.low %v1888, %v1895
    %v1986 = vunpack.c.l.s4 1983009808
    %v1987 = vunpack.c.0.s8 %v1986
    %v1988 = vlaneseq
    %v1989 = vshrl.u32 %v1988, 7
    %v1990 = vsub.s32 %v1987, %v1989
    %v1991 = vrot.slane %v1984, %v1990
    %v1992 = vcombine.low %v1912, %v1913
    %v1994 = vunpack.c.l.s4 1983009808
    %v1995 = vunpack.c.0.s8 %v1994
    %v1996 = vlaneseq
    %v1997 = vshrl.u32 %v1996, 7
    %v1998 = vsub.s32 %v1995, %v1997
    %v1999 = vrot.slane %v1992, %v1998
    %v2000 = vcombine.low %v1904, %v1911
    %v2002 = vunpack.c.l.s4 1983009808
    %v2003 = vunpack.c.0.s8 %v2002
    %v2004 = vlaneseq
    %v2005 = vshrl.u32 %v2004, 7
    %v2006 = vsub.s32 %v2003, %v2005
    %v2007 = vrot.slane %v2000, %v2006
    %v2008 = vcombine.low %v1914, %v1915
    %v2010 = vunpack.c.l.s4 1983009808
    %v2011 = vunpack.c.0.s8 %v2010
    %v2012 = vlaneseq
    %v2013 = vshrl.u32 %v2012, 7
    %v2014 = vsub.s32 %v2011, %v2013
    %v2015 = vrot.slane %v2008, %v2014
    %v2016 = vcombine.low %v1991, %v1999
    %v2017 = vcombine.high %v1991, %v1999
    %v2019 = vunpack.c.l.s4 1934713408
    %v2020 = vunpack.c.0.s8 %v2019
    %v2021 = vlaneseq
    %v2022 = vshrl.u32 %v2021, 7
    %v2023 = vsub.s32 %v2020, %v2022
    %v2024 = vrot.slane %v2016, %v2023
    %v2026 = vunpack.c.l.s4 1934713408
    %v2027 = vunpack.c.0.s8 %v2026
    %v2028 = vlaneseq
    %v2029 = vshrl.u32 %v2028, 7
    %v2030 = vsub.s32 %v2027, %v2029
    %v2031 = vrot.slane %v2017, %v2030
    %v2032 = vcombine.low %v2007, %v2015
    %v2033 = vcombine.high %v2007, %v2015
    %v2035 = vunpack.c.l.s4 1934713408
    %v2036 = vunpack.c.0.s8 %v2035
    %v2037 = vlaneseq
    %v2038 = vshrl.u32 %v2037, 7
    %v2039 = vsub.s32 %v2036, %v2038
    %v2040 = vrot.slane %v2032, %v2039
    %v2042 = vunpack.c.l.s4 1934713408
    %v2043 = vunpack.c.0.s8 %v2042
    %v2044 = vlaneseq
    %v2045 = vshrl.u32 %v2044, 7
    %v2046 = vsub.s32 %v2043, %v2045
    %v2047 = vrot.slane %v2033, %v2046
    %v2048 = vcombine.low %v2024, %v2040
    %v2049 = vcombine.high %v2024, %v2040
    %v2050 = vcombine.low %v2031, %v2047
    %v2051 = vcombine.high %v2031, %v2047
    %v2052 = vcombine.low %v1956, %v1963
    %v2054 = vunpack.c.l.s4 1983009808
    %v2055 = vunpack.c.0.s8 %v2054
    %v2056 = vlaneseq
    %v2057 = vshrl.u32 %v2056, 7
    %v2058 = vsub.s32 %v2055, %v2057
    %v2059 = vrot.slane %v2052, %v2058
    %v2060 = vcombine.low %v1980, %v1981
    %v2062 = vunpack.c.l.s4 1983009808
    %v2063 = vunpack.c.0.s8 %v2062
    %v2064 = vlaneseq
    %v2065 = vshrl.u32 %v2064, 7
    %v2066 = vsub.s32 %v2063, %v2065
    %v2067 = vrot.slane %v2060, %v2066
    %v2068 = vcombine.low %v1972, %v1979
    %v2070 = vunpack.c.l.s4 1983009808
    %v2071 = vunpack.c.0.s8 %v2070
    %v2072 = vlaneseq
    %v2073 = vshrl.u32 %v2072, 7
    %v2074 = vsub.s32 %v2071, %v2073
    %v2075 = vrot.slane %v2068, %v2074
    %v2076 = vcombine.low %v1982, %v1983
    %v2078 = vunpack.c.l.s4 1983009808
    %v2079 = vunpack.c.0.s8 %v2078
    %v2080 = vlaneseq
    %v2081 = vshrl.u32 %v2080, 7
    %v2082 = vsub.s32 %v2079, %v2081
    %v2083 = vrot.slane %v2076, %v2082
    %v2084 = vcombine.low %v2059, %v2067
    %v2085 = vcombine.high %v2059, %v2067
    %v2087 = vunpack.c.l.s4 1934713408
    %v2088 = vunpack.c.0.s8 %v2087
    %v2089 = vlaneseq
    %v2090 = vshrl.u32 %v2089, 7
    %v2091 = vsub.s32 %v2088, %v2090
    %v2092 = vrot.slane %v2084, %v2091
    %v2094 = vunpack.c.l.s4 1934713408
    %v2095 = vunpack.c.0.s8 %v2094
    %v2096 = vlaneseq
    %v2097 = vshrl.u32 %v2096, 7
    %v2098 = vsub.s32 %v2095, %v2097
    %v2099 = vrot.slane %v2085, %v2098
    %v2100 = vcombine.low %v2075, %v2083
    %v2101 = vcombine.high %v2075, %v2083
    %v2103 = vunpack.c.l.s4 1934713408
    %v2104 = vunpack.c.0.s8 %v2103
    %v2105 = vlaneseq
    %v2106 = vshrl.u32 %v2105, 7
    %v2107 = vsub.s32 %v2104, %v2106
    %v2108 = vrot.slane %v2100, %v2107
    %v2110 = vunpack.c.l.s4 1934713408
    %v2111 = vunpack.c.0.s8 %v2110
    %v2112 = vlaneseq
    %v2113 = vshrl.u32 %v2112, 7
    %v2114 = vsub.s32 %v2111, %v2113
    %v2115 = vrot.slane %v2101, %v2114
    %v2116 = vcombine.low %v2092, %v2108
    %v2117 = vcombine.high %v2092, %v2108
    %v2118 = vcombine.low %v2099, %v2115
    %v2119 = vcombine.high %v2099, %v2115
    %2122 = vrot.lane.b32.xlu0 %v2049, 16
    %v2123 = vpop.permute.xlu0 %2122
    %2124 = vrot.lane.b32.xlu0 %v2117, 16
    %v2125 = vpop.permute.xlu0 %2124
    %2130 = vrot.lane.b32.xlu0 %v2050, 32
    %v2131 = vpop.permute.xlu0 %2130
    %2132 = vrot.lane.b32.xlu0 %v2118, 32
    %v2133 = vpop.permute.xlu0 %2132
    %2138 = vrot.lane.b32.xlu0 %v2051, 48
    %v2139 = vpop.permute.xlu0 %2138
    %2140 = vrot.lane.b32.xlu0 %v2119, 48
    %v2141 = vpop.permute.xlu0 %2140
    %v2144 = vsel %vm1013, %v2048, %v2123
    %v2145 = vsel %vm1013, %v2116, %v2125
    %v2146 = vsel %vm46, %v2144, %v2131
    %v2147 = vsel %vm46, %v2145, %v2133
    %vm2148 = vcmask 392192
    %v2149 = vsel %vm2148, %v2146, %v2139
    %v2150 = vsel %vm2148, %v2147, %v2141
    %v2151 = vpack.c.bf16 %v2150, %v2149
    %v2152 = vld [vmem:[%s2] sm:$0xf]
    %v2153 = vld [vmem:[%s2 + $0x4] sm:$0xf]
    %v2154 = vld [vmem:[%s2 + $0x8] sm:$0xf]
    %v2155 = vld [vmem:[%s2 + $0xc] sm:$0xf]
    %v2156 = vld [vmem:[%s2 + $0x10] sm:$0xf]
    %v2157 = vld [vmem:[%s2 + $0x14] sm:$0xf]
    %v2158 = vld [vmem:[%s2 + $0x18] sm:$0xf]
    %v2159 = vld [vmem:[%s2 + $0x1c] sm:$0xf]
    %v2160 = vld [vmem:[%s3] sm:$0x1]
    %v2162 = vlaneseq
    %v2163 = vshrl.u32 %v2162, 7
    %v2164 = vsub.s32 0, %v2163
    %v2165 = vrot.slane %v2160, %v2164
    %v2175 = vunpack.c.l.b16 %v2152
    %v2176 = vunpack.c.l.b16 %v2153
    %v2177 = vunpack.c.l.b16 %v2154
    %v2178 = vunpack.c.l.b16 %v2155
    %v2179 = vunpack.c.l.b16 %v2156
    %v2180 = vunpack.c.l.b16 %v2157
    %v2181 = vunpack.c.l.b16 %v2158
    %v2182 = vunpack.c.l.b16 %v2159
    %v2183 = vpack.c.b16 %v2176, %v2175
    %v2184 = vpack.c.b16 %v2178, %v2177
    %v2185 = vpack.c.b16 %v2180, %v2179
    %v2186 = vpack.c.b16 %v2182, %v2181
    %vm2191 = vcmask 523264
    %v2193 = vsel %vm2191, %v2151, 0
    %2195 = vmatprep.subr.bf16.mxu0 0
    %2196 = vmatpush1.bf16.msra.mxu0 %v2183
    %2197 = vmatprep.subr.bf16.mxu0 0
    %2198 = vmatpush1.bf16.msra.mxu0 %v2184
    %2199 = vmatprep.subr.bf16.mxu0 0
    %2200 = vmatpush1.bf16.msra.mxu0 %v2185
    %2201 = vmatprep.subr.bf16.mxu0 0
    %2202 = vmatpush1.bf16.msra.mxu0 %v2186
    %2203 = vmatprep.subr.bf16.mxu0 0
    %2204 = vmatpush1.bf16.msra.mxu0 0
    %2205 = vmatprep.subr.bf16.mxu0 0
    %2206 = vmatpush1.bf16.msra.mxu0 0
    %2207 = vmatprep.subr.bf16.mxu0 0
    %2208 = vmatpush1.bf16.msra.mxu0 0
    %2209 = vmatprep.subr.bf16.mxu0 0
    %2210 = vmatpush1.bf16.msra.mxu0 0
    %2211 = vmatprep.subr.bf16.mxu0 0
    %2212 = vmatpush1.bf16.msra.mxu0 0
    %2213 = vmatprep.subr.bf16.mxu0 0
    %2214 = vmatpush1.bf16.msra.mxu0 0
    %2215 = vmatprep.subr.bf16.mxu0 0
    %2216 = vmatpush1.bf16.msra.mxu0 0
    %2217 = vmatprep.subr.bf16.mxu0 0
    %2218 = vmatpush1.bf16.msra.mxu0 0
    %2219 = vmatprep.subr.bf16.mxu0 0
    %2220 = vmatpush1.bf16.msra.mxu0 0
    %2221 = vmatprep.subr.bf16.mxu0 0
    %2222 = vmatpush1.bf16.msra.mxu0 0
    %2223 = vmatprep.subr.bf16.mxu0 0
    %2224 = vmatpush1.bf16.msra.mxu0 0
    %2225 = vmatprep.subr.bf16.mxu0 0
    %2226 = vmatpush1.bf16.msra.mxu0 0
    %2227 = vmatprep.mubr.bf16.mxu0 0
    %2228 = vmatmul.mubr.bf16.gmra.mrb[0].mxu0 %v2193
    %v2229 = vpop.f32.mrb[0].mxu0
    %v2230 = vadd.f32 %v2165, %v2229
    %v2231 = vpop.f32.mrb[0].mxu0
    %v2232 = vpop.f32.mrb[0].mxu0
    %v2233 = vadd.f32 %v2165, %v2232
    %v2234 = vpop.f32.mrb[0].mxu0
    %2235 = vdwg.mxu0
    %2236 = vst.msk [vmem:[#allocation2] sm:$0xff] %vm46, %v2230
    %2237 = vst.msk [vmem:[#allocation2 + $0x8] sm:$0xff] %vm46, %v2233
    // Predicated region
    $region18: #{tpu_custom_call.1} parent=1 // pred_check
      _
    $region19: #{tpu_custom_call.1} parent=1 // pred_check_branch
      %2239 = sbr.rel (0) target = $region21
    $region20: #{tpu_custom_call.1} parent=1 // pred_region
      %s2241 = ssub.s32 256, 256
      %2242 = vsyncadd [#allocation3], %s2241
      %s2243 = sshll.u32 [#allocation2], 4
      %s2244 = int_to_ptr.vmem [resolvable:$true] %s2243
      %2249 = dma.vmem_to_hbm [thread:$0]  %s2244, 256, %s4, [#allocation3], 128, 128, 8
    $region21: #{tpu_custom_call.1} parent=1 // pred_fallthru
      _
    // Predicated region
    $region22: #{tpu_custom_call.1} parent=1 // pred_check
      _
    $region23: #{tpu_custom_call.1} parent=1 // pred_check_branch
      %2251 = sbr.rel (0) target = $region25
    $region24: #{tpu_custom_call.1} parent=1 // pred_region
      %2252 = dma.done [#allocation3], 256
    $region25: #{tpu_custom_call.1} parent=1 // pred_fallthru
      _
    %2253 = vsyncpa [#allocation3], 1

// kernel: tpu_custom_call.1
$region0: #{tpu_custom_call.1}
  #allocation0 [shape = 'u32[]', space=smem, size = 0x4, offset = 0x4, fixed_abs, tag = 'smem constant byte address 0x4 - core index']
  #allocation1 [shape = 'u32[144,128]{1,0:T(1,128)}', space=vmem, size = 0x12000, scoped, tag = 'internal scratch']
  %s0 = inlined_call_operand.vmem [shape: f32[2,8,32], index: 0, kind: input, shape index: {}]
  %s1 = inlined_call_operand.vmem [shape: bf16[32,192], index: 1, kind: input, shape index: {}]
  %s2 = inlined_call_operand.vmem [shape: bf16[64,32], index: 2, kind: input, shape index: {}]
  %s3 = inlined_call_operand.vmem [shape: f32[1,32], index: 3, kind: input, shape index: {}]
  %s4 = inlined_call_operand.hbm [shape: f32[2,8,32], index: 4, kind: output, shape index: {}]
  %s5 = sld [smem:[#allocation0]]
  $region26: #{tpu_custom_call.1} parent=0
    _
  %s7 = ssub.s32 1, %s5
  %s8 = scalar_select 0, %s7, %s5
  $region1: #{tpu_custom_call.1} parent=0
    #allocation2 [shape = 'u8[8192]{0}', space=vmem, size = 0x2000, scoped, tag = 'output window, operand 0, single buffered']
    #allocation3 [shape = 's32[1]{0}', space=sflag, size = 0x4, scoped, tag = 'scoped memory for tpu_custom_call.1']
    %9 = vsyncpa [#allocation3], 0
    // Predicated region
    $region2: #{tpu_custom_call.1} parent=1 // pred_check
      _
    $region3: #{tpu_custom_call.1} parent=1 // pred_check_branch
      %11 = sbr.rel (0) target = $region5
    $region4: #{tpu_custom_call.1} parent=1 // pred_region
      _
    $region5: #{tpu_custom_call.1} parent=1 // pred_fallthru
      _
    // Predicated region
    $region6: #{tpu_custom_call.1} parent=1 // pred_check
      _
    $region7: #{tpu_custom_call.1} parent=1 // pred_check_branch
      %13 = sbr.rel (0) target = $region9
    $region8: #{tpu_custom_call.1} parent=1 // pred_region
      _
    $region9: #{tpu_custom_call.1} parent=1 // pred_fallthru
      _
    // Predicated region
    $region10: #{tpu_custom_call.1} parent=1 // pred_check
      _
    $region11: #{tpu_custom_call.1} parent=1 // pred_check_branch
      %15 = sbr.rel (0) target = $region13
    $region12: #{tpu_custom_call.1} parent=1 // pred_region
      _
    $region13: #{tpu_custom_call.1} parent=1 // pred_fallthru
      _
    // Predicated region
    $region14: #{tpu_custom_call.1} parent=1 // pred_check
      _
    $region15: #{tpu_custom_call.1} parent=1 // pred_check_branch
      %17 = sbr.rel (0) target = $region17
    $region16: #{tpu_custom_call.1} parent=1 // pred_region
      _
    $region17: #{tpu_custom_call.1} parent=1 // pred_fallthru
      _
    %v19 = vld [vmem:[%s0] sm:$0xff]
    %v20 = vld [vmem:[%s0 + $0x8] sm:$0xff]
    %v21 = vpack.c.bf16 %v20, %v19
    %v22 = vld [vmem:[%s1] sm:$0xff]
    %v23 = vld [vmem:[%s1 + $0x8] sm:$0xff]
    %v24 = vld [vmem:[%s1 + $0x10] sm:$0xff]
    %v25 = vld [vmem:[%s1 + $0x18] sm:$0xff]
    %v30 = vunpack.c.l.b16 %v22
    %v31 = vunpack.c.h.b16 %v22
    %v32 = vunpack.c.l.b16 %v23
    %v33 = vunpack.c.h.b16 %v23
    %v34 = vunpack.c.l.b16 %v24
    %v35 = vunpack.c.h.b16 %v24
    %v36 = vunpack.c.l.b16 %v25
    %v37 = vunpack.c.h.b16 %v25
    %v38 = vpack.c.b16 %v32, %v30
    %v39 = vpack.c.b16 %v33, %v31
    %v40 = vpack.c.b16 %v36, %v34
    %v41 = vpack.c.b16 %v37, %v35
    %vm46 = vcmask 261120
    %v48 = vsel %vm46, %v21, 0
    %50 = vmatprep.subr.bf16.mxu0 %v39
    %51 = vmatpush1.bf16.msra.mxu0 %v38
    %52 = vmatprep.subr.bf16.mxu0 %v41
    %53 = vmatpush1.bf16.msra.mxu0 %v40
    %54 = vmatprep.subr.bf16.mxu0 0
    %55 = vmatpush1.bf16.msra.mxu0 0
    %56 = vmatprep.subr.bf16.mxu0 0
    %57 = vmatpush1.bf16.msra.mxu0 0
    %58 = vmatprep.subr.bf16.mxu0 0
    %59 = vmatpush1.bf16.msra.mxu0 0
    %60 = vmatprep.subr.bf16.mxu0 0
    %61 = vmatpush1.bf16.msra.mxu0 0
    %62 = vmatprep.subr.bf16.mxu0 0
    %63 = vmatpush1.bf16.msra.mxu0 0
    %64 = vmatprep.subr.bf16.mxu0 0
    %65 = vmatpush1.bf16.msra.mxu0 0
    %66 = vmatprep.subr.bf16.mxu0 0
    %67 = vmatpush1.bf16.msra.mxu0 0
    %68 = vmatprep.subr.bf16.mxu0 0
    %69 = vmatpush1.bf16.msra.mxu0 0
    %70 = vmatprep.subr.bf16.mxu0 0
    %71 = vmatpush1.bf16.msra.mxu0 0
    %72 = vmatprep.subr.bf16.mxu0 0
    %73 = vmatpush1.bf16.msra.mxu0 0
    %74 = vmatprep.subr.bf16.mxu0 0
    %75 = vmatpush1.bf16.msra.mxu0 0
    %76 = vmatprep.subr.bf16.mxu0 0
    %77 = vmatpush1.bf16.msra.mxu0 0
    %78 = vmatprep.subr.bf16.mxu0 0
    %79 = vmatpush1.bf16.msra.mxu0 0
    %80 = vmatprep.subr.bf16.mxu0 0
    %81 = vmatpush1.bf16.msra.mxu0 0
    %82 = vmatprep.mubr.bf16.mxu0 0
    %83 = vmatmul.mubr.bf16.gmra.mrb[0].mxu0 %v48
    %v84 = vpop.f32.mrb[0].mxu0
    %v85 = vadd.f32 0.0, %v84
    %v86 = vpop.f32.mrb[0].mxu0
    %v87 = vadd.f32 0.0, %v86
    %v88 = vpop.f32.mrb[0].mxu0
    %v89 = vadd.f32 0.0, %v88
    %v90 = vpop.f32.mrb[0].mxu0
    %v91 = vadd.f32 0.0, %v90
    %92 = vdwg.mxu0
    %v93 = vmul.f32 %v85, 0.25
    %v94 = vmul.f32 %v89, 0.25
    %97 = vrot.lane.b32.xlu0 %v93, 112
    %v98 = vpop.permute.xlu0 %97
    %99 = vrot.lane.b32.xlu0 %v94, 112
    %v100 = vpop.permute.xlu0 %99
    %103 = vrot.lane.b32.xlu0 %v93, 96
    %v104 = vpop.permute.xlu0 %103
    %105 = vrot.lane.b32.xlu0 %v94, 96
    %v106 = vpop.permute.xlu0 %105
    %109 = vrot.lane.b32.xlu0 %v93, 80
    %v110 = vpop.permute.xlu0 %109
    %111 = vrot.lane.b32.xlu0 %v94, 80
    %v112 = vpop.permute.xlu0 %111
    %v115 = vcombine.low %v93, %v104
    %v116 = vcombine.high %v93, %v104
    %v118 = vunpack.c.l.s4 1983009808
    %v119 = vunpack.c.0.s8 %v118
    %v120 = vlaneseq
    %v121 = vshrl.u32 %v120, 7
    %v122 = vsub.s32 %v119, %v121
    %v123 = vrot.slane %v115, %v122
    %v125 = vunpack.c.l.s4 1983009808
    %v126 = vunpack.c.0.s8 %v125
    %v127 = vlaneseq
    %v128 = vshrl.u32 %v127, 7
    %v129 = vsub.s32 %v126, %v128
    %v130 = vrot.slane %v116, %v129
    %v131 = vcombine.low %v98, %v110
    %v132 = vcombine.high %v98, %v110
    %v134 = vunpack.c.l.s4 1983009808
    %v135 = vunpack.c.0.s8 %v134
    %v136 = vlaneseq
    %v137 = vshrl.u32 %v136, 7
    %v138 = vsub.s32 %v135, %v137
    %v139 = vrot.slane %v131, %v138
    %v141 = vunpack.c.l.s4 1983009808
    %v142 = vunpack.c.0.s8 %v141
    %v143 = vlaneseq
    %v144 = vshrl.u32 %v143, 7
    %v145 = vsub.s32 %v142, %v144
    %v146 = vrot.slane %v132, %v145
    %v147 = vcombine.low %v123, %v139
    %v148 = vcombine.high %v123, %v139
    %v150 = vunpack.c.l.s4 1934713408
    %v151 = vunpack.c.0.s8 %v150
    %v152 = vlaneseq
    %v153 = vshrl.u32 %v152, 7
    %v154 = vsub.s32 %v151, %v153
    %v155 = vrot.slane %v147, %v154
    %v157 = vunpack.c.l.s4 1934713408
    %v158 = vunpack.c.0.s8 %v157
    %v159 = vlaneseq
    %v160 = vshrl.u32 %v159, 7
    %v161 = vsub.s32 %v158, %v160
    %v162 = vrot.slane %v148, %v161
    %v163 = vcombine.low %v130, %v146
    %v164 = vcombine.high %v130, %v146
    %v166 = vunpack.c.l.s4 1934713408
    %v167 = vunpack.c.0.s8 %v166
    %v168 = vlaneseq
    %v169 = vshrl.u32 %v168, 7
    %v170 = vsub.s32 %v167, %v169
    %v171 = vrot.slane %v163, %v170
    %v173 = vunpack.c.l.s4 1934713408
    %v174 = vunpack.c.0.s8 %v173
    %v175 = vlaneseq
    %v176 = vshrl.u32 %v175, 7
    %v177 = vsub.s32 %v174, %v176
    %v178 = vrot.slane %v164, %v177
    %v179 = vcombine.high %v155, 0.0
    %v180 = vcombine.high %v162, 0.0
    %v181 = vcombine.high %v171, 0.0
    %v182 = vcombine.high %v178, 0.0
    %v183 = vcombine.low %v94, %v106
    %v184 = vcombine.high %v94, %v106
    %v186 = vunpack.c.l.s4 1983009808
    %v187 = vunpack.c.0.s8 %v186
    %v188 = vlaneseq
    %v189 = vshrl.u32 %v188, 7
    %v190 = vsub.s32 %v187, %v189
    %v191 = vrot.slane %v183, %v190
    %v193 = vunpack.c.l.s4 1983009808
    %v194 = vunpack.c.0.s8 %v193
    %v195 = vlaneseq
    %v196 = vshrl.u32 %v195, 7
    %v197 = vsub.s32 %v194, %v196
    %v198 = vrot.slane %v184, %v197
    %v199 = vcombine.low %v100, %v112
    %v200 = vcombine.high %v100, %v112
    %v202 = vunpack.c.l.s4 1983009808
    %v203 = vunpack.c.0.s8 %v202
    %v204 = vlaneseq
    %v205 = vshrl.u32 %v204, 7
    %v206 = vsub.s32 %v203, %v205
    %v207 = vrot.slane %v199, %v206
    %v209 = vunpack.c.l.s4 1983009808
    %v210 = vunpack.c.0.s8 %v209
    %v211 = vlaneseq
    %v212 = vshrl.u32 %v211, 7
    %v213 = vsub.s32 %v210, %v212
    %v214 = vrot.slane %v200, %v213
    %v215 = vcombine.low %v191, %v207
    %v216 = vcombine.high %v191, %v207
    %v218 = vunpack.c.l.s4 1934713408
    %v219 = vunpack.c.0.s8 %v218
    %v220 = vlaneseq
    %v221 = vshrl.u32 %v220, 7
    %v222 = vsub.s32 %v219, %v221
    %v223 = vrot.slane %v215, %v222
    %v225 = vunpack.c.l.s4 1934713408
    %v226 = vunpack.c.0.s8 %v225
    %v227 = vlaneseq
    %v228 = vshrl.u32 %v227, 7
    %v229 = vsub.s32 %v226, %v228
    %v230 = vrot.slane %v216, %v229
    %v231 = vcombine.low %v198, %v214
    %v232 = vcombine.high %v198, %v214
    %v234 = vunpack.c.l.s4 1934713408
    %v235 = vunpack.c.0.s8 %v234
    %v236 = vlaneseq
    %v237 = vshrl.u32 %v236, 7
    %v238 = vsub.s32 %v235, %v237
    %v239 = vrot.slane %v231, %v238
    %v241 = vunpack.c.l.s4 1934713408
    %v242 = vunpack.c.0.s8 %v241
    %v243 = vlaneseq
    %v244 = vshrl.u32 %v243, 7
    %v245 = vsub.s32 %v242, %v244
    %v246 = vrot.slane %v232, %v245
    %v247 = vcombine.high %v223, 0.0
    %v248 = vcombine.high %v230, 0.0
    %v249 = vcombine.high %v239, 0.0
    %v250 = vcombine.high %v246, 0.0
    %v251 = vcombine.low %v155, %v162
    %v253 = vunpack.c.l.s4 1983009808
    %v254 = vunpack.c.0.s8 %v253
    %v255 = vlaneseq
    %v256 = vshrl.u32 %v255, 7
    %v257 = vsub.s32 %v254, %v256
    %v258 = vrot.slane %v251, %v257
    %v259 = vcombine.low %v179, %v180
    %v261 = vunpack.c.l.s4 1983009808
    %v262 = vunpack.c.0.s8 %v261
    %v263 = vlaneseq
    %v264 = vshrl.u32 %v263, 7
    %v265 = vsub.s32 %v262, %v264
    %v266 = vrot.slane %v259, %v265
    %v267 = vcombine.low %v171, %v178
    %v269 = vunpack.c.l.s4 1983009808
    %v270 = vunpack.c.0.s8 %v269
    %v271 = vlaneseq
    %v272 = vshrl.u32 %v271, 7
    %v273 = vsub.s32 %v270, %v272
    %v274 = vrot.slane %v267, %v273
    %v275 = vcombine.low %v181, %v182
    %v277 = vunpack.c.l.s4 1983009808
    %v278 = vunpack.c.0.s8 %v277
    %v279 = vlaneseq
    %v280 = vshrl.u32 %v279, 7
    %v281 = vsub.s32 %v278, %v280
    %v282 = vrot.slane %v275, %v281
    %v283 = vcombine.low %v258, %v266
    %v284 = vcombine.high %v258, %v266
    %v286 = vunpack.c.l.s4 1934713408
    %v287 = vunpack.c.0.s8 %v286
    %v288 = vlaneseq
    %v289 = vshrl.u32 %v288, 7
    %v290 = vsub.s32 %v287, %v289
    %v291 = vrot.slane %v283, %v290
    %v293 = vunpack.c.l.s4 1934713408
    %v294 = vunpack.c.0.s8 %v293
    %v295 = vlaneseq
    %v296 = vshrl.u32 %v295, 7
    %v297 = vsub.s32 %v294, %v296
    %v298 = vrot.slane %v284, %v297
    %v299 = vcombine.low %v274, %v282
    %v300 = vcombine.high %v274, %v282
    %v302 = vunpack.c.l.s4 1934713408
    %v303 = vunpack.c.0.s8 %v302
    %v304 = vlaneseq
    %v305 = vshrl.u32 %v304, 7
    %v306 = vsub.s32 %v303, %v305
    %v307 = vrot.slane %v299, %v306
    %v309 = vunpack.c.l.s4 1934713408
    %v310 = vunpack.c.0.s8 %v309
    %v311 = vlaneseq
    %v312 = vshrl.u32 %v311, 7
    %v313 = vsub.s32 %v310, %v312
    %v314 = vrot.slane %v300, %v313
    %v315 = vcombine.low %v291, %v307
    %v316 = vcombine.high %v291, %v307
    %v317 = vcombine.low %v298, %v314
    %v318 = vcombine.high %v298, %v314
    %v319 = vcombine.low %v223, %v230
    %v321 = vunpack.c.l.s4 1983009808
    %v322 = vunpack.c.0.s8 %v321
    %v323 = vlaneseq
    %v324 = vshrl.u32 %v323, 7
    %v325 = vsub.s32 %v322, %v324
    %v326 = vrot.slane %v319, %v325
    %v327 = vcombine.low %v247, %v248
    %v329 = vunpack.c.l.s4 1983009808
    %v330 = vunpack.c.0.s8 %v329
    %v331 = vlaneseq
    %v332 = vshrl.u32 %v331, 7
    %v333 = vsub.s32 %v330, %v332
    %v334 = vrot.slane %v327, %v333
    %v335 = vcombine.low %v239, %v246
    %v337 = vunpack.c.l.s4 1983009808
    %v338 = vunpack.c.0.s8 %v337
    %v339 = vlaneseq
    %v340 = vshrl.u32 %v339, 7
    %v341 = vsub.s32 %v338, %v340
    %v342 = vrot.slane %v335, %v341
    %v343 = vcombine.low %v249, %v250
    %v345 = vunpack.c.l.s4 1983009808
    %v346 = vunpack.c.0.s8 %v345
    %v347 = vlaneseq
    %v348 = vshrl.u32 %v347, 7
    %v349 = vsub.s32 %v346, %v348
    %v350 = vrot.slane %v343, %v349
    %v351 = vcombine.low %v326, %v334
    %v352 = vcombine.high %v326, %v334
    %v354 = vunpack.c.l.s4 1934713408
    %v355 = vunpack.c.0.s8 %v354
    %v356 = vlaneseq
    %v357 = vshrl.u32 %v356, 7
    %v358 = vsub.s32 %v355, %v357
    %v359 = vrot.slane %v351, %v358
    %v361 = vunpack.c.l.s4 1934713408
    %v362 = vunpack.c.0.s8 %v361
    %v363 = vlaneseq
    %v364 = vshrl.u32 %v363, 7
    %v365 = vsub.s32 %v362, %v364
    %v366 = vrot.slane %v352, %v365
    %v367 = vcombine.low %v342, %v350
    %v368 = vcombine.high %v342, %v350
    %v370 = vunpack.c.l.s4 1934713408
    %v371 = vunpack.c.0.s8 %v370
    %v372 = vlaneseq
    %v373 = vshrl.u32 %v372, 7
    %v374 = vsub.s32 %v371, %v373
    %v375 = vrot.slane %v367, %v374
    %v377 = vunpack.c.l.s4 1934713408
    %v378 = vunpack.c.0.s8 %v377
    %v379 = vlaneseq
    %v380 = vshrl.u32 %v379, 7
    %v381 = vsub.s32 %v378, %v380
    %v382 = vrot.slane %v368, %v381
    %v383 = vcombine.low %v359, %v375
    %v384 = vcombine.high %v359, %v375
    %v385 = vcombine.low %v366, %v382
    %v386 = vcombine.high %v366, %v382
    %v387 = vpack.c.bf16 %v315, %v315
    %v388 = vpack.c.bf16 %v316, %v316
    %v389 = vpack.c.bf16 %v317, %v317
    %v390 = vpack.c.bf16 %v318, %v318
    %v391 = vpack.c.bf16 %v383, %v383
    %v392 = vpack.c.bf16 %v384, %v384
    %v393 = vpack.c.bf16 %v385, %v385
    %v394 = vpack.c.bf16 %v386, %v386
    %397 = vrot.lane.b32.xlu0 %v85, 112
    %v398 = vpop.permute.xlu0 %397
    %399 = vrot.lane.b32.xlu0 %v89, 112
    %v400 = vpop.permute.xlu0 %399
    %401 = vrot.lane.b32.xlu0 %v85, 96
    %v402 = vpop.permute.xlu0 %401
    %403 = vrot.lane.b32.xlu0 %v89, 96
    %v404 = vpop.permute.xlu0 %403
    %405 = vrot.lane.b32.xlu0 %v85, 80
    %v406 = vpop.permute.xlu0 %405
    %407 = vrot.lane.b32.xlu0 %v89, 80
    %v408 = vpop.permute.xlu0 %407
    %409 = vrot.lane.b32.xlu0 %v85, 64
    %v410 = vpop.permute.xlu0 %409
    %411 = vrot.lane.b32.xlu0 %v89, 64
    %v412 = vpop.permute.xlu0 %411
    %413 = vrot.lane.b32.xlu0 %v398, 64
    %v414 = vpop.permute.xlu0 %413
    %415 = vrot.lane.b32.xlu0 %v400, 64
    %v416 = vpop.permute.xlu0 %415
    %417 = vrot.lane.b32.xlu0 %v402, 64
    %v418 = vpop.permute.xlu0 %417
    %419 = vrot.lane.b32.xlu0 %v404, 64
    %v420 = vpop.permute.xlu0 %419
    %421 = vrot.lane.b32.xlu0 %v406, 64
    %v422 = vpop.permute.xlu0 %421
    %423 = vrot.lane.b32.xlu0 %v408, 64
    %v424 = vpop.permute.xlu0 %423
    %v433 = vcombine.low %v410, %v418
    %v434 = vcombine.high %v410, %v418
    %v436 = vunpack.c.l.s4 1983009808
    %v437 = vunpack.c.0.s8 %v436
    %v438 = vlaneseq
    %v439 = vshrl.u32 %v438, 7
    %v440 = vsub.s32 %v437, %v439
    %v441 = vrot.slane %v433, %v440
    %v443 = vunpack.c.l.s4 1983009808
    %v444 = vunpack.c.0.s8 %v443
    %v445 = vlaneseq
    %v446 = vshrl.u32 %v445, 7
    %v447 = vsub.s32 %v444, %v446
    %v448 = vrot.slane %v434, %v447
    %v449 = vcombine.low %v414, %v422
    %v450 = vcombine.high %v414, %v422
    %v452 = vunpack.c.l.s4 1983009808
    %v453 = vunpack.c.0.s8 %v452
    %v454 = vlaneseq
    %v455 = vshrl.u32 %v454, 7
    %v456 = vsub.s32 %v453, %v455
    %v457 = vrot.slane %v449, %v456
    %v459 = vunpack.c.l.s4 1983009808
    %v460 = vunpack.c.0.s8 %v459
    %v461 = vlaneseq
    %v462 = vshrl.u32 %v461, 7
    %v463 = vsub.s32 %v460, %v462
    %v464 = vrot.slane %v450, %v463
    %v465 = vcombine.low %v441, %v457
    %v466 = vcombine.high %v441, %v457
    %v468 = vunpack.c.l.s4 1934713408
    %v469 = vunpack.c.0.s8 %v468
    %v470 = vlaneseq
    %v471 = vshrl.u32 %v470, 7
    %v472 = vsub.s32 %v469, %v471
    %v473 = vrot.slane %v465, %v472
    %v475 = vunpack.c.l.s4 1934713408
    %v476 = vunpack.c.0.s8 %v475
    %v477 = vlaneseq
    %v478 = vshrl.u32 %v477, 7
    %v479 = vsub.s32 %v476, %v478
    %v480 = vrot.slane %v466, %v479
    %v481 = vcombine.low %v448, %v464
    %v482 = vcombine.high %v448, %v464
    %v484 = vunpack.c.l.s4 1934713408
    %v485 = vunpack.c.0.s8 %v484
    %v486 = vlaneseq
    %v487 = vshrl.u32 %v486, 7
    %v488 = vsub.s32 %v485, %v487
    %v489 = vrot.slane %v481, %v488
    %v491 = vunpack.c.l.s4 1934713408
    %v492 = vunpack.c.0.s8 %v491
    %v493 = vlaneseq
    %v494 = vshrl.u32 %v493, 7
    %v495 = vsub.s32 %v492, %v494
    %v496 = vrot.slane %v482, %v495
    %v497 = vcombine.high %v473, 0.0
    %v498 = vcombine.high %v480, 0.0
    %v499 = vcombine.high %v489, 0.0
    %v500 = vcombine.high %v496, 0.0
    %v501 = vcombine.low %v412, %v420
    %v502 = vcombine.high %v412, %v420
    %v504 = vunpack.c.l.s4 1983009808
    %v505 = vunpack.c.0.s8 %v504
    %v506 = vlaneseq
    %v507 = vshrl.u32 %v506, 7
    %v508 = vsub.s32 %v505, %v507
    %v509 = vrot.slane %v501, %v508
    %v511 = vunpack.c.l.s4 1983009808
    %v512 = vunpack.c.0.s8 %v511
    %v513 = vlaneseq
    %v514 = vshrl.u32 %v513, 7
    %v515 = vsub.s32 %v512, %v514
    %v516 = vrot.slane %v502, %v515
    %v517 = vcombine.low %v416, %v424
    %v518 = vcombine.high %v416, %v424
    %v520 = vunpack.c.l.s4 1983009808
    %v521 = vunpack.c.0.s8 %v520
    %v522 = vlaneseq
    %v523 = vshrl.u32 %v522, 7
    %v524 = vsub.s32 %v521, %v523
    %v525 = vrot.slane %v517, %v524
    %v527 = vunpack.c.l.s4 1983009808
    %v528 = vunpack.c.0.s8 %v527
    %v529 = vlaneseq
    %v530 = vshrl.u32 %v529, 7
    %v531 = vsub.s32 %v528, %v530
    %v532 = vrot.slane %v518, %v531
    %v533 = vcombine.low %v509, %v525
    %v534 = vcombine.high %v509, %v525
    %v536 = vunpack.c.l.s4 1934713408
    %v537 = vunpack.c.0.s8 %v536
    %v538 = vlaneseq
    %v539 = vshrl.u32 %v538, 7
    %v540 = vsub.s32 %v537, %v539
    %v541 = vrot.slane %v533, %v540
    %v543 = vunpack.c.l.s4 1934713408
    %v544 = vunpack.c.0.s8 %v543
    %v545 = vlaneseq
    %v546 = vshrl.u32 %v545, 7
    %v547 = vsub.s32 %v544, %v546
    %v548 = vrot.slane %v534, %v547
    %v549 = vcombine.low %v516, %v532
    %v550 = vcombine.high %v516, %v532
    %v552 = vunpack.c.l.s4 1934713408
    %v553 = vunpack.c.0.s8 %v552
    %v554 = vlaneseq
    %v555 = vshrl.u32 %v554, 7
    %v556 = vsub.s32 %v553, %v555
    %v557 = vrot.slane %v549, %v556
    %v559 = vunpack.c.l.s4 1934713408
    %v560 = vunpack.c.0.s8 %v559
    %v561 = vlaneseq
    %v562 = vshrl.u32 %v561, 7
    %v563 = vsub.s32 %v560, %v562
    %v564 = vrot.slane %v550, %v563
    %v565 = vcombine.high %v541, 0.0
    %v566 = vcombine.high %v548, 0.0
    %v567 = vcombine.high %v557, 0.0
    %v568 = vcombine.high %v564, 0.0
    %v569 = vcombine.low %v473, %v480
    %v571 = vunpack.c.l.s4 1983009808
    %v572 = vunpack.c.0.s8 %v571
    %v573 = vlaneseq
    %v574 = vshrl.u32 %v573, 7
    %v575 = vsub.s32 %v572, %v574
    %v576 = vrot.slane %v569, %v575
    %v577 = vcombine.low %v497, %v498
    %v579 = vunpack.c.l.s4 1983009808
    %v580 = vunpack.c.0.s8 %v579
    %v581 = vlaneseq
    %v582 = vshrl.u32 %v581, 7
    %v583 = vsub.s32 %v580, %v582
    %v584 = vrot.slane %v577, %v583
    %v585 = vcombine.low %v489, %v496
    %v587 = vunpack.c.l.s4 1983009808
    %v588 = vunpack.c.0.s8 %v587
    %v589 = vlaneseq
    %v590 = vshrl.u32 %v589, 7
    %v591 = vsub.s32 %v588, %v590
    %v592 = vrot.slane %v585, %v591
    %v593 = vcombine.low %v499, %v500
    %v595 = vunpack.c.l.s4 1983009808
    %v596 = vunpack.c.0.s8 %v595
    %v597 = vlaneseq
    %v598 = vshrl.u32 %v597, 7
    %v599 = vsub.s32 %v596, %v598
    %v600 = vrot.slane %v593, %v599
    %v601 = vcombine.low %v576, %v584
    %v602 = vcombine.high %v576, %v584
    %v604 = vunpack.c.l.s4 1934713408
    %v605 = vunpack.c.0.s8 %v604
    %v606 = vlaneseq
    %v607 = vshrl.u32 %v606, 7
    %v608 = vsub.s32 %v605, %v607
    %v609 = vrot.slane %v601, %v608
    %v611 = vunpack.c.l.s4 1934713408
    %v612 = vunpack.c.0.s8 %v611
    %v613 = vlaneseq
    %v614 = vshrl.u32 %v613, 7
    %v615 = vsub.s32 %v612, %v614
    %v616 = vrot.slane %v602, %v615
    %v617 = vcombine.low %v592, %v600
    %v618 = vcombine.high %v592, %v600
    %v620 = vunpack.c.l.s4 1934713408
    %v621 = vunpack.c.0.s8 %v620
    %v622 = vlaneseq
    %v623 = vshrl.u32 %v622, 7
    %v624 = vsub.s32 %v621, %v623
    %v625 = vrot.slane %v617, %v624
    %v627 = vunpack.c.l.s4 1934713408
    %v628 = vunpack.c.0.s8 %v627
    %v629 = vlaneseq
    %v630 = vshrl.u32 %v629, 7
    %v631 = vsub.s32 %v628, %v630
    %v632 = vrot.slane %v618, %v631
    %v633 = vcombine.low %v609, %v625
    %v634 = vcombine.high %v609, %v625
    %v635 = vcombine.low %v616, %v632
    %v636 = vcombine.high %v616, %v632
    %v637 = vcombine.low %v541, %v548
    %v639 = vunpack.c.l.s4 1983009808
    %v640 = vunpack.c.0.s8 %v639
    %v641 = vlaneseq
    %v642 = vshrl.u32 %v641, 7
    %v643 = vsub.s32 %v640, %v642
    %v644 = vrot.slane %v637, %v643
    %v645 = vcombine.low %v565, %v566
    %v647 = vunpack.c.l.s4 1983009808
    %v648 = vunpack.c.0.s8 %v647
    %v649 = vlaneseq
    %v650 = vshrl.u32 %v649, 7
    %v651 = vsub.s32 %v648, %v650
    %v652 = vrot.slane %v645, %v651
    %v653 = vcombine.low %v557, %v564
    %v655 = vunpack.c.l.s4 1983009808
    %v656 = vunpack.c.0.s8 %v655
    %v657 = vlaneseq
    %v658 = vshrl.u32 %v657, 7
    %v659 = vsub.s32 %v656, %v658
    %v660 = vrot.slane %v653, %v659
    %v661 = vcombine.low %v567, %v568
    %v663 = vunpack.c.l.s4 1983009808
    %v664 = vunpack.c.0.s8 %v663
    %v665 = vlaneseq
    %v666 = vshrl.u32 %v665, 7
    %v667 = vsub.s32 %v664, %v666
    %v668 = vrot.slane %v661, %v667
    %v669 = vcombine.low %v644, %v652
    %v670 = vcombine.high %v644, %v652
    %v672 = vunpack.c.l.s4 1934713408
    %v673 = vunpack.c.0.s8 %v672
    %v674 = vlaneseq
    %v675 = vshrl.u32 %v674, 7
    %v676 = vsub.s32 %v673, %v675
    %v677 = vrot.slane %v669, %v676
    %v679 = vunpack.c.l.s4 1934713408
    %v680 = vunpack.c.0.s8 %v679
    %v681 = vlaneseq
    %v682 = vshrl.u32 %v681, 7
    %v683 = vsub.s32 %v680, %v682
    %v684 = vrot.slane %v670, %v683
    %v685 = vcombine.low %v660, %v668
    %v686 = vcombine.high %v660, %v668
    %v688 = vunpack.c.l.s4 1934713408
    %v689 = vunpack.c.0.s8 %v688
    %v690 = vlaneseq
    %v691 = vshrl.u32 %v690, 7
    %v692 = vsub.s32 %v689, %v691
    %v693 = vrot.slane %v685, %v692
    %v695 = vunpack.c.l.s4 1934713408
    %v696 = vunpack.c.0.s8 %v695
    %v697 = vlaneseq
    %v698 = vshrl.u32 %v697, 7
    %v699 = vsub.s32 %v696, %v698
    %v700 = vrot.slane %v686, %v699
    %v701 = vcombine.low %v677, %v693
    %v702 = vcombine.high %v677, %v693
    %v703 = vcombine.low %v684, %v700
    %v704 = vcombine.high %v684, %v700
    %v705 = vpack.c.bf16 %v633, %v633
    %v706 = vpack.c.bf16 %v634, %v634
    %v707 = vpack.c.bf16 %v635, %v635
    %v708 = vpack.c.bf16 %v636, %v636
    %v709 = vpack.c.bf16 %v701, %v701
    %v710 = vpack.c.bf16 %v702, %v702
    %v711 = vpack.c.bf16 %v703, %v703
    %v712 = vpack.c.bf16 %v704, %v704
    %715 = vrot.lane.b32.xlu0 %v87, 112
    %v716 = vpop.permute.xlu0 %715
    %717 = vrot.lane.b32.xlu0 %v91, 112
    %v718 = vpop.permute.xlu0 %717
    %721 = vrot.lane.b32.xlu0 %v87, 96
    %v722 = vpop.permute.xlu0 %721
    %723 = vrot.lane.b32.xlu0 %v91, 96
    %v724 = vpop.permute.xlu0 %723
    %727 = vrot.lane.b32.xlu0 %v87, 80
    %v728 = vpop.permute.xlu0 %727
    %729 = vrot.lane.b32.xlu0 %v91, 80
    %v730 = vpop.permute.xlu0 %729
    %v733 = vcombine.low %v87, %v722
    %v734 = vcombine.high %v87, %v722
    %v736 = vunpack.c.l.s4 1983009808
    %v737 = vunpack.c.0.s8 %v736
    %v738 = vlaneseq
    %v739 = vshrl.u32 %v738, 7
    %v740 = vsub.s32 %v737, %v739
    %v741 = vrot.slane %v733, %v740
    %v743 = vunpack.c.l.s4 1983009808
    %v744 = vunpack.c.0.s8 %v743
    %v745 = vlaneseq
    %v746 = vshrl.u32 %v745, 7
    %v747 = vsub.s32 %v744, %v746
    %v748 = vrot.slane %v734, %v747
    %v749 = vcombine.low %v716, %v728
    %v750 = vcombine.high %v716, %v728
    %v752 = vunpack.c.l.s4 1983009808
    %v753 = vunpack.c.0.s8 %v752
    %v754 = vlaneseq
    %v755 = vshrl.u32 %v754, 7
    %v756 = vsub.s32 %v753, %v755
    %v757 = vrot.slane %v749, %v756
    %v759 = vunpack.c.l.s4 1983009808
    %v760 = vunpack.c.0.s8 %v759
    %v761 = vlaneseq
    %v762 = vshrl.u32 %v761, 7
    %v763 = vsub.s32 %v760, %v762
    %v764 = vrot.slane %v750, %v763
    %v765 = vcombine.low %v741, %v757
    %v766 = vcombine.high %v741, %v757
    %v768 = vunpack.c.l.s4 1934713408
    %v769 = vunpack.c.0.s8 %v768
    %v770 = vlaneseq
    %v771 = vshrl.u32 %v770, 7
    %v772 = vsub.s32 %v769, %v771
    %v773 = vrot.slane %v765, %v772
    %v775 = vunpack.c.l.s4 1934713408
    %v776 = vunpack.c.0.s8 %v775
    %v777 = vlaneseq
    %v778 = vshrl.u32 %v777, 7
    %v779 = vsub.s32 %v776, %v778
    %v780 = vrot.slane %v766, %v779
    %v781 = vcombine.low %v748, %v764
    %v782 = vcombine.high %v748, %v764
    %v784 = vunpack.c.l.s4 1934713408
    %v785 = vunpack.c.0.s8 %v784
    %v786 = vlaneseq
    %v787 = vshrl.u32 %v786, 7
    %v788 = vsub.s32 %v785, %v787
    %v789 = vrot.slane %v781, %v788
    %v791 = vunpack.c.l.s4 1934713408
    %v792 = vunpack.c.0.s8 %v791
    %v793 = vlaneseq
    %v794 = vshrl.u32 %v793, 7
    %v795 = vsub.s32 %v792, %v794
    %v796 = vrot.slane %v782, %v795
    %v797 = vcombine.high %v773, 0.0
    %v798 = vcombine.high %v780, 0.0
    %v799 = vcombine.high %v789, 0.0
    %v800 = vcombine.high %v796, 0.0
    %v801 = vcombine.low %v91, %v724
    %v802 = vcombine.high %v91, %v724
    %v804 = vunpack.c.l.s4 1983009808
    %v805 = vunpack.c.0.s8 %v804
    %v806 = vlaneseq
    %v807 = vshrl.u32 %v806, 7
    %v808 = vsub.s32 %v805, %v807
    %v809 = vrot.slane %v801, %v808
    %v811 = vunpack.c.l.s4 1983009808
    %v812 = vunpack.c.0.s8 %v811
    %v813 = vlaneseq
    %v814 = vshrl.u32 %v813, 7
    %v815 = vsub.s32 %v812, %v814
    %v816 = vrot.slane %v802, %v815
    %v817 = vcombine.low %v718, %v730
    %v818 = vcombine.high %v718, %v730
    %v820 = vunpack.c.l.s4 1983009808
    %v821 = vunpack.c.0.s8 %v820
    %v822 = vlaneseq
    %v823 = vshrl.u32 %v822, 7
    %v824 = vsub.s32 %v821, %v823
    %v825 = vrot.slane %v817, %v824
    %v827 = vunpack.c.l.s4 1983009808
    %v828 = vunpack.c.0.s8 %v827
    %v829 = vlaneseq
    %v830 = vshrl.u32 %v829, 7
    %v831 = vsub.s32 %v828, %v830
    %v832 = vrot.slane %v818, %v831
    %v833 = vcombine.low %v809, %v825
    %v834 = vcombine.high %v809, %v825
    %v836 = vunpack.c.l.s4 1934713408
    %v837 = vunpack.c.0.s8 %v836
    %v838 = vlaneseq
    %v839 = vshrl.u32 %v838, 7
    %v840 = vsub.s32 %v837, %v839
    %v841 = vrot.slane %v833, %v840
    %v843 = vunpack.c.l.s4 1934713408
    %v844 = vunpack.c.0.s8 %v843
    %v845 = vlaneseq
    %v846 = vshrl.u32 %v845, 7
    %v847 = vsub.s32 %v844, %v846
    %v848 = vrot.slane %v834, %v847
    %v849 = vcombine.low %v816, %v832
    %v850 = vcombine.high %v816, %v832
    %v852 = vunpack.c.l.s4 1934713408
    %v853 = vunpack.c.0.s8 %v852
    %v854 = vlaneseq
    %v855 = vshrl.u32 %v854, 7
    %v856 = vsub.s32 %v853, %v855
    %v857 = vrot.slane %v849, %v856
    %v859 = vunpack.c.l.s4 1934713408
    %v860 = vunpack.c.0.s8 %v859
    %v861 = vlaneseq
    %v862 = vshrl.u32 %v861, 7
    %v863 = vsub.s32 %v860, %v862
    %v864 = vrot.slane %v850, %v863
    %v865 = vcombine.high %v841, 0.0
    %v866 = vcombine.high %v848, 0.0
    %v867 = vcombine.high %v857, 0.0
    %v868 = vcombine.high %v864, 0.0
    %v869 = vcombine.low %v773, %v780
    %v871 = vunpack.c.l.s4 1983009808
    %v872 = vunpack.c.0.s8 %v871
    %v873 = vlaneseq
    %v874 = vshrl.u32 %v873, 7
    %v875 = vsub.s32 %v872, %v874
    %v876 = vrot.slane %v869, %v875
    %v877 = vcombine.low %v797, %v798
    %v879 = vunpack.c.l.s4 1983009808
    %v880 = vunpack.c.0.s8 %v879
    %v881 = vlaneseq
    %v882 = vshrl.u32 %v881, 7
    %v883 = vsub.s32 %v880, %v882
    %v884 = vrot.slane %v877, %v883
    %v885 = vcombine.low %v789, %v796
    %v887 = vunpack.c.l.s4 1983009808
    %v888 = vunpack.c.0.s8 %v887
    %v889 = vlaneseq
    %v890 = vshrl.u32 %v889, 7
    %v891 = vsub.s32 %v888, %v890
    %v892 = vrot.slane %v885, %v891
    %v893 = vcombine.low %v799, %v800
    %v895 = vunpack.c.l.s4 1983009808
    %v896 = vunpack.c.0.s8 %v895
    %v897 = vlaneseq
    %v898 = vshrl.u32 %v897, 7
    %v899 = vsub.s32 %v896, %v898
    %v900 = vrot.slane %v893, %v899
    %v901 = vcombine.low %v876, %v884
    %v902 = vcombine.high %v876, %v884
    %v904 = vunpack.c.l.s4 1934713408
    %v905 = vunpack.c.0.s8 %v904
    %v906 = vlaneseq
    %v907 = vshrl.u32 %v906, 7
    %v908 = vsub.s32 %v905, %v907
    %v909 = vrot.slane %v901, %v908
    %v911 = vunpack.c.l.s4 1934713408
    %v912 = vunpack.c.0.s8 %v911
    %v913 = vlaneseq
    %v914 = vshrl.u32 %v913, 7
    %v915 = vsub.s32 %v912, %v914
    %v916 = vrot.slane %v902, %v915
    %v917 = vcombine.low %v892, %v900
    %v918 = vcombine.high %v892, %v900
    %v920 = vunpack.c.l.s4 1934713408
    %v921 = vunpack.c.0.s8 %v920
    %v922 = vlaneseq
    %v923 = vshrl.u32 %v922, 7
    %v924 = vsub.s32 %v921, %v923
    %v925 = vrot.slane %v917, %v924
    %v927 = vunpack.c.l.s4 1934713408
    %v928 = vunpack.c.0.s8 %v927
    %v929 = vlaneseq
    %v930 = vshrl.u32 %v929, 7
    %v931 = vsub.s32 %v928, %v930
    %v932 = vrot.slane %v918, %v931
    %v933 = vcombine.low %v909, %v925
    %v934 = vcombine.high %v909, %v925
    %v935 = vcombine.low %v916, %v932
    %v936 = vcombine.high %v916, %v932
    %v937 = vcombine.low %v841, %v848
    %v939 = vunpack.c.l.s4 1983009808
    %v940 = vunpack.c.0.s8 %v939
    %v941 = vlaneseq
    %v942 = vshrl.u32 %v941, 7
    %v943 = vsub.s32 %v940, %v942
    %v944 = vrot.slane %v937, %v943
    %v945 = vcombine.low %v865, %v866
    %v947 = vunpack.c.l.s4 1983009808
    %v948 = vunpack.c.0.s8 %v947
    %v949 = vlaneseq
    %v950 = vshrl.u32 %v949, 7
    %v951 = vsub.s32 %v948, %v950
    %v952 = vrot.slane %v945, %v951
    %v953 = vcombine.low %v857, %v864
    %v955 = vunpack.c.l.s4 1983009808
    %v956 = vunpack.c.0.s8 %v955
    %v957 = vlaneseq
    %v958 = vshrl.u32 %v957, 7
    %v959 = vsub.s32 %v956, %v958
    %v960 = vrot.slane %v953, %v959
    %v961 = vcombine.low %v867, %v868
    %v963 = vunpack.c.l.s4 1983009808
    %v964 = vunpack.c.0.s8 %v963
    %v965 = vlaneseq
    %v966 = vshrl.u32 %v965, 7
    %v967 = vsub.s32 %v964, %v966
    %v968 = vrot.slane %v961, %v967
    %v969 = vcombine.low %v944, %v952
    %v970 = vcombine.high %v944, %v952
    %v972 = vunpack.c.l.s4 1934713408
    %v973 = vunpack.c.0.s8 %v972
    %v974 = vlaneseq
    %v975 = vshrl.u32 %v974, 7
    %v976 = vsub.s32 %v973, %v975
    %v977 = vrot.slane %v969, %v976
    %v979 = vunpack.c.l.s4 1934713408
    %v980 = vunpack.c.0.s8 %v979
    %v981 = vlaneseq
    %v982 = vshrl.u32 %v981, 7
    %v983 = vsub.s32 %v980, %v982
    %v984 = vrot.slane %v970, %v983
    %v985 = vcombine.low %v960, %v968
    %v986 = vcombine.high %v960, %v968
    %v988 = vunpack.c.l.s4 1934713408
    %v989 = vunpack.c.0.s8 %v988
    %v990 = vlaneseq
    %v991 = vshrl.u32 %v990, 7
    %v992 = vsub.s32 %v989, %v991
    %v993 = vrot.slane %v985, %v992
    %v995 = vunpack.c.l.s4 1934713408
    %v996 = vunpack.c.0.s8 %v995
    %v997 = vlaneseq
    %v998 = vshrl.u32 %v997, 7
    %v999 = vsub.s32 %v996, %v998
    %v1000 = vrot.slane %v986, %v999
    %v1001 = vcombine.low %v977, %v993
    %v1002 = vcombine.high %v977, %v993
    %v1003 = vcombine.low %v984, %v1000
    %v1004 = vcombine.high %v984, %v1000
    %v1005 = vpack.c.bf16 %v933, %v933
    %v1006 = vpack.c.bf16 %v934, %v934
    %v1007 = vpack.c.bf16 %v935, %v935
    %v1008 = vpack.c.bf16 %v936, %v936
    %v1009 = vpack.c.bf16 %v1001, %v1001
    %v1010 = vpack.c.bf16 %v1002, %v1002
    %v1011 = vpack.c.bf16 %v1003, %v1003
    %v1012 = vpack.c.bf16 %v1004, %v1004
    %vm1013 = vcmask 130048
    %v1015 = vsel %vm1013, %v387, 0
    %v1018 = vsel %vm1013, %v705, 0
    %1020 = vmatprep.subr.bf16.mxu0 0
    %1021 = vmatpush1.bf16.xpose.msra.mxu0 %v1018
    %1022 = vmatprep.subr.bf16.mxu0 0
    %1023 = vmatpush1.bf16.xpose.msra.mxu0 0
    %1024 = vmatprep.subr.bf16.mxu0 0
    %1025 = vmatpush1.bf16.xpose.msra.mxu0 0
    %1026 = vmatprep.subr.bf16.mxu0 0
    %1027 = vmatpush1.bf16.xpose.msra.mxu0 0
    %1028 = vmatprep.subr.bf16.mxu0 0
    %1029 = vmatpush1.bf16.xpose.msra.mxu0 0
    %1030 = vmatprep.subr.bf16.mxu0 0
    %1031 = vmatpush1.bf16.xpose.msra.mxu0 0
    %1032 = vmatprep.subr.bf16.mxu0 0
    %1033 = vmatpush1.bf16.xpose.msra.mxu0 0
    %1034 = vmatprep.subr.bf16.mxu0 0
    %1035 = vmatpush1.bf16.xpose.msra.mxu0 0
    %1036 = vmatprep.subr.bf16.mxu0 0
    %1037 = vmatpush1.bf16.xpose.msra.mxu0 0
    %1038 = vmatprep.subr.bf16.mxu0 0
    %1039 = vmatpush1.bf16.xpose.msra.mxu0 0
    %1040 = vmatprep.subr.bf16.mxu0 0
    %1041 = vmatpush1.bf16.xpose.msra.mxu0 0
    %1042 = vmatprep.subr.bf16.mxu0 0
    %1043 = vmatpush1.bf16.xpose.msra.mxu0 0
    %1044 = vmatprep.subr.bf16.mxu0 0
    %1045 = vmatpush1.bf16.xpose.msra.mxu0 0
    %1046 = vmatprep.subr.bf16.mxu0 0
    %1047 = vmatpush1.bf16.xpose.msra.mxu0 0
    %1048 = vmatprep.subr.bf16.mxu0 0
    %1049 = vmatpush1.bf16.xpose.msra.mxu0 0
    %1050 = vmatprep.subr.bf16.mxu0 0
    %1051 = vmatpush1.bf16.xpose.msra.mxu0 0
    %1052 = vmatprep.mubr.bf16.mxu0 0
    %1053 = vmatmul.mubr.bf16.gmra.mrb[0].mxu0 %v1015
    %v1054 = vpop.f32.mrb[0].mxu0
    %v1055 = vadd.f32 0.0, %v1054
    %v1056 = vpop.f32.mrb[0].mxu0
    %v1057 = vpop.f32.mrb[0].mxu0
    %v1058 = vpop.f32.mrb[0].mxu0
    %1059 = vdwg.mxu0
    %v1061 = vsel %vm1013, %v388, 0
    %v1064 = vsel %vm1013, %v706, 0
    %1066 = vmatprep.subr.bf16.mxu0 0
    %1067 = vmatpush1.bf16.xpose.msra.mxu0 %v1064
    %1068 = vmatprep.subr.bf16.mxu0 0
    %1069 = vmatpush1.bf16.xpose.msra.mxu0 0
    %1070 = vmatprep.subr.bf16.mxu0 0
    %1071 = vmatpush1.bf16.xpose.msra.mxu0 0
    %1072 = vmatprep.subr.bf16.mxu0 0
    %1073 = vmatpush1.bf16.xpose.msra.mxu0 0
    %1074 = vmatprep.subr.bf16.mxu0 0
    %1075 = vmatpush1.bf16.xpose.msra.mxu0 0
    %1076 = vmatprep.subr.bf16.mxu0 0
    %1077 = vmatpush1.bf16.xpose.msra.mxu0 0
    %1078 = vmatprep.subr.bf16.mxu0 0
    %1079 = vmatpush1.bf16.xpose.msra.mxu0 0
    %1080 = vmatprep.subr.bf16.mxu0 0
    %1081 = vmatpush1.bf16.xpose.msra.mxu0 0
    %1082 = vmatprep.subr.bf16.mxu0 0
    %1083 = vmatpush1.bf16.xpose.msra.mxu0 0
    %1084 = vmatprep.subr.bf16.mxu0 0
    %1085 = vmatpush1.bf16.xpose.msra.mxu0 0
    %1086 = vmatprep.subr.bf16.mxu0 0
    %1087 = vmatpush1.bf16.xpose.msra.mxu0 0
    %1088 = vmatprep.subr.bf16.mxu0 0
    %1089 = vmatpush1.bf16.xpose.msra.mxu0 0
    %1090 = vmatprep.subr.bf16.mxu0 0
    %1091 = vmatpush1.bf16.xpose.msra.mxu0 0
    %1092 = vmatprep.subr.bf16.mxu0 0
    %1093 = vmatpush1.bf16.xpose.msra.mxu0 0
    %1094 = vmatprep.subr.bf16.mxu0 0
    %1095 = vmatpush1.bf16.xpose.msra.mxu0 0
    %1096 = vmatprep.subr.bf16.mxu0 0
    %1097 = vmatpush1.bf16.xpose.msra.mxu0 0
    %1098 = vmatprep.mubr.bf16.mxu0 0
    %1099 = vmatmul.mubr.bf16.gmra.mrb[0].mxu0 %v1061
    %v1100 = vpop.f32.mrb[0].mxu0
    %v1101 = vadd.f32 0.0, %v1100
    %v1102 = vpop.f32.mrb[0].mxu0
    %v1103 = vpop.f32.mrb[0].mxu0
    %v1104 = vpop.f32.mrb[0].mxu0
    %1105 = vdwg.mxu0
    %v1107 = vsel %vm1013, %v389, 0
    %v1110 = vsel %vm1013, %v707, 0
    %1112 = vmatprep.subr.bf16.mxu0 0
    %1113 = vmatpush1.bf16.xpose.msra.mxu0 %v1110
    %1114 = vmatprep.subr.bf16.mxu0 0
    %1115 = vmatpush1.bf16.xpose.msra.mxu0 0
    %1116 = vmatprep.subr.bf16.mxu0 0
    %1117 = vmatpush1.bf16.xpose.msra.mxu0 0
    %1118 = vmatprep.subr.bf16.mxu0 0
    %1119 = vmatpush1.bf16.xpose.msra.mxu0 0
    %1120 = vmatprep.subr.bf16.mxu0 0
    %1121 = vmatpush1.bf16.xpose.msra.mxu0 0
    %1122 = vmatprep.subr.bf16.mxu0 0
    %1123 = vmatpush1.bf16.xpose.msra.mxu0 0
    %1124 = vmatprep.subr.bf16.mxu0 0
    %1125 = vmatpush1.bf16.xpose.msra.mxu0 0
    %1126 = vmatprep.subr.bf16.mxu0 0
    %1127 = vmatpush1.bf16.xpose.msra.mxu0 0
    %1128 = vmatprep.subr.bf16.mxu0 0
    %1129 = vmatpush1.bf16.xpose.msra.mxu0 0
    %1130 = vmatprep.subr.bf16.mxu0 0
    %1131 = vmatpush1.bf16.xpose.msra.mxu0 0
    %1132 = vmatprep.subr.bf16.mxu0 0
    %1133 = vmatpush1.bf16.xpose.msra.mxu0 0
    %1134 = vmatprep.subr.bf16.mxu0 0
    %1135 = vmatpush1.bf16.xpose.msra.mxu0 0
    %1136 = vmatprep.subr.bf16.mxu0 0
    %1137 = vmatpush1.bf16.xpose.msra.mxu0 0
    %1138 = vmatprep.subr.bf16.mxu0 0
    %1139 = vmatpush1.bf16.xpose.msra.mxu0 0
    %1140 = vmatprep.subr.bf16.mxu0 0
    %1141 = vmatpush1.bf16.xpose.msra.mxu0 0
    %1142 = vmatprep.subr.bf16.mxu0 0
    %1143 = vmatpush1.bf16.xpose.msra.mxu0 0
    %1144 = vmatprep.mubr.bf16.mxu0 0
    %1145 = vmatmul.mubr.bf16.gmra.mrb[0].mxu0 %v1107
    %v1146 = vpop.f32.mrb[0].mxu0
    %v1147 = vadd.f32 0.0, %v1146
    %v1148 = vpop.f32.mrb[0].mxu0
    %v1149 = vpop.f32.mrb[0].mxu0
    %v1150 = vpop.f32.mrb[0].mxu0
    %1151 = vdwg.mxu0
    %v1153 = vsel %vm1013, %v390, 0
    %v1156 = vsel %vm1013, %v708, 0
    %1158 = vmatprep.subr.bf16.mxu0 0
    %1159 = vmatpush1.bf16.xpose.msra.mxu0 %v1156
    %1160 = vmatprep.subr.bf16.mxu0 0
    %1161 = vmatpush1.bf16.xpose.msra.mxu0 0
    %1162 = vmatprep.subr.bf16.mxu0 0
    %1163 = vmatpush1.bf16.xpose.msra.mxu0 0
    %1164 = vmatprep.subr.bf16.mxu0 0
    %1165 = vmatpush1.bf16.xpose.msra.mxu0 0
    %1166 = vmatprep.subr.bf16.mxu0 0
    %1167 = vmatpush1.bf16.xpose.msra.mxu0 0
    %1168 = vmatprep.subr.bf16.mxu0 0
    %1169 = vmatpush1.bf16.xpose.msra.mxu0 0
    %1170 = vmatprep.subr.bf16.mxu0 0
    %1171 = vmatpush1.bf16.xpose.msra.mxu0 0
    %1172 = vmatprep.subr.bf16.mxu0 0
    %1173 = vmatpush1.bf16.xpose.msra.mxu0 0
    %1174 = vmatprep.subr.bf16.mxu0 0
    %1175 = vmatpush1.bf16.xpose.msra.mxu0 0
    %1176 = vmatprep.subr.bf16.mxu0 0
    %1177 = vmatpush1.bf16.xpose.msra.mxu0 0
    %1178 = vmatprep.subr.bf16.mxu0 0
    %1179 = vmatpush1.bf16.xpose.msra.mxu0 0
    %1180 = vmatprep.subr.bf16.mxu0 0
    %1181 = vmatpush1.bf16.xpose.msra.mxu0 0
    %1182 = vmatprep.subr.bf16.mxu0 0
    %1183 = vmatpush1.bf16.xpose.msra.mxu0 0
    %1184 = vmatprep.subr.bf16.mxu0 0
    %1185 = vmatpush1.bf16.xpose.msra.mxu0 0
    %1186 = vmatprep.subr.bf16.mxu0 0
    %1187 = vmatpush1.bf16.xpose.msra.mxu0 0
    %1188 = vmatprep.subr.bf16.mxu0 0
    %1189 = vmatpush1.bf16.xpose.msra.mxu0 0
    %1190 = vmatprep.mubr.bf16.mxu0 0
    %1191 = vmatmul.mubr.bf16.gmra.mrb[0].mxu0 %v1153
    %v1192 = vpop.f32.mrb[0].mxu0
    %v1193 = vadd.f32 0.0, %v1192
    %v1194 = vpop.f32.mrb[0].mxu0
    %v1195 = vpop.f32.mrb[0].mxu0
    %v1196 = vpop.f32.mrb[0].mxu0
    %1197 = vdwg.mxu0
    %v1199 = vsel %vm1013, %v391, 0
    %v1202 = vsel %vm1013, %v709, 0
    %1204 = vmatprep.subr.bf16.mxu0 0
    %1205 = vmatpush1.bf16.xpose.msra.mxu0 %v1202
    %1206 = vmatprep.subr.bf16.mxu0 0
    %1207 = vmatpush1.bf16.xpose.msra.mxu0 0
    %1208 = vmatprep.subr.bf16.mxu0 0
    %1209 = vmatpush1.bf16.xpose.msra.mxu0 0
    %1210 = vmatprep.subr.bf16.mxu0 0
    %1211 = vmatpush1.bf16.xpose.msra.mxu0 0
    %1212 = vmatprep.subr.bf16.mxu0 0
    %1213 = vmatpush1.bf16.xpose.msra.mxu0 0
    %1214 = vmatprep.subr.bf16.mxu0 0
    %1215 = vmatpush1.bf16.xpose.msra.mxu0 0
    %1216 = vmatprep.subr.bf16.mxu0 0
    %1217 = vmatpush1.bf16.xpose.msra.mxu0 0
    %1218 = vmatprep.subr.bf16.mxu0 0
    %1219 = vmatpush1.bf16.xpose.msra.mxu0 0
    %1220 = vmatprep.subr.bf16.mxu0 0
    %1221 = vmatpush1.bf16.xpose.msra.mxu0 0
    %1222 = vmatprep.subr.bf16.mxu0 0
    %1223 = vmatpush1.bf16.xpose.msra.mxu0 0
    %1224 = vmatprep.subr.bf16.mxu0 0
    %1225 = vmatpush1.bf16.xpose.msra.mxu0 0
    %1226 = vmatprep.subr.bf16.mxu0 0
    %1227 = vmatpush1.bf16.xpose.msra.mxu0 0
    %1228 = vmatprep.subr.bf16.mxu0 0
    %1229 = vmatpush1.bf16.xpose.msra.mxu0 0
    %1230 = vmatprep.subr.bf16.mxu0 0
    %1231 = vmatpush1.bf16.xpose.msra.mxu0 0
    %1232 = vmatprep.subr.bf16.mxu0 0
    %1233 = vmatpush1.bf16.xpose.msra.mxu0 0
    %1234 = vmatprep.subr.bf16.mxu0 0
    %1235 = vmatpush1.bf16.xpose.msra.mxu0 0
    %1236 = vmatprep.mubr.bf16.mxu0 0
    %1237 = vmatmul.mubr.bf16.gmra.mrb[0].mxu0 %v1199
    %v1238 = vpop.f32.mrb[0].mxu0
    %v1239 = vadd.f32 0.0, %v1238
    %v1240 = vpop.f32.mrb[0].mxu0
    %v1241 = vpop.f32.mrb[0].mxu0
    %v1242 = vpop.f32.mrb[0].mxu0
    %1243 = vdwg.mxu0
    %v1245 = vsel %vm1013, %v392, 0
    %v1248 = vsel %vm1013, %v710, 0
    %1250 = vmatprep.subr.bf16.mxu0 0
    %1251 = vmatpush1.bf16.xpose.msra.mxu0 %v1248
    %1252 = vmatprep.subr.bf16.mxu0 0
    %1253 = vmatpush1.bf16.xpose.msra.mxu0 0
    %1254 = vmatprep.subr.bf16.mxu0 0
    %1255 = vmatpush1.bf16.xpose.msra.mxu0 0
    %1256 = vmatprep.subr.bf16.mxu0 0
    %1257 = vmatpush1.bf16.xpose.msra.mxu0 0
    %1258 = vmatprep.subr.bf16.mxu0 0
    %1259 = vmatpush1.bf16.xpose.msra.mxu0 0
    %1260 = vmatprep.subr.bf16.mxu0 0
    %1261 = vmatpush1.bf16.xpose.msra.mxu0 0
    %1262 = vmatprep.subr.bf16.mxu0 0
    %1263 = vmatpush1.bf16.xpose.msra.mxu0 0
    %1264 = vmatprep.subr.bf16.mxu0 0
    %1265 = vmatpush1.bf16.xpose.msra.mxu0 0
    %1266 = vmatprep.subr.bf16.mxu0 0
    %1267 = vmatpush1.bf16.xpose.msra.mxu0 0
    %1268 = vmatprep.subr.bf16.mxu0 0
    %1269 = vmatpush1.bf16.xpose.msra.mxu0 0
    %1270 = vmatprep.subr.bf16.mxu0 0
    %1271 = vmatpush1.bf16.xpose.msra.mxu0 0
    %1272 = vmatprep.subr.bf16.mxu0 0
    %1273 = vmatpush1.bf16.xpose.msra.mxu0 0
    %1274 = vmatprep.subr.bf16.mxu0 0
    %1275 = vmatpush1.bf16.xpose.msra.mxu0 0
    %1276 = vmatprep.subr.bf16.mxu0 0
    %1277 = vmatpush1.bf16.xpose.msra.mxu0 0
    %1278 = vmatprep.subr.bf16.mxu0 0
    %1279 = vmatpush1.bf16.xpose.msra.mxu0 0
    %1280 = vmatprep.subr.bf16.mxu0 0
    %1281 = vmatpush1.bf16.xpose.msra.mxu0 0
    %1282 = vmatprep.mubr.bf16.mxu0 0
    %1283 = vmatmul.mubr.bf16.gmra.mrb[0].mxu0 %v1245
    %v1284 = vpop.f32.mrb[0].mxu0
    %v1285 = vadd.f32 0.0, %v1284
    %v1286 = vpop.f32.mrb[0].mxu0
    %v1287 = vpop.f32.mrb[0].mxu0
    %v1288 = vpop.f32.mrb[0].mxu0
    %1289 = vdwg.mxu0
    %v1291 = vsel %vm1013, %v393, 0
    %v1294 = vsel %vm1013, %v711, 0
    %1296 = vmatprep.subr.bf16.mxu0 0
    %1297 = vmatpush1.bf16.xpose.msra.mxu0 %v1294
    %1298 = vmatprep.subr.bf16.mxu0 0
    %1299 = vmatpush1.bf16.xpose.msra.mxu0 0
    %1300 = vmatprep.subr.bf16.mxu0 0
    %1301 = vmatpush1.bf16.xpose.msra.mxu0 0
    %1302 = vmatprep.subr.bf16.mxu0 0
    %1303 = vmatpush1.bf16.xpose.msra.mxu0 0
    %1304 = vmatprep.subr.bf16.mxu0 0
    %1305 = vmatpush1.bf16.xpose.msra.mxu0 0
    %1306 = vmatprep.subr.bf16.mxu0 0
    %1307 = vmatpush1.bf16.xpose.msra.mxu0 0
    %1308 = vmatprep.subr.bf16.mxu0 0
    %1309 = vmatpush1.bf16.xpose.msra.mxu0 0
    %1310 = vmatprep.subr.bf16.mxu0 0
    %1311 = vmatpush1.bf16.xpose.msra.mxu0 0
    %1312 = vmatprep.subr.bf16.mxu0 0
    %1313 = vmatpush1.bf16.xpose.msra.mxu0 0
    %1314 = vmatprep.subr.bf16.mxu0 0
    %1315 = vmatpush1.bf16.xpose.msra.mxu0 0
    %1316 = vmatprep.subr.bf16.mxu0 0
    %1317 = vmatpush1.bf16.xpose.msra.mxu0 0
    %1318 = vmatprep.subr.bf16.mxu0 0
    %1319 = vmatpush1.bf16.xpose.msra.mxu0 0
    %1320 = vmatprep.subr.bf16.mxu0 0
    %1321 = vmatpush1.bf16.xpose.msra.mxu0 0
    %1322 = vmatprep.subr.bf16.mxu0 0
    %1323 = vmatpush1.bf16.xpose.msra.mxu0 0
    %1324 = vmatprep.subr.bf16.mxu0 0
    %1325 = vmatpush1.bf16.xpose.msra.mxu0 0
    %1326 = vmatprep.subr.bf16.mxu0 0
    %1327 = vmatpush1.bf16.xpose.msra.mxu0 0
    %1328 = vmatprep.mubr.bf16.mxu0 0
    %1329 = vmatmul.mubr.bf16.gmra.mrb[0].mxu0 %v1291
    %v1330 = vpop.f32.mrb[0].mxu0
    %v1331 = vadd.f32 0.0, %v1330
    %v1332 = vpop.f32.mrb[0].mxu0
    %v1333 = vpop.f32.mrb[0].mxu0
    %v1334 = vpop.f32.mrb[0].mxu0
    %1335 = vdwg.mxu0
    %v1337 = vsel %vm1013, %v394, 0
    %v1340 = vsel %vm1013, %v712, 0
    %1342 = vmatprep.subr.bf16.mxu0 0
    %1343 = vmatpush1.bf16.xpose.msra.mxu0 %v1340
    %1344 = vmatprep.subr.bf16.mxu0 0
    %1345 = vmatpush1.bf16.xpose.msra.mxu0 0
    %1346 = vmatprep.subr.bf16.mxu0 0
    %1347 = vmatpush1.bf16.xpose.msra.mxu0 0
    %1348 = vmatprep.subr.bf16.mxu0 0
    %1349 = vmatpush1.bf16.xpose.msra.mxu0 0
    %1350 = vmatprep.subr.bf16.mxu0 0
    %1351 = vmatpush1.bf16.xpose.msra.mxu0 0
    %1352 = vmatprep.subr.bf16.mxu0 0
    %1353 = vmatpush1.bf16.xpose.msra.mxu0 0
    %1354 = vmatprep.subr.bf16.mxu0 0
    %1355 = vmatpush1.bf16.xpose.msra.mxu0 0
    %1356 = vmatprep.subr.bf16.mxu0 0
    %1357 = vmatpush1.bf16.xpose.msra.mxu0 0
    %1358 = vmatprep.subr.bf16.mxu0 0
    %1359 = vmatpush1.bf16.xpose.msra.mxu0 0
    %1360 = vmatprep.subr.bf16.mxu0 0
    %1361 = vmatpush1.bf16.xpose.msra.mxu0 0
    %1362 = vmatprep.subr.bf16.mxu0 0
    %1363 = vmatpush1.bf16.xpose.msra.mxu0 0
    %1364 = vmatprep.subr.bf16.mxu0 0
    %1365 = vmatpush1.bf16.xpose.msra.mxu0 0
    %1366 = vmatprep.subr.bf16.mxu0 0
    %1367 = vmatpush1.bf16.xpose.msra.mxu0 0
    %1368 = vmatprep.subr.bf16.mxu0 0
    %1369 = vmatpush1.bf16.xpose.msra.mxu0 0
    %1370 = vmatprep.subr.bf16.mxu0 0
    %1371 = vmatpush1.bf16.xpose.msra.mxu0 0
    %1372 = vmatprep.subr.bf16.mxu0 0
    %1373 = vmatpush1.bf16.xpose.msra.mxu0 0
    %1374 = vmatprep.mubr.bf16.mxu0 0
    %1375 = vmatmul.mubr.bf16.gmra.mrb[0].mxu0 %v1337
    %v1376 = vpop.f32.mrb[0].mxu0
    %v1377 = vadd.f32 0.0, %v1376
    %v1378 = vpop.f32.mrb[0].mxu0
    %v1379 = vpop.f32.mrb[0].mxu0
    %v1380 = vpop.f32.mrb[0].mxu0
    %1381 = vdwg.mxu0
    %vm1382 = vcmask 64512
    %v1383 = vsel %vm1382, %v1055, -inf
    %1384 = vmax.xlane.f32.xlu0 %v1383
    %v1385 = vpop.xlane.xlu0 %1384
    %v1386 = vsel %vm1382, %v1101, -inf
    %1387 = vmax.xlane.f32.xlu0 %v1386
    %v1388 = vpop.xlane.xlu0 %1387
    %v1389 = vsel %vm1382, %v1147, -inf
    %1390 = vmax.xlane.f32.xlu0 %v1389
    %v1391 = vpop.xlane.xlu0 %1390
    %v1392 = vsel %vm1382, %v1193, -inf
    %1393 = vmax.xlane.f32.xlu0 %v1392
    %v1394 = vpop.xlane.xlu0 %1393
    %v1395 = vsel %vm1382, %v1239, -inf
    %1396 = vmax.xlane.f32.xlu0 %v1395
    %v1397 = vpop.xlane.xlu0 %1396
    %v1398 = vsel %vm1382, %v1285, -inf
    %1399 = vmax.xlane.f32.xlu0 %v1398
    %v1400 = vpop.xlane.xlu0 %1399
    %v1401 = vsel %vm1382, %v1331, -inf
    %1402 = vmax.xlane.f32.xlu0 %v1401
    %v1403 = vpop.xlane.xlu0 %1402
    %v1404 = vsel %vm1382, %v1377, -inf
    %1405 = vmax.xlane.f32.xlu0 %v1404
    %v1406 = vpop.xlane.xlu0 %1405
    %v1407 = vsub.f32 %v1055, %v1385
    %v1408 = vsub.f32 %v1101, %v1388
    %v1409 = vsub.f32 %v1147, %v1391
    %v1410 = vsub.f32 %v1193, %v1394
    %v1411 = vsub.f32 %v1239, %v1397
    %v1412 = vsub.f32 %v1285, %v1400
    %v1413 = vsub.f32 %v1331, %v1403
    %v1414 = vsub.f32 %v1377, %v1406
    %v1415 = vmul.f32 %v1407, 1.442695
    %v1416 = vpow.pop %v1415
    %v1417 = vmul.f32 %v1408, 1.442695
    %v1418 = vpow.pop %v1417
    %v1419 = vmul.f32 %v1409, 1.442695
    %v1420 = vpow.pop %v1419
    %v1421 = vmul.f32 %v1410, 1.442695
    %v1422 = vpow.pop %v1421
    %v1423 = vmul.f32 %v1411, 1.442695
    %v1424 = vpow.pop %v1423
    %v1425 = vmul.f32 %v1412, 1.442695
    %v1426 = vpow.pop %v1425
    %v1427 = vmul.f32 %v1413, 1.442695
    %v1428 = vpow.pop %v1427
    %v1429 = vmul.f32 %v1414, 1.442695
    %v1430 = vpow.pop %v1429
    %v1431 = vsel %vm1382, %v1416, 0.0
    %1432 = vadd.xlane.f32.xlu0 %v1431
    %v1433 = vpop.xlane.xlu0 %1432
    %v1434 = vsel %vm1382, %v1418, 0.0
    %1435 = vadd.xlane.f32.xlu0 %v1434
    %v1436 = vpop.xlane.xlu0 %1435
    %v1437 = vsel %vm1382, %v1420, 0.0
    %1438 = vadd.xlane.f32.xlu0 %v1437
    %v1439 = vpop.xlane.xlu0 %1438
    %v1440 = vsel %vm1382, %v1422, 0.0
    %1441 = vadd.xlane.f32.xlu0 %v1440
    %v1442 = vpop.xlane.xlu0 %1441
    %v1443 = vsel %vm1382, %v1424, 0.0
    %1444 = vadd.xlane.f32.xlu0 %v1443
    %v1445 = vpop.xlane.xlu0 %1444
    %v1446 = vsel %vm1382, %v1426, 0.0
    %1447 = vadd.xlane.f32.xlu0 %v1446
    %v1448 = vpop.xlane.xlu0 %1447
    %v1449 = vsel %vm1382, %v1428, 0.0
    %1450 = vadd.xlane.f32.xlu0 %v1449
    %v1451 = vpop.xlane.xlu0 %1450
    %v1452 = vsel %vm1382, %v1430, 0.0
    %1453 = vadd.xlane.f32.xlu0 %v1452
    %v1454 = vpop.xlane.xlu0 %1453
    %v1455 = vpack.c.bf16 %v1416, %v1416
    %v1456 = vpack.c.bf16 %v1418, %v1418
    %v1457 = vpack.c.bf16 %v1420, %v1420
    %v1458 = vpack.c.bf16 %v1422, %v1422
    %v1459 = vpack.c.bf16 %v1424, %v1424
    %v1460 = vpack.c.bf16 %v1426, %v1426
    %v1461 = vpack.c.bf16 %v1428, %v1428
    %v1462 = vpack.c.bf16 %v1430, %v1430
    %v1464 = vsel %vm1382, %v1455, 0
    %vm1466 = vcmask 1043456
    %v1468 = vsel %vm1466, %v1005, 0
    %1470 = vmatprep.subr.bf16.mxu0 0
    %1471 = vmatpush1.bf16.msra.mxu0 %v1468
    %1472 = vmatprep.subr.bf16.mxu0 0
    %1473 = vmatpush1.bf16.msra.mxu0 0
    %1474 = vmatprep.subr.bf16.mxu0 0
    %1475 = vmatpush1.bf16.msra.mxu0 0
    %1476 = vmatprep.subr.bf16.mxu0 0
    %1477 = vmatpush1.bf16.msra.mxu0 0
    %1478 = vmatprep.subr.bf16.mxu0 0
    %1479 = vmatpush1.bf16.msra.mxu0 0
    %1480 = vmatprep.subr.bf16.mxu0 0
    %1481 = vmatpush1.bf16.msra.mxu0 0
    %1482 = vmatprep.subr.bf16.mxu0 0
    %1483 = vmatpush1.bf16.msra.mxu0 0
    %1484 = vmatprep.subr.bf16.mxu0 0
    %1485 = vmatpush1.bf16.msra.mxu0 0
    %1486 = vmatprep.subr.bf16.mxu0 0
    %1487 = vmatpush1.bf16.msra.mxu0 0
    %1488 = vmatprep.subr.bf16.mxu0 0
    %1489 = vmatpush1.bf16.msra.mxu0 0
    %1490 = vmatprep.subr.bf16.mxu0 0
    %1491 = vmatpush1.bf16.msra.mxu0 0
    %1492 = vmatprep.subr.bf16.mxu0 0
    %1493 = vmatpush1.bf16.msra.mxu0 0
    %1494 = vmatprep.subr.bf16.mxu0 0
    %1495 = vmatpush1.bf16.msra.mxu0 0
    %1496 = vmatprep.subr.bf16.mxu0 0
    %1497 = vmatpush1.bf16.msra.mxu0 0
    %1498 = vmatprep.subr.bf16.mxu0 0
    %1499 = vmatpush1.bf16.msra.mxu0 0
    %1500 = vmatprep.subr.bf16.mxu0 0
    %1501 = vmatpush1.bf16.msra.mxu0 0
    %1502 = vmatprep.mubr.bf16.mxu0 0
    %1503 = vmatmul.mubr.bf16.gmra.mrb[0].mxu0 %v1464
    %v1504 = vpop.f32.mrb[0].mxu0
    %v1505 = vadd.f32 0.0, %v1504
    %v1506 = vpop.f32.mrb[0].mxu0
    %v1507 = vpop.f32.mrb[0].mxu0
    %v1508 = vpop.f32.mrb[0].mxu0
    %1509 = vdwg.mxu0
    %v1511 = vsel %vm1382, %v1456, 0
    %v1514 = vsel %vm1466, %v1006, 0
    %1516 = vmatprep.subr.bf16.mxu0 0
    %1517 = vmatpush1.bf16.msra.mxu0 %v1514
    %1518 = vmatprep.subr.bf16.mxu0 0
    %1519 = vmatpush1.bf16.msra.mxu0 0
    %1520 = vmatprep.subr.bf16.mxu0 0
    %1521 = vmatpush1.bf16.msra.mxu0 0
    %1522 = vmatprep.subr.bf16.mxu0 0
    %1523 = vmatpush1.bf16.msra.mxu0 0
    %1524 = vmatprep.subr.bf16.mxu0 0
    %1525 = vmatpush1.bf16.msra.mxu0 0
    %1526 = vmatprep.subr.bf16.mxu0 0
    %1527 = vmatpush1.bf16.msra.mxu0 0
    %1528 = vmatprep.subr.bf16.mxu0 0
    %1529 = vmatpush1.bf16.msra.mxu0 0
    %1530 = vmatprep.subr.bf16.mxu0 0
    %1531 = vmatpush1.bf16.msra.mxu0 0
    %1532 = vmatprep.subr.bf16.mxu0 0
    %1533 = vmatpush1.bf16.msra.mxu0 0
    %1534 = vmatprep.subr.bf16.mxu0 0
    %1535 = vmatpush1.bf16.msra.mxu0 0
    %1536 = vmatprep.subr.bf16.mxu0 0
    %1537 = vmatpush1.bf16.msra.mxu0 0
    %1538 = vmatprep.subr.bf16.mxu0 0
    %1539 = vmatpush1.bf16.msra.mxu0 0
    %1540 = vmatprep.subr.bf16.mxu0 0
    %1541 = vmatpush1.bf16.msra.mxu0 0
    %1542 = vmatprep.subr.bf16.mxu0 0
    %1543 = vmatpush1.bf16.msra.mxu0 0
    %1544 = vmatprep.subr.bf16.mxu0 0
    %1545 = vmatpush1.bf16.msra.mxu0 0
    %1546 = vmatprep.subr.bf16.mxu0 0
    %1547 = vmatpush1.bf16.msra.mxu0 0
    %1548 = vmatprep.mubr.bf16.mxu0 0
    %1549 = vmatmul.mubr.bf16.gmra.mrb[0].mxu0 %v1511
    %v1550 = vpop.f32.mrb[0].mxu0
    %v1551 = vadd.f32 0.0, %v1550
    %v1552 = vpop.f32.mrb[0].mxu0
    %v1553 = vpop.f32.mrb[0].mxu0
    %v1554 = vpop.f32.mrb[0].mxu0
    %1555 = vdwg.mxu0
    %v1557 = vsel %vm1382, %v1457, 0
    %v1560 = vsel %vm1466, %v1007, 0
    %1562 = vmatprep.subr.bf16.mxu0 0
    %1563 = vmatpush1.bf16.msra.mxu0 %v1560
    %1564 = vmatprep.subr.bf16.mxu0 0
    %1565 = vmatpush1.bf16.msra.mxu0 0
    %1566 = vmatprep.subr.bf16.mxu0 0
    %1567 = vmatpush1.bf16.msra.mxu0 0
    %1568 = vmatprep.subr.bf16.mxu0 0
    %1569 = vmatpush1.bf16.msra.mxu0 0
    %1570 = vmatprep.subr.bf16.mxu0 0
    %1571 = vmatpush1.bf16.msra.mxu0 0
    %1572 = vmatprep.subr.bf16.mxu0 0
    %1573 = vmatpush1.bf16.msra.mxu0 0
    %1574 = vmatprep.subr.bf16.mxu0 0
    %1575 = vmatpush1.bf16.msra.mxu0 0
    %1576 = vmatprep.subr.bf16.mxu0 0
    %1577 = vmatpush1.bf16.msra.mxu0 0
    %1578 = vmatprep.subr.bf16.mxu0 0
    %1579 = vmatpush1.bf16.msra.mxu0 0
    %1580 = vmatprep.subr.bf16.mxu0 0
    %1581 = vmatpush1.bf16.msra.mxu0 0
    %1582 = vmatprep.subr.bf16.mxu0 0
    %1583 = vmatpush1.bf16.msra.mxu0 0
    %1584 = vmatprep.subr.bf16.mxu0 0
    %1585 = vmatpush1.bf16.msra.mxu0 0
    %1586 = vmatprep.subr.bf16.mxu0 0
    %1587 = vmatpush1.bf16.msra.mxu0 0
    %1588 = vmatprep.subr.bf16.mxu0 0
    %1589 = vmatpush1.bf16.msra.mxu0 0
    %1590 = vmatprep.subr.bf16.mxu0 0
    %1591 = vmatpush1.bf16.msra.mxu0 0
    %1592 = vmatprep.subr.bf16.mxu0 0
    %1593 = vmatpush1.bf16.msra.mxu0 0
    %1594 = vmatprep.mubr.bf16.mxu0 0
    %1595 = vmatmul.mubr.bf16.gmra.mrb[0].mxu0 %v1557
    %v1596 = vpop.f32.mrb[0].mxu0
    %v1597 = vadd.f32 0.0, %v1596
    %v1598 = vpop.f32.mrb[0].mxu0
    %v1599 = vpop.f32.mrb[0].mxu0
    %v1600 = vpop.f32.mrb[0].mxu0
    %1601 = vdwg.mxu0
    %v1603 = vsel %vm1382, %v1458, 0
    %v1606 = vsel %vm1466, %v1008, 0
    %1608 = vmatprep.subr.bf16.mxu0 0
    %1609 = vmatpush1.bf16.msra.mxu0 %v1606
    %1610 = vmatprep.subr.bf16.mxu0 0
    %1611 = vmatpush1.bf16.msra.mxu0 0
    %1612 = vmatprep.subr.bf16.mxu0 0
    %1613 = vmatpush1.bf16.msra.mxu0 0
    %1614 = vmatprep.subr.bf16.mxu0 0
    %1615 = vmatpush1.bf16.msra.mxu0 0
    %1616 = vmatprep.subr.bf16.mxu0 0
    %1617 = vmatpush1.bf16.msra.mxu0 0
    %1618 = vmatprep.subr.bf16.mxu0 0
    %1619 = vmatpush1.bf16.msra.mxu0 0
    %1620 = vmatprep.subr.bf16.mxu0 0
    %1621 = vmatpush1.bf16.msra.mxu0 0
    %1622 = vmatprep.subr.bf16.mxu0 0
    %1623 = vmatpush1.bf16.msra.mxu0 0
    %1624 = vmatprep.subr.bf16.mxu0 0
    %1625 = vmatpush1.bf16.msra.mxu0 0
    %1626 = vmatprep.subr.bf16.mxu0 0
    %1627 = vmatpush1.bf16.msra.mxu0 0
    %1628 = vmatprep.subr.bf16.mxu0 0
    %1629 = vmatpush1.bf16.msra.mxu0 0
    %1630 = vmatprep.subr.bf16.mxu0 0
    %1631 = vmatpush1.bf16.msra.mxu0 0
    %1632 = vmatprep.subr.bf16.mxu0 0
    %1633 = vmatpush1.bf16.msra.mxu0 0
    %1634 = vmatprep.subr.bf16.mxu0 0
    %1635 = vmatpush1.bf16.msra.mxu0 0
    %1636 = vmatprep.subr.bf16.mxu0 0
    %1637 = vmatpush1.bf16.msra.mxu0 0
    %1638 = vmatprep.subr.bf16.mxu0 0
    %1639 = vmatpush1.bf16.msra.mxu0 0
    %1640 = vmatprep.mubr.bf16.mxu0 0
    %1641 = vmatmul.mubr.bf16.gmra.mrb[0].mxu0 %v1603
    %v1642 = vpop.f32.mrb[0].mxu0
    %v1643 = vadd.f32 0.0, %v1642
    %v1644 = vpop.f32.mrb[0].mxu0
    %v1645 = vpop.f32.mrb[0].mxu0
    %v1646 = vpop.f32.mrb[0].mxu0
    %1647 = vdwg.mxu0
    %v1649 = vsel %vm1382, %v1459, 0
    %v1652 = vsel %vm1466, %v1009, 0
    %1654 = vmatprep.subr.bf16.mxu0 0
    %1655 = vmatpush1.bf16.msra.mxu0 %v1652
    %1656 = vmatprep.subr.bf16.mxu0 0
    %1657 = vmatpush1.bf16.msra.mxu0 0
    %1658 = vmatprep.subr.bf16.mxu0 0
    %1659 = vmatpush1.bf16.msra.mxu0 0
    %1660 = vmatprep.subr.bf16.mxu0 0
    %1661 = vmatpush1.bf16.msra.mxu0 0
    %1662 = vmatprep.subr.bf16.mxu0 0
    %1663 = vmatpush1.bf16.msra.mxu0 0
    %1664 = vmatprep.subr.bf16.mxu0 0
    %1665 = vmatpush1.bf16.msra.mxu0 0
    %1666 = vmatprep.subr.bf16.mxu0 0
    %1667 = vmatpush1.bf16.msra.mxu0 0
    %1668 = vmatprep.subr.bf16.mxu0 0
    %1669 = vmatpush1.bf16.msra.mxu0 0
    %1670 = vmatprep.subr.bf16.mxu0 0
    %1671 = vmatpush1.bf16.msra.mxu0 0
    %1672 = vmatprep.subr.bf16.mxu0 0
    %1673 = vmatpush1.bf16.msra.mxu0 0
    %1674 = vmatprep.subr.bf16.mxu0 0
    %1675 = vmatpush1.bf16.msra.mxu0 0
    %1676 = vmatprep.subr.bf16.mxu0 0
    %1677 = vmatpush1.bf16.msra.mxu0 0
    %1678 = vmatprep.subr.bf16.mxu0 0
    %1679 = vmatpush1.bf16.msra.mxu0 0
    %1680 = vmatprep.subr.bf16.mxu0 0
    %1681 = vmatpush1.bf16.msra.mxu0 0
    %1682 = vmatprep.subr.bf16.mxu0 0
    %1683 = vmatpush1.bf16.msra.mxu0 0
    %1684 = vmatprep.subr.bf16.mxu0 0
    %1685 = vmatpush1.bf16.msra.mxu0 0
    %1686 = vmatprep.mubr.bf16.mxu0 0
    %1687 = vmatmul.mubr.bf16.gmra.mrb[0].mxu0 %v1649
    %v1688 = vpop.f32.mrb[0].mxu0
    %v1689 = vadd.f32 0.0, %v1688
    %v1690 = vpop.f32.mrb[0].mxu0
    %v1691 = vpop.f32.mrb[0].mxu0
    %v1692 = vpop.f32.mrb[0].mxu0
    %1693 = vdwg.mxu0
    %v1695 = vsel %vm1382, %v1460, 0
    %v1698 = vsel %vm1466, %v1010, 0
    %1700 = vmatprep.subr.bf16.mxu0 0
    %1701 = vmatpush1.bf16.msra.mxu0 %v1698
    %1702 = vmatprep.subr.bf16.mxu0 0
    %1703 = vmatpush1.bf16.msra.mxu0 0
    %1704 = vmatprep.subr.bf16.mxu0 0
    %1705 = vmatpush1.bf16.msra.mxu0 0
    %1706 = vmatprep.subr.bf16.mxu0 0
    %1707 = vmatpush1.bf16.msra.mxu0 0
    %1708 = vmatprep.subr.bf16.mxu0 0
    %1709 = vmatpush1.bf16.msra.mxu0 0
    %1710 = vmatprep.subr.bf16.mxu0 0
    %1711 = vmatpush1.bf16.msra.mxu0 0
    %1712 = vmatprep.subr.bf16.mxu0 0
    %1713 = vmatpush1.bf16.msra.mxu0 0
    %1714 = vmatprep.subr.bf16.mxu0 0
    %1715 = vmatpush1.bf16.msra.mxu0 0
    %1716 = vmatprep.subr.bf16.mxu0 0
    %1717 = vmatpush1.bf16.msra.mxu0 0
    %1718 = vmatprep.subr.bf16.mxu0 0
    %1719 = vmatpush1.bf16.msra.mxu0 0
    %1720 = vmatprep.subr.bf16.mxu0 0
    %1721 = vmatpush1.bf16.msra.mxu0 0
    %1722 = vmatprep.subr.bf16.mxu0 0
    %1723 = vmatpush1.bf16.msra.mxu0 0
    %1724 = vmatprep.subr.bf16.mxu0 0
    %1725 = vmatpush1.bf16.msra.mxu0 0
    %1726 = vmatprep.subr.bf16.mxu0 0
    %1727 = vmatpush1.bf16.msra.mxu0 0
    %1728 = vmatprep.subr.bf16.mxu0 0
    %1729 = vmatpush1.bf16.msra.mxu0 0
    %1730 = vmatprep.subr.bf16.mxu0 0
    %1731 = vmatpush1.bf16.msra.mxu0 0
    %1732 = vmatprep.mubr.bf16.mxu0 0
    %1733 = vmatmul.mubr.bf16.gmra.mrb[0].mxu0 %v1695
    %v1734 = vpop.f32.mrb[0].mxu0
    %v1735 = vadd.f32 0.0, %v1734
    %v1736 = vpop.f32.mrb[0].mxu0
    %v1737 = vpop.f32.mrb[0].mxu0
    %v1738 = vpop.f32.mrb[0].mxu0
    %1739 = vdwg.mxu0
    %v1741 = vsel %vm1382, %v1461, 0
    %v1744 = vsel %vm1466, %v1011, 0
    %1746 = vmatprep.subr.bf16.mxu0 0
    %1747 = vmatpush1.bf16.msra.mxu0 %v1744
    %1748 = vmatprep.subr.bf16.mxu0 0
    %1749 = vmatpush1.bf16.msra.mxu0 0
    %1750 = vmatprep.subr.bf16.mxu0 0
    %1751 = vmatpush1.bf16.msra.mxu0 0
    %1752 = vmatprep.subr.bf16.mxu0 0
    %1753 = vmatpush1.bf16.msra.mxu0 0
    %1754 = vmatprep.subr.bf16.mxu0 0
    %1755 = vmatpush1.bf16.msra.mxu0 0
    %1756 = vmatprep.subr.bf16.mxu0 0
    %1757 = vmatpush1.bf16.msra.mxu0 0
    %1758 = vmatprep.subr.bf16.mxu0 0
    %1759 = vmatpush1.bf16.msra.mxu0 0
    %1760 = vmatprep.subr.bf16.mxu0 0
    %1761 = vmatpush1.bf16.msra.mxu0 0
    %1762 = vmatprep.subr.bf16.mxu0 0
    %1763 = vmatpush1.bf16.msra.mxu0 0
    %1764 = vmatprep.subr.bf16.mxu0 0
    %1765 = vmatpush1.bf16.msra.mxu0 0
    %1766 = vmatprep.subr.bf16.mxu0 0
    %1767 = vmatpush1.bf16.msra.mxu0 0
    %1768 = vmatprep.subr.bf16.mxu0 0
    %1769 = vmatpush1.bf16.msra.mxu0 0
    %1770 = vmatprep.subr.bf16.mxu0 0
    %1771 = vmatpush1.bf16.msra.mxu0 0
    %1772 = vmatprep.subr.bf16.mxu0 0
    %1773 = vmatpush1.bf16.msra.mxu0 0
    %1774 = vmatprep.subr.bf16.mxu0 0
    %1775 = vmatpush1.bf16.msra.mxu0 0
    %1776 = vmatprep.subr.bf16.mxu0 0
    %1777 = vmatpush1.bf16.msra.mxu0 0
    %1778 = vmatprep.mubr.bf16.mxu0 0
    %1779 = vmatmul.mubr.bf16.gmra.mrb[0].mxu0 %v1741
    %v1780 = vpop.f32.mrb[0].mxu0
    %v1781 = vadd.f32 0.0, %v1780
    %v1782 = vpop.f32.mrb[0].mxu0
    %v1783 = vpop.f32.mrb[0].mxu0
    %v1784 = vpop.f32.mrb[0].mxu0
    %1785 = vdwg.mxu0
    %v1787 = vsel %vm1382, %v1462, 0
    %v1790 = vsel %vm1466, %v1012, 0
    %1792 = vmatprep.subr.bf16.mxu0 0
    %1793 = vmatpush1.bf16.msra.mxu0 %v1790
    %1794 = vmatprep.subr.bf16.mxu0 0
    %1795 = vmatpush1.bf16.msra.mxu0 0
    %1796 = vmatprep.subr.bf16.mxu0 0
    %1797 = vmatpush1.bf16.msra.mxu0 0
    %1798 = vmatprep.subr.bf16.mxu0 0
    %1799 = vmatpush1.bf16.msra.mxu0 0
    %1800 = vmatprep.subr.bf16.mxu0 0
    %1801 = vmatpush1.bf16.msra.mxu0 0
    %1802 = vmatprep.subr.bf16.mxu0 0
    %1803 = vmatpush1.bf16.msra.mxu0 0
    %1804 = vmatprep.subr.bf16.mxu0 0
    %1805 = vmatpush1.bf16.msra.mxu0 0
    %1806 = vmatprep.subr.bf16.mxu0 0
    %1807 = vmatpush1.bf16.msra.mxu0 0
    %1808 = vmatprep.subr.bf16.mxu0 0
    %1809 = vmatpush1.bf16.msra.mxu0 0
    %1810 = vmatprep.subr.bf16.mxu0 0
    %1811 = vmatpush1.bf16.msra.mxu0 0
    %1812 = vmatprep.subr.bf16.mxu0 0
    %1813 = vmatpush1.bf16.msra.mxu0 0
    %1814 = vmatprep.subr.bf16.mxu0 0
    %1815 = vmatpush1.bf16.msra.mxu0 0
    %1816 = vmatprep.subr.bf16.mxu0 0
    %1817 = vmatpush1.bf16.msra.mxu0 0
    %1818 = vmatprep.subr.bf16.mxu0 0
    %1819 = vmatpush1.bf16.msra.mxu0 0
    %1820 = vmatprep.subr.bf16.mxu0 0
    %1821 = vmatpush1.bf16.msra.mxu0 0
    %1822 = vmatprep.subr.bf16.mxu0 0
    %1823 = vmatpush1.bf16.msra.mxu0 0
    %1824 = vmatprep.mubr.bf16.mxu0 0
    %1825 = vmatmul.mubr.bf16.gmra.mrb[0].mxu0 %v1787
    %v1826 = vpop.f32.mrb[0].mxu0
    %v1827 = vadd.f32 0.0, %v1826
    %v1828 = vpop.f32.mrb[0].mxu0
    %v1829 = vpop.f32.mrb[0].mxu0
    %v1830 = vpop.f32.mrb[0].mxu0
    %1831 = vdwg.mxu0
    %v1832 = vrcp.pop %v1433
    %v1833 = vrcp.pop %v1436
    %v1834 = vrcp.pop %v1439
    %v1835 = vrcp.pop %v1442
    %v1836 = vrcp.pop %v1445
    %v1837 = vrcp.pop %v1448
    %v1838 = vrcp.pop %v1451
    %v1839 = vrcp.pop %v1454
    %v1840 = vmul.f32 %v1505, %v1832
    %v1841 = vmul.f32 %v1551, %v1833
    %v1842 = vmul.f32 %v1597, %v1834
    %v1843 = vmul.f32 %v1643, %v1835
    %v1844 = vmul.f32 %v1689, %v1836
    %v1845 = vmul.f32 %v1735, %v1837
    %v1846 = vmul.f32 %v1781, %v1838
    %v1847 = vmul.f32 %v1827, %v1839
    %v1848 = vcombine.low %v1840, %v1842
    %v1849 = vcombine.high %v1840, %v1842
    %v1851 = vunpack.c.l.s4 1983009808
    %v1852 = vunpack.c.0.s8 %v1851
    %v1853 = vlaneseq
    %v1854 = vshrl.u32 %v1853, 7
    %v1855 = vsub.s32 %v1852, %v1854
    %v1856 = vrot.slane %v1848, %v1855
    %v1858 = vunpack.c.l.s4 1983009808
    %v1859 = vunpack.c.0.s8 %v1858
    %v1860 = vlaneseq
    %v1861 = vshrl.u32 %v1860, 7
    %v1862 = vsub.s32 %v1859, %v1861
    %v1863 = vrot.slane %v1849, %v1862
    %v1864 = vcombine.low %v1841, %v1843
    %v1865 = vcombine.high %v1841, %v1843
    %v1867 = vunpack.c.l.s4 1983009808
    %v1868 = vunpack.c.0.s8 %v1867
    %v1869 = vlaneseq
    %v1870 = vshrl.u32 %v1869, 7
    %v1871 = vsub.s32 %v1868, %v1870
    %v1872 = vrot.slane %v1864, %v1871
    %v1874 = vunpack.c.l.s4 1983009808
    %v1875 = vunpack.c.0.s8 %v1874
    %v1876 = vlaneseq
    %v1877 = vshrl.u32 %v1876, 7
    %v1878 = vsub.s32 %v1875, %v1877
    %v1879 = vrot.slane %v1865, %v1878
    %v1880 = vcombine.low %v1856, %v1872
    %v1881 = vcombine.high %v1856, %v1872
    %v1883 = vunpack.c.l.s4 1934713408
    %v1884 = vunpack.c.0.s8 %v1883
    %v1885 = vlaneseq
    %v1886 = vshrl.u32 %v1885, 7
    %v1887 = vsub.s32 %v1884, %v1886
    %v1888 = vrot.slane %v1880, %v1887
    %v1890 = vunpack.c.l.s4 1934713408
    %v1891 = vunpack.c.0.s8 %v1890
    %v1892 = vlaneseq
    %v1893 = vshrl.u32 %v1892, 7
    %v1894 = vsub.s32 %v1891, %v1893
    %v1895 = vrot.slane %v1881, %v1894
    %v1896 = vcombine.low %v1863, %v1879
    %v1897 = vcombine.high %v1863, %v1879
    %v1899 = vunpack.c.l.s4 1934713408
    %v1900 = vunpack.c.0.s8 %v1899
    %v1901 = vlaneseq
    %v1902 = vshrl.u32 %v1901, 7
    %v1903 = vsub.s32 %v1900, %v1902
    %v1904 = vrot.slane %v1896, %v1903
    %v1906 = vunpack.c.l.s4 1934713408
    %v1907 = vunpack.c.0.s8 %v1906
    %v1908 = vlaneseq
    %v1909 = vshrl.u32 %v1908, 7
    %v1910 = vsub.s32 %v1907, %v1909
    %v1911 = vrot.slane %v1897, %v1910
    %v1912 = vcombine.high %v1888, 0.0
    %v1913 = vcombine.high %v1895, 0.0
    %v1914 = vcombine.high %v1904, 0.0
    %v1915 = vcombine.high %v1911, 0.0
    %v1916 = vcombine.low %v1844, %v1846
    %v1917 = vcombine.high %v1844, %v1846
    %v1919 = vunpack.c.l.s4 1983009808
    %v1920 = vunpack.c.0.s8 %v1919
    %v1921 = vlaneseq
    %v1922 = vshrl.u32 %v1921, 7
    %v1923 = vsub.s32 %v1920, %v1922
    %v1924 = vrot.slane %v1916, %v1923
    %v1926 = vunpack.c.l.s4 1983009808
    %v1927 = vunpack.c.0.s8 %v1926
    %v1928 = vlaneseq
    %v1929 = vshrl.u32 %v1928, 7
    %v1930 = vsub.s32 %v1927, %v1929
    %v1931 = vrot.slane %v1917, %v1930
    %v1932 = vcombine.low %v1845, %v1847
    %v1933 = vcombine.high %v1845, %v1847
    %v1935 = vunpack.c.l.s4 1983009808
    %v1936 = vunpack.c.0.s8 %v1935
    %v1937 = vlaneseq
    %v1938 = vshrl.u32 %v1937, 7
    %v1939 = vsub.s32 %v1936, %v1938
    %v1940 = vrot.slane %v1932, %v1939
    %v1942 = vunpack.c.l.s4 1983009808
    %v1943 = vunpack.c.0.s8 %v1942
    %v1944 = vlaneseq
    %v1945 = vshrl.u32 %v1944, 7
    %v1946 = vsub.s32 %v1943, %v1945
    %v1947 = vrot.slane %v1933, %v1946
    %v1948 = vcombine.low %v1924, %v1940
    %v1949 = vcombine.high %v1924, %v1940
    %v1951 = vunpack.c.l.s4 1934713408
    %v1952 = vunpack.c.0.s8 %v1951
    %v1953 = vlaneseq
    %v1954 = vshrl.u32 %v1953, 7
    %v1955 = vsub.s32 %v1952, %v1954
    %v1956 = vrot.slane %v1948, %v1955
    %v1958 = vunpack.c.l.s4 1934713408
    %v1959 = vunpack.c.0.s8 %v1958
    %v1960 = vlaneseq
    %v1961 = vshrl.u32 %v1960, 7
    %v1962 = vsub.s32 %v1959, %v1961
    %v1963 = vrot.slane %v1949, %v1962
    %v1964 = vcombine.low %v1931, %v1947
    %v1965 = vcombine.high %v1931, %v1947
    %v1967 = vunpack.c.l.s4 1934713408
    %v1968 = vunpack.c.0.s8 %v1967
    %v1969 = vlaneseq
    %v1970 = vshrl.u32 %v1969, 7
    %v1971 = vsub.s32 %v1968, %v1970
    %v1972 = vrot.slane %v1964, %v1971
    %v1974 = vunpack.c.l.s4 1934713408
    %v1975 = vunpack.c.0.s8 %v1974
    %v1976 = vlaneseq
    %v1977 = vshrl.u32 %v1976, 7
    %v1978 = vsub.s32 %v1975, %v1977
    %v1979 = vrot.slane %v1965, %v1978
    %v1980 = vcombine.high %v1956, 0.0
    %v1981 = vcombine.high %v1963, 0.0
    %v1982 = vcombine.high %v1972, 0.0
    %v1983 = vcombine.high %v1979, 0.0
    %v1984 = vcombine.low %v1888, %v1895
    %v1986 = vunpack.c.l.s4 1983009808
    %v1987 = vunpack.c.0.s8 %v1986
    %v1988 = vlaneseq
    %v1989 = vshrl.u32 %v1988, 7
    %v1990 = vsub.s32 %v1987, %v1989
    %v1991 = vrot.slane %v1984, %v1990
    %v1992 = vcombine.low %v1912, %v1913
    %v1994 = vunpack.c.l.s4 1983009808
    %v1995 = vunpack.c.0.s8 %v1994
    %v1996 = vlaneseq
    %v1997 = vshrl.u32 %v1996, 7
    %v1998 = vsub.s32 %v1995, %v1997
    %v1999 = vrot.slane %v1992, %v1998
    %v2000 = vcombine.low %v1904, %v1911
    %v2002 = vunpack.c.l.s4 1983009808
    %v2003 = vunpack.c.0.s8 %v2002
    %v2004 = vlaneseq
    %v2005 = vshrl.u32 %v2004, 7
    %v2006 = vsub.s32 %v2003, %v2005
    %v2007 = vrot.slane %v2000, %v2006
    %v2008 = vcombine.low %v1914, %v1915
    %v2010 = vunpack.c.l.s4 1983009808
    %v2011 = vunpack.c.0.s8 %v2010
    %v2012 = vlaneseq
    %v2013 = vshrl.u32 %v2012, 7
    %v2014 = vsub.s32 %v2011, %v2013
    %v2015 = vrot.slane %v2008, %v2014
    %v2016 = vcombine.low %v1991, %v1999
    %v2017 = vcombine.high %v1991, %v1999
    %v2019 = vunpack.c.l.s4 1934713408
    %v2020 = vunpack.c.0.s8 %v2019
    %v2021 = vlaneseq
    %v2022 = vshrl.u32 %v2021, 7
    %v2023 = vsub.s32 %v2020, %v2022
    %v2024 = vrot.slane %v2016, %v2023
    %v2026 = vunpack.c.l.s4 1934713408
    %v2027 = vunpack.c.0.s8 %v2026
    %v2028 = vlaneseq
    %v2029 = vshrl.u32 %v2028, 7
    %v2030 = vsub.s32 %v2027, %v2029
    %v2031 = vrot.slane %v2017, %v2030
    %v2032 = vcombine.low %v2007, %v2015
    %v2033 = vcombine.high %v2007, %v2015
    %v2035 = vunpack.c.l.s4 1934713408
    %v2036 = vunpack.c.0.s8 %v2035
    %v2037 = vlaneseq
    %v2038 = vshrl.u32 %v2037, 7
    %v2039 = vsub.s32 %v2036, %v2038
    %v2040 = vrot.slane %v2032, %v2039
    %v2042 = vunpack.c.l.s4 1934713408
    %v2043 = vunpack.c.0.s8 %v2042
    %v2044 = vlaneseq
    %v2045 = vshrl.u32 %v2044, 7
    %v2046 = vsub.s32 %v2043, %v2045
    %v2047 = vrot.slane %v2033, %v2046
    %v2048 = vcombine.low %v2024, %v2040
    %v2049 = vcombine.high %v2024, %v2040
    %v2050 = vcombine.low %v2031, %v2047
    %v2051 = vcombine.high %v2031, %v2047
    %v2052 = vcombine.low %v1956, %v1963
    %v2054 = vunpack.c.l.s4 1983009808
    %v2055 = vunpack.c.0.s8 %v2054
    %v2056 = vlaneseq
    %v2057 = vshrl.u32 %v2056, 7
    %v2058 = vsub.s32 %v2055, %v2057
    %v2059 = vrot.slane %v2052, %v2058
    %v2060 = vcombine.low %v1980, %v1981
    %v2062 = vunpack.c.l.s4 1983009808
    %v2063 = vunpack.c.0.s8 %v2062
    %v2064 = vlaneseq
    %v2065 = vshrl.u32 %v2064, 7
    %v2066 = vsub.s32 %v2063, %v2065
    %v2067 = vrot.slane %v2060, %v2066
    %v2068 = vcombine.low %v1972, %v1979
    %v2070 = vunpack.c.l.s4 1983009808
    %v2071 = vunpack.c.0.s8 %v2070
    %v2072 = vlaneseq
    %v2073 = vshrl.u32 %v2072, 7
    %v2074 = vsub.s32 %v2071, %v2073
    %v2075 = vrot.slane %v2068, %v2074
    %v2076 = vcombine.low %v1982, %v1983
    %v2078 = vunpack.c.l.s4 1983009808
    %v2079 = vunpack.c.0.s8 %v2078
    %v2080 = vlaneseq
    %v2081 = vshrl.u32 %v2080, 7
    %v2082 = vsub.s32 %v2079, %v2081
    %v2083 = vrot.slane %v2076, %v2082
    %v2084 = vcombine.low %v2059, %v2067
    %v2085 = vcombine.high %v2059, %v2067
    %v2087 = vunpack.c.l.s4 1934713408
    %v2088 = vunpack.c.0.s8 %v2087
    %v2089 = vlaneseq
    %v2090 = vshrl.u32 %v2089, 7
    %v2091 = vsub.s32 %v2088, %v2090
    %v2092 = vrot.slane %v2084, %v2091
    %v2094 = vunpack.c.l.s4 1934713408
    %v2095 = vunpack.c.0.s8 %v2094
    %v2096 = vlaneseq
    %v2097 = vshrl.u32 %v2096, 7
    %v2098 = vsub.s32 %v2095, %v2097
    %v2099 = vrot.slane %v2085, %v2098
    %v2100 = vcombine.low %v2075, %v2083
    %v2101 = vcombine.high %v2075, %v2083
    %v2103 = vunpack.c.l.s4 1934713408
    %v2104 = vunpack.c.0.s8 %v2103
    %v2105 = vlaneseq
    %v2106 = vshrl.u32 %v2105, 7
    %v2107 = vsub.s32 %v2104, %v2106
    %v2108 = vrot.slane %v2100, %v2107
    %v2110 = vunpack.c.l.s4 1934713408
    %v2111 = vunpack.c.0.s8 %v2110
    %v2112 = vlaneseq
    %v2113 = vshrl.u32 %v2112, 7
    %v2114 = vsub.s32 %v2111, %v2113
    %v2115 = vrot.slane %v2101, %v2114
    %v2116 = vcombine.low %v2092, %v2108
    %v2117 = vcombine.high %v2092, %v2108
    %v2118 = vcombine.low %v2099, %v2115
    %v2119 = vcombine.high %v2099, %v2115
    %2122 = vrot.lane.b32.xlu0 %v2049, 16
    %v2123 = vpop.permute.xlu0 %2122
    %2124 = vrot.lane.b32.xlu0 %v2117, 16
    %v2125 = vpop.permute.xlu0 %2124
    %2130 = vrot.lane.b32.xlu0 %v2050, 32
    %v2131 = vpop.permute.xlu0 %2130
    %2132 = vrot.lane.b32.xlu0 %v2118, 32
    %v2133 = vpop.permute.xlu0 %2132
    %2138 = vrot.lane.b32.xlu0 %v2051, 48
    %v2139 = vpop.permute.xlu0 %2138
    %2140 = vrot.lane.b32.xlu0 %v2119, 48
    %v2141 = vpop.permute.xlu0 %2140
    %v2144 = vsel %vm1013, %v2048, %v2123
    %v2145 = vsel %vm1013, %v2116, %v2125
    %v2146 = vsel %vm46, %v2144, %v2131
    %v2147 = vsel %vm46, %v2145, %v2133
    %vm2148 = vcmask 392192
    %v2149 = vsel %vm2148, %v2146, %v2139
    %v2150 = vsel %vm2148, %v2147, %v2141
    %v2151 = vpack.c.bf16 %v2150, %v2149
    %v2152 = vld [vmem:[%s2] sm:$0xf]
    %v2153 = vld [vmem:[%s2 + $0x4] sm:$0xf]
    %v2154 = vld [vmem:[%s2 + $0x8] sm:$0xf]
    %v2155 = vld [vmem:[%s2 + $0xc] sm:$0xf]
    %v2156 = vld [vmem:[%s2 + $0x10] sm:$0xf]
    %v2157 = vld [vmem:[%s2 + $0x14] sm:$0xf]
    %v2158 = vld [vmem:[%s2 + $0x18] sm:$0xf]
    %v2159 = vld [vmem:[%s2 + $0x1c] sm:$0xf]
    %v2160 = vld [vmem:[%s3] sm:$0x1]
    %v2162 = vlaneseq
    %v2163 = vshrl.u32 %v2162, 7
    %v2164 = vsub.s32 0, %v2163
    %v2165 = vrot.slane %v2160, %v2164
    %v2175 = vunpack.c.l.b16 %v2152
    %v2176 = vunpack.c.l.b16 %v2153
    %v2177 = vunpack.c.l.b16 %v2154
    %v2178 = vunpack.c.l.b16 %v2155
    %v2179 = vunpack.c.l.b16 %v2156
    %v2180 = vunpack.c.l.b16 %v2157
    %v2181 = vunpack.c.l.b16 %v2158
    %v2182 = vunpack.c.l.b16 %v2159
    %v2183 = vpack.c.b16 %v2176, %v2175
    %v2184 = vpack.c.b16 %v2178, %v2177
    %v2185 = vpack.c.b16 %v2180, %v2179
    %v2186 = vpack.c.b16 %v2182, %v2181
    %vm2191 = vcmask 523264
    %v2193 = vsel %vm2191, %v2151, 0
    %2195 = vmatprep.subr.bf16.mxu0 0
    %2196 = vmatpush1.bf16.msra.mxu0 %v2183
    %2197 = vmatprep.subr.bf16.mxu0 0
    %2198 = vmatpush1.bf16.msra.mxu0 %v2184
    %2199 = vmatprep.subr.bf16.mxu0 0
    %2200 = vmatpush1.bf16.msra.mxu0 %v2185
    %2201 = vmatprep.subr.bf16.mxu0 0
    %2202 = vmatpush1.bf16.msra.mxu0 %v2186
    %2203 = vmatprep.subr.bf16.mxu0 0
    %2204 = vmatpush1.bf16.msra.mxu0 0
    %2205 = vmatprep.subr.bf16.mxu0 0
    %2206 = vmatpush1.bf16.msra.mxu0 0
    %2207 = vmatprep.subr.bf16.mxu0 0
    %2208 = vmatpush1.bf16.msra.mxu0 0
    %2209 = vmatprep.subr.bf16.mxu0 0
    %2210 = vmatpush1.bf16.msra.mxu0 0
    %2211 = vmatprep.subr.bf16.mxu0 0
    %2212 = vmatpush1.bf16.msra.mxu0 0
    %2213 = vmatprep.subr.bf16.mxu0 0
    %2214 = vmatpush1.bf16.msra.mxu0 0
    %2215 = vmatprep.subr.bf16.mxu0 0
    %2216 = vmatpush1.bf16.msra.mxu0 0
    %2217 = vmatprep.subr.bf16.mxu0 0
    %2218 = vmatpush1.bf16.msra.mxu0 0
    %2219 = vmatprep.subr.bf16.mxu0 0
    %2220 = vmatpush1.bf16.msra.mxu0 0
    %2221 = vmatprep.subr.bf16.mxu0 0
    %2222 = vmatpush1.bf16.msra.mxu0 0
    %2223 = vmatprep.subr.bf16.mxu0 0
    %2224 = vmatpush1.bf16.msra.mxu0 0
    %2225 = vmatprep.subr.bf16.mxu0 0
    %2226 = vmatpush1.bf16.msra.mxu0 0
    %2227 = vmatprep.mubr.bf16.mxu0 0
    %2228 = vmatmul.mubr.bf16.gmra.mrb[0].mxu0 %v2193
    %v2229 = vpop.f32.mrb[0].mxu0
    %v2230 = vadd.f32 %v2165, %v2229
    %v2231 = vpop.f32.mrb[0].mxu0
    %v2232 = vpop.f32.mrb[0].mxu0
    %v2233 = vadd.f32 %v2165, %v2232
    %v2234 = vpop.f32.mrb[0].mxu0
    %2235 = vdwg.mxu0
    %2236 = vst.msk [vmem:[#allocation2] sm:$0xff] %vm46, %v2230
    %2237 = vst.msk [vmem:[#allocation2 + $0x8] sm:$0xff] %vm46, %v2233
    // Predicated region
    $region18: #{tpu_custom_call.1} parent=1 // pred_check
      _
    $region19: #{tpu_custom_call.1} parent=1 // pred_check_branch
      %2239 = sbr.rel (0) target = $region21
    $region20: #{tpu_custom_call.1} parent=1 // pred_region
      %s2241 = ssub.s32 256, 256
      %2242 = vsyncadd [#allocation3], %s2241
      %s2243 = sshll.u32 [#allocation2], 4
      %s2244 = int_to_ptr.vmem [resolvable:$true] %s2243
      %2249 = dma.vmem_to_hbm [thread:$0]  %s2244, 256, %s4, [#allocation3], 128, 128, 8
    $region21: #{tpu_custom_call.1} parent=1 // pred_fallthru
      _
    // Predicated region
    $region22: #{tpu_custom_call.1} parent=1 // pred_check
      _
    $region23: #{tpu_custom_call.1} parent=1 // pred_check_branch
      %2251 = sbr.rel (0) target = $region25
    $region24: #{tpu_custom_call.1} parent=1 // pred_region
      %2252 = dma.done [#allocation3], 256
    $region25: #{tpu_custom_call.1} parent=1 // pred_fallthru
      _
    %2253 = vsyncpa [#allocation3], 1

</llo_original>
